<compile_context>
chip_gen: v7x
topology: tpu7x:2x2x1
jax: 0.10.0
libtpu: 0.0.40
codegen_flags: <defaults>
</compile_context>

<pallas_src>
import functools

import jax
import jax.numpy as jnp
from jax.experimental import pallas as pl
from jax.experimental.pallas import tpu as pltpu


def _round_up(x, m):
    return ((x + m - 1) // m) * m


def _gcn_layer_kernel(adj_ref, dsrc_ref, x_ref, ddst_ref, w_ref, b_ref,
                      out_ref, acc_ref, *, apply_relu):
    """One GraphConv layer (norm='both'), tiled over (dst rows, src/K)."""
    k = pl.program_id(1)

    @pl.when(k == 0)
    def _():
        acc_ref[...] = jnp.zeros_like(acc_ref)

    # Fold D_src^{-1/2} into the feature tile (cheap VPU work under the MXU).
    xs = (x_ref[...].astype(jnp.float32) * dsrc_ref[...]).astype(jnp.bfloat16)
    acc_ref[...] += jnp.dot(adj_ref[...], xs, preferred_element_type=jnp.float32)

    @pl.when(k == pl.num_programs(1) - 1)
    def _():
        agg = acc_ref[...] * ddst_ref[...]              # D_dst^{-1/2} scaling
        h = jnp.dot(agg.astype(jnp.bfloat16), w_ref[...],
                    preferred_element_type=jnp.float32) + b_ref[...]
        if apply_relu:
            h = jnp.maximum(h, 0.0)
        out_ref[...] = h.astype(out_ref.dtype)


def _gcn_layer(adj, x, w, b, *, apply_relu, out_dtype,
               block_m=256, block_k=512):
    """y = D_dst^-1/2 A D_src^-1/2 x @ W + b  (optionally ReLU), padded output."""
    D, S = adj.shape
    assert x.shape[0] == S and w.shape[0] == x.shape[1]
    F = x.shape[1]
    C = w.shape[1]

    Fp = _round_up(F, 128)
    Cp = _round_up(C, 128)
    bm = min(block_m, _round_up(D, 128))        # multiples of 128 by construction
    bk = min(block_k, _round_up(S, 128))
    Dp = _round_up(D, bm)
    Sp = _round_up(S, bk)

    # DGL norm='both': out-degree of src (col sum), in-degree of dst (row sum),
    # both clamped to >= 1, then ^-0.5. Tiny vectors -> computed once in f32.
    adj_f32 = adj.astype(jnp.float32)
    dsrc = jnp.maximum(jnp.sum(adj_f32, axis=0), 1.0) ** -0.5      # (S,)
    ddst = jnp.maximum(jnp.sum(adj_f32, axis=1), 1.0) ** -0.5      # (D,)

    adj_p = jnp.pad(adj.astype(jnp.bfloat16), ((0, Dp - D), (0, Sp - S)))
    x_p = jnp.pad(x.astype(jnp.bfloat16), ((0, Sp - S), (0, Fp - F)))
    w_p = jnp.pad(w.astype(jnp.bfloat16), ((0, Fp - F), (0, Cp - C)))
    b_p = jnp.pad(b.astype(jnp.float32).reshape(1, -1), ((0, 0), (0, Cp - C)))
    dsrc_p = jnp.pad(dsrc, (0, Sp - S)).reshape(Sp, 1)
    ddst_p = jnp.pad(ddst, (0, Dp - D)).reshape(Dp, 1)

    grid = (Dp // bm, Sp // bk)

    flops = 2 * Dp * Sp * Fp + 2 * Dp * Fp * Cp
    bytes_accessed = (adj_p.size * 2 + x_p.size * 2 + w_p.size * 2
                      + b_p.size * 4 + dsrc_p.size * 4 + ddst_p.size * 4
                      + Dp * Cp * jnp.dtype(out_dtype).itemsize)

    kernel = functools.partial(_gcn_layer_kernel, apply_relu=apply_relu)
    return pl.pallas_call(
        kernel,
        out_shape=jax.ShapeDtypeStruct((Dp, Cp), out_dtype),
        grid_spec=pltpu.PrefetchScalarGridSpec(
            num_scalar_prefetch=0,
            grid=grid,
            in_specs=[
                pl.BlockSpec((bm, bk), lambda i, k: (i, k)),    # adjacency tile
                pl.BlockSpec((bk, 1), lambda i, k: (k, 0)),     # D_src^-1/2
                pl.BlockSpec((bk, Fp), lambda i, k: (k, 0)),    # src features
                pl.BlockSpec((bm, 1), lambda i, k: (i, 0)),     # D_dst^-1/2
                pl.BlockSpec((Fp, Cp), lambda i, k: (0, 0)),    # weight (resident)
                pl.BlockSpec((1, Cp), lambda i, k: (0, 0)),     # bias (resident)
            ],
            out_specs=pl.BlockSpec((bm, Cp), lambda i, k: (i, 0)),
            scratch_shapes=[pltpu.VMEM((bm, Fp), jnp.float32)],
        ),
        compiler_params=pltpu.CompilerParams(
            dimension_semantics=("parallel", "arbitrary"),
            vmem_limit_bytes=48 * 1024 * 1024,     # stay under v7x's 64 MiB VMEM
        ),
        cost_estimate=pl.CostEstimate(flops=flops, transcendentals=0,
                                      bytes_accessed=bytes_accessed),
    )(adj_p, dsrc_p, x_p, ddst_p, w_p, b_p)


def gcn_forward(adj1, adj2, x, w1, b1, w2, b2):
    """adj1: (D1, S1), adj2: (D2, D1), x: (S1, F) -> out: (D2, num_classes)."""
    D1 = adj1.shape[0]
    D2 = adj2.shape[0]
    # Layer 1: keep hidden activations in bf16 (halves HBM traffic into layer 2).
    h1 = _gcn_layer(adj1, x, w1, b1, apply_relu=True, out_dtype=jnp.bfloat16)
    h1 = h1[:D1, :w1.shape[1]]                 # drop row / lane padding
    # Layer 2: final logits in f32.
    out = _gcn_layer(adj2, h1, w2, b2, apply_relu=False, out_dtype=jnp.float32)
    return out[:D2, :w2.shape[1]]


if __name__ == "__main__":
    # MFG-consistent shapes (mfg0: S1 src -> D1 dst; mfg1: D1 src -> D2 dst),
    # sized so both layers exercise multi-tile grids (2x2 and 1x1).
    S1, D1, D2 = 600, 300, 120
    IN_FEATS, H_FEATS, NUM_CLASSES = 48, 64, 10

    key = jax.random.PRNGKey(0)
    k_x, k_a1, k_a2, k_w1, k_b1, k_w2, k_b2 = jax.random.split(key, 7)

    # Input node features for mfg0's src nodes.
    x = jax.random.normal(k_x, (S1, IN_FEATS), dtype=jnp.float32)

    # Random bipartite MFG adjacencies (dense 0/1, dst x src).
    adj1 = (jax.random.uniform(k_a1, (D1, S1)) < 0.05).astype(jnp.float32)
    adj2 = (jax.random.uniform(k_a2, (D2, D1)) < 0.05).astype(jnp.float32)

    # GraphConv parameters: weight (in, out), bias (out,).
    w1 = jax.random.normal(k_w1, (IN_FEATS, H_FEATS), dtype=jnp.float32) * (IN_FEATS ** -0.5)
    b1 = jax.random.normal(k_b1, (H_FEATS,), dtype=jnp.float32) * 0.01
    w2 = jax.random.normal(k_w2, (H_FEATS, NUM_CLASSES), dtype=jnp.float32) * (H_FEATS ** -0.5)
    b2 = jax.random.normal(k_b2, (NUM_CLASSES,), dtype=jnp.float32) * 0.01

    out = jax.jit(gcn_forward)(adj1, adj2, x, w1, b1, w2, b2)
    out = jax.block_until_ready(out)

    # Pure-JAX reference mirroring the kernel's bf16-operand / f32-accumulate precision.
    def ref_layer(adj, x_bf16, w, b, relu):
        adj_f = adj.astype(jnp.float32)
        dsrc = jnp.maximum(adj_f.sum(axis=0), 1.0) ** -0.5
        ddst = jnp.maximum(adj_f.sum(axis=1), 1.0) ** -0.5
        xs = (x_bf16.astype(jnp.float32) * dsrc[:, None]).astype(jnp.bfloat16)
        agg = jnp.dot(adj.astype(jnp.bfloat16), xs, preferred_element_type=jnp.float32)
        agg = agg * ddst[:, None]
        h = jnp.dot(agg.astype(jnp.bfloat16), w.astype(jnp.bfloat16),
                    preferred_element_type=jnp.float32) + b.astype(jnp.float32)
        return jnp.maximum(h, 0.0) if relu else h

    h1_ref = ref_layer(adj1, x.astype(jnp.bfloat16), w1, b1, True).astype(jnp.bfloat16)
    ref = ref_layer(adj2, h1_ref, w2, b2, False)

    assert out.shape == (D2, NUM_CLASSES)
    assert jnp.allclose(out, ref, atol=1e-2, rtol=1e-2), \
        float(jnp.max(jnp.abs(out - ref)))

    print("KERNEL_OK")
</pallas_src>

<mosaic_0001>
module attributes {stable_mosaic.version = 11 : i64} {
  func.func @_gcn_layer_kernel(%arg0: i32, %arg1: i32, %arg2: memref<256x512xbf16, #tpu.memory_space<vmem>>, %arg3: memref<512x1xf32, #tpu.memory_space<vmem>>, %arg4: memref<512x128xbf16, #tpu.memory_space<vmem>>, %arg5: memref<256x1xf32, #tpu.memory_space<vmem>>, %arg6: memref<128x128xbf16, #tpu.memory_space<vmem>>, %arg7: memref<1x128xf32, #tpu.memory_space<vmem>>, %arg8: memref<256x128xbf16, #tpu.memory_space<vmem>>, %arg9: memref<256x128xf32, #tpu.memory_space<vmem>>) attributes {dimension_semantics = [#tpu.dimension_semantics<parallel>, #tpu.dimension_semantics<arbitrary>], iteration_bounds = array<i64: 2, 2>, scalar_prefetch = 0 : i64, scratch_operands = 1 : i64, tpu.core_type = #tpu.core_type<tc>, window_params = [{transform_indices = @transform_0, window_bounds = array<i64: 256, 512>}, {transform_indices = @transform_1, window_bounds = array<i64: 512, 1>}, {transform_indices = @transform_2, window_bounds = array<i64: 512, 128>}, {transform_indices = @transform_3, window_bounds = array<i64: 256, 1>}, {pipeline_mode = #tpu.pipeline_mode<synchronous>, transform_indices = @transform_4, window_bounds = array<i64: 128, 128>}, {pipeline_mode = #tpu.pipeline_mode<synchronous>, transform_indices = @transform_5, window_bounds = array<i64: 1, 128>}, {transform_indices = @transform_6, window_bounds = array<i64: 256, 128>}]} {
    %c0_i32 = arith.constant 0 : i32
    %0 = arith.cmpi eq, %arg1, %c0_i32 : i32
    %1 = arith.extui %0 : i1 to i32
    %c0_i32_0 = arith.constant 0 : i32
    %2 = arith.cmpi ne, %1, %c0_i32_0 : i32
    scf.if %2 {
      %cst_11 = arith.constant 0.000000e+00 : f32
      %17 = vector.broadcast %cst_11 : f32 to vector<256x128xf32>
      %c0_12 = arith.constant 0 : index
      %c0_13 = arith.constant 0 : index
      %18 = vector.load %arg9[%c0_12, %c0_13] : memref<256x128xf32, #tpu.memory_space<vmem>>, vector<256x128xf32>
      tpu.vector_store %arg9[%c0_12, %c0_13], %17 {strides = array<i32>} : memref<256x128xf32, #tpu.memory_space<vmem>>, vector<256x128xf32>,
    } else {
    }
    %c0 = arith.constant 0 : index
    %c0_1 = arith.constant 0 : index
    %3 = vector.load %arg4[%c0, %c0_1] : memref<512x128xbf16, #tpu.memory_space<vmem>>, vector<512x128xbf16>
    %4 = arith.extf %3 : vector<512x128xbf16> to vector<512x128xf32>
    %c0_2 = arith.constant 0 : index
    %c0_3 = arith.constant 0 : index
    %5 = vector.load %arg3[%c0_2, %c0_3] : memref<512x1xf32, #tpu.memory_space<vmem>>, vector<512x1xf32>
    %6 = vector.broadcast %5 : vector<512x1xf32> to vector<512x128xf32>
    %7 = arith.mulf %4, %6 : vector<512x128xf32>
    %8 = arith.truncf %7 : vector<512x128xf32> to vector<512x128xbf16>
    %c0_4 = arith.constant 0 : index
    %c0_5 = arith.constant 0 : index
    %9 = vector.load %arg9[%c0_4, %c0_5] : memref<256x128xf32, #tpu.memory_space<vmem>>, vector<256x128xf32>
    %c0_6 = arith.constant 0 : index
    %c0_7 = arith.constant 0 : index
    %10 = vector.load %arg2[%c0_6, %c0_7] : memref<256x512xbf16, #tpu.memory_space<vmem>>, vector<256x512xbf16>
    %cst = arith.constant dense<0.000000e+00> : vector<256x128xf32>
    %11 = tpu.matmul %10, %8, %cst {dimension_numbers = #tpu.dot_dimension_numbers<[1], [0], [0], [1], [0, 0, 1, 1], [], []>} : vector<256x512xbf16>, vector<512x128xbf16>, vector<256x128xf32> -> vector<256x128xf32>
    %12 = arith.addf %9, %11 : vector<256x128xf32>
    %c0_8 = arith.constant 0 : index
    %c0_9 = arith.constant 0 : index
    %13 = vector.load %arg9[%c0_8, %c0_9] : memref<256x128xf32, #tpu.memory_space<vmem>>, vector<256x128xf32>
    tpu.vector_store %arg9[%c0_8, %c0_9], %12 {strides = array<i32>} : memref<256x128xf32, #tpu.memory_space<vmem>>, vector<256x128xf32>,
    %c1_i32 = arith.constant 1 : i32
    %14 = arith.cmpi eq, %arg1, %c1_i32 : i32
    %15 = arith.extui %14 : i1 to i32
    %c0_i32_10 = arith.constant 0 : i32
    %16 = arith.cmpi ne, %15, %c0_i32_10 : i32
    scf.if %16 {
      %c0_11 = arith.constant 0 : index
      %c0_12 = arith.constant 0 : index
      %17 = vector.load %arg9[%c0_11, %c0_12] : memref<256x128xf32, #tpu.memory_space<vmem>>, vector<256x128xf32>
      %c0_13 = arith.constant 0 : index
      %c0_14 = arith.constant 0 : index
      %18 = vector.load %arg5[%c0_13, %c0_14] : memref<256x1xf32, #tpu.memory_space<vmem>>, vector<256x1xf32>
      %19 = vector.broadcast %18 : vector<256x1xf32> to vector<256x128xf32>
      %20 = arith.mulf %17, %19 : vector<256x128xf32>
      %21 = arith.truncf %20 : vector<256x128xf32> to vector<256x128xbf16>
      %c0_15 = arith.constant 0 : index
      %c0_16 = arith.constant 0 : index
      %22 = vector.load %arg6[%c0_15, %c0_16] : memref<128x128xbf16, #tpu.memory_space<vmem>>, vector<128x128xbf16>
      %cst_17 = arith.constant dense<0.000000e+00> : vector<256x128xf32>
      %23 = tpu.matmul %21, %22, %cst_17 {dimension_numbers = #tpu.dot_dimension_numbers<[1], [0], [0], [1], [0, 0, 1, 1], [], []>} : vector<256x128xbf16>, vector<128x128xbf16>, vector<256x128xf32> -> vector<256x128xf32>
      %c0_18 = arith.constant 0 : index
      %c0_19 = arith.constant 0 : index
      %24 = vector.load %arg7[%c0_18, %c0_19] : memref<1x128xf32, #tpu.memory_space<vmem>>, vector<1x128xf32>
      %25 = vector.broadcast %24 : vector<1x128xf32> to vector<256x128xf32>
      %26 = arith.addf %23, %25 : vector<256x128xf32>
      %cst_20 = arith.constant 0.000000e+00 : f32
      %27 = vector.broadcast %cst_20 : f32 to vector<256x128xf32>
      %28 = arith.maximumf %26, %27 : vector<256x128xf32>
      %29 = arith.truncf %28 : vector<256x128xf32> to vector<256x128xbf16>
      %c0_21 = arith.constant 0 : index
      %c0_22 = arith.constant 0 : index
      %30 = vector.load %arg8[%c0_21, %c0_22] : memref<256x128xbf16, #tpu.memory_space<vmem>>, vector<256x128xbf16>
      tpu.vector_store %arg8[%c0_21, %c0_22], %29 {strides = array<i32>} : memref<256x128xbf16, #tpu.memory_space<vmem>>, vector<256x128xbf16>,
    } else {
    }
    return
  }
  func.func @transform_0(%arg0: i32, %arg1: i32) -> (i32, i32) {
    %c0_i32 = arith.constant 0 : i32
    return %arg0, %arg1 : i32, i32
  }
  func.func @transform_1(%arg0: i32, %arg1: i32) -> (i32, i32) {
    %c0_i32 = arith.constant 0 : i32
    %c0_i32_0 = arith.constant 0 : i32
    return %arg1, %c0_i32 : i32, i32
  }
  func.func @transform_2(%arg0: i32, %arg1: i32) -> (i32, i32) {
    %c0_i32 = arith.constant 0 : i32
    %c0_i32_0 = arith.constant 0 : i32
    return %arg1, %c0_i32 : i32, i32
  }
  func.func @transform_3(%arg0: i32, %arg1: i32) -> (i32, i32) {
    %c0_i32 = arith.constant 0 : i32
    %c0_i32_0 = arith.constant 0 : i32
    return %arg0, %c0_i32 : i32, i32
  }
  func.func @transform_4(%arg0: i32, %arg1: i32) -> (i32, i32) {
    %c0_i32 = arith.constant 0 : i32
    %c0_i32_0 = arith.constant 0 : i32
    %c0_i32_1 = arith.constant 0 : i32
    return %c0_i32, %c0_i32_0 : i32, i32
  }
  func.func @transform_5(%arg0: i32, %arg1: i32) -> (i32, i32) {
    %c0_i32 = arith.constant 0 : i32
    %c0_i32_0 = arith.constant 0 : i32
    %c0_i32_1 = arith.constant 0 : i32
    return %c0_i32, %c0_i32_0 : i32, i32
  }
  func.func @transform_6(%arg0: i32, %arg1: i32) -> (i32, i32) {
    %c0_i32 = arith.constant 0 : i32
    %c0_i32_0 = arith.constant 0 : i32
    return %arg0, %c0_i32 : i32, i32
  }
}

module attributes {stable_mosaic.version = 11 : i64} {
  func.func @_gcn_layer_kernel(%arg0: i32, %arg1: i32, %arg2: memref<128x384xbf16, #tpu.memory_space<vmem>>, %arg3: memref<384x1xf32, #tpu.memory_space<vmem>>, %arg4: memref<384x128xbf16, #tpu.memory_space<vmem>>, %arg5: memref<128x1xf32, #tpu.memory_space<vmem>>, %arg6: memref<128x128xbf16, #tpu.memory_space<vmem>>, %arg7: memref<1x128xf32, #tpu.memory_space<vmem>>, %arg8: memref<128x128xf32, #tpu.memory_space<vmem>>, %arg9: memref<128x128xf32, #tpu.memory_space<vmem>>) attributes {dimension_semantics = [#tpu.dimension_semantics<parallel>, #tpu.dimension_semantics<arbitrary>], iteration_bounds = array<i64: 1, 1>, scalar_prefetch = 0 : i64, scratch_operands = 1 : i64, tpu.core_type = #tpu.core_type<tc>, window_params = [{transform_indices = @transform_0, window_bounds = array<i64: 128, 384>}, {transform_indices = @transform_1, window_bounds = array<i64: 384, 1>}, {transform_indices = @transform_2, window_bounds = array<i64: 384, 128>}, {transform_indices = @transform_3, window_bounds = array<i64: 128, 1>}, {pipeline_mode = #tpu.pipeline_mode<synchronous>, transform_indices = @transform_4, window_bounds = array<i64: 128, 128>}, {pipeline_mode = #tpu.pipeline_mode<synchronous>, transform_indices = @transform_5, window_bounds = array<i64: 1, 128>}, {transform_indices = @transform_6, window_bounds = array<i64: 128, 128>}]} {
    %c0_i32 = arith.constant 0 : i32
    %0 = arith.cmpi eq, %arg1, %c0_i32 : i32
    %1 = arith.extui %0 : i1 to i32
    %c0_i32_0 = arith.constant 0 : i32
    %2 = arith.cmpi ne, %1, %c0_i32_0 : i32
    scf.if %2 {
      %cst_12 = arith.constant 0.000000e+00 : f32
      %17 = vector.broadcast %cst_12 : f32 to vector<128x128xf32>
      %c0_13 = arith.constant 0 : index
      %c0_14 = arith.constant 0 : index
      %18 = vector.load %arg9[%c0_13, %c0_14] : memref<128x128xf32, #tpu.memory_space<vmem>>, vector<128x128xf32>
      tpu.vector_store %arg9[%c0_13, %c0_14], %17 {strides = array<i32>} : memref<128x128xf32, #tpu.memory_space<vmem>>, vector<128x128xf32>,
    } else {
    }
    %c0 = arith.constant 0 : index
    %c0_1 = arith.constant 0 : index
    %3 = vector.load %arg4[%c0, %c0_1] : memref<384x128xbf16, #tpu.memory_space<vmem>>, vector<384x128xbf16>
    %4 = arith.extf %3 : vector<384x128xbf16> to vector<384x128xf32>
    %c0_2 = arith.constant 0 : index
    %c0_3 = arith.constant 0 : index
    %5 = vector.load %arg3[%c0_2, %c0_3] : memref<384x1xf32, #tpu.memory_space<vmem>>, vector<384x1xf32>
    %6 = vector.broadcast %5 : vector<384x1xf32> to vector<384x128xf32>
    %7 = arith.mulf %4, %6 : vector<384x128xf32>
    %8 = arith.truncf %7 : vector<384x128xf32> to vector<384x128xbf16>
    %c0_4 = arith.constant 0 : index
    %c0_5 = arith.constant 0 : index
    %9 = vector.load %arg9[%c0_4, %c0_5] : memref<128x128xf32, #tpu.memory_space<vmem>>, vector<128x128xf32>
    %c0_6 = arith.constant 0 : index
    %c0_7 = arith.constant 0 : index
    %10 = vector.load %arg2[%c0_6, %c0_7] : memref<128x384xbf16, #tpu.memory_space<vmem>>, vector<128x384xbf16>
    %cst = arith.constant dense<0.000000e+00> : vector<128x128xf32>
    %11 = tpu.matmul %10, %8, %cst {dimension_numbers = #tpu.dot_dimension_numbers<[1], [0], [0], [1], [0, 0, 1, 1], [], []>} : vector<128x384xbf16>, vector<384x128xbf16>, vector<128x128xf32> -> vector<128x128xf32>
    %12 = arith.addf %9, %11 : vector<128x128xf32>
    %c0_8 = arith.constant 0 : index
    %c0_9 = arith.constant 0 : index
    %13 = vector.load %arg9[%c0_8, %c0_9] : memref<128x128xf32, #tpu.memory_space<vmem>>, vector<128x128xf32>
    tpu.vector_store %arg9[%c0_8, %c0_9], %12 {strides = array<i32>} : memref<128x128xf32, #tpu.memory_space<vmem>>, vector<128x128xf32>,
    %c0_i32_10 = arith.constant 0 : i32
    %14 = arith.cmpi eq, %arg1, %c0_i32_10 : i32
    %15 = arith.extui %14 : i1 to i32
    %c0_i32_11 = arith.constant 0 : i32
    %16 = arith.cmpi ne, %15, %c0_i32_11 : i32
    scf.if %16 {
      %c0_12 = arith.constant 0 : index
      %c0_13 = arith.constant 0 : index
      %17 = vector.load %arg9[%c0_12, %c0_13] : memref<128x128xf32, #tpu.memory_space<vmem>>, vector<128x128xf32>
      %c0_14 = arith.constant 0 : index
      %c0_15 = arith.constant 0 : index
      %18 = vector.load %arg5[%c0_14, %c0_15] : memref<128x1xf32, #tpu.memory_space<vmem>>, vector<128x1xf32>
      %19 = vector.broadcast %18 : vector<128x1xf32> to vector<128x128xf32>
      %20 = arith.mulf %17, %19 : vector<128x128xf32>
      %21 = arith.truncf %20 : vector<128x128xf32> to vector<128x128xbf16>
      %c0_16 = arith.constant 0 : index
      %c0_17 = arith.constant 0 : index
      %22 = vector.load %arg6[%c0_16, %c0_17] : memref<128x128xbf16, #tpu.memory_space<vmem>>, vector<128x128xbf16>
      %cst_18 = arith.constant dense<0.000000e+00> : vector<128x128xf32>
      %23 = tpu.matmul %21, %22, %cst_18 {dimension_numbers = #tpu.dot_dimension_numbers<[1], [0], [0], [1], [0, 0, 1, 1], [], []>} : vector<128x128xbf16>, vector<128x128xbf16>, vector<128x128xf32> -> vector<128x128xf32>
      %c0_19 = arith.constant 0 : index
      %c0_20 = arith.constant 0 : index
      %24 = vector.load %arg7[%c0_19, %c0_20] : memref<1x128xf32, #tpu.memory_space<vmem>>, vector<1x128xf32>
      %25 = vector.broadcast %24 : vector<1x128xf32> to vector<128x128xf32>
      %26 = arith.addf %23, %25 : vector<128x128xf32>
      %c0_21 = arith.constant 0 : index
      %c0_22 = arith.constant 0 : index
      %27 = vector.load %arg8[%c0_21, %c0_22] : memref<128x128xf32, #tpu.memory_space<vmem>>, vector<128x128xf32>
      tpu.vector_store %arg8[%c0_21, %c0_22], %26 {strides = array<i32>} : memref<128x128xf32, #tpu.memory_space<vmem>>, vector<128x128xf32>,
    } else {
    }
    return
  }
  func.func @transform_0(%arg0: i32, %arg1: i32) -> (i32, i32) {
    %c0_i32 = arith.constant 0 : i32
    return %arg0, %arg1 : i32, i32
  }
  func.func @transform_1(%arg0: i32, %arg1: i32) -> (i32, i32) {
    %c0_i32 = arith.constant 0 : i32
    %c0_i32_0 = arith.constant 0 : i32
    return %arg1, %c0_i32 : i32, i32
  }
  func.func @transform_2(%arg0: i32, %arg1: i32) -> (i32, i32) {
    %c0_i32 = arith.constant 0 : i32
    %c0_i32_0 = arith.constant 0 : i32
    return %arg1, %c0_i32 : i32, i32
  }
  func.func @transform_3(%arg0: i32, %arg1: i32) -> (i32, i32) {
    %c0_i32 = arith.constant 0 : i32
    %c0_i32_0 = arith.constant 0 : i32
    return %arg0, %c0_i32 : i32, i32
  }
  func.func @transform_4(%arg0: i32, %arg1: i32) -> (i32, i32) {
    %c0_i32 = arith.constant 0 : i32
    %c0_i32_0 = arith.constant 0 : i32
    %c0_i32_1 = arith.constant 0 : i32
    return %c0_i32, %c0_i32_0 : i32, i32
  }
  func.func @transform_5(%arg0: i32, %arg1: i32) -> (i32, i32) {
    %c0_i32 = arith.constant 0 : i32
    %c0_i32_0 = arith.constant 0 : i32
    %c0_i32_1 = arith.constant 0 : i32
    return %c0_i32, %c0_i32_0 : i32, i32
  }
  func.func @transform_6(%arg0: i32, %arg1: i32) -> (i32, i32) {
    %c0_i32 = arith.constant 0 : i32
    %c0_i32_0 = arith.constant 0 : i32
    return %arg0, %c0_i32 : i32, i32
  }
}

</mosaic_0001>

<llo_original>
// kernel: gcn_forward.3
$region0: #{gcn_forward.3}
  #allocation0 [shape = 'u32[]', space=smem, size = 0x4, offset = 0x4, fixed_abs, tag = 'smem constant byte address 0x4 - core index']
  #allocation1 [shape = 'u32[144,128]{1,0:T(1,128)}', space=vmem, size = 0x12000, scoped, tag = 'internal scratch']
  #allocation2 [shape = 'f32[128,128]{1,0:T(8,128)}', space=vmem, size = 0x10000, scoped, tag = 'scratch operand']
  %s0 = inlined_call_operand.vmem [shape: bf16[128,384], index: 0, kind: input, shape index: {}]
  %s1 = inlined_call_operand.vmem [shape: f32[384,1], index: 1, kind: input, shape index: {}]
  %s2 = inlined_call_operand.vmem [shape: bf16[384,128], index: 2, kind: input, shape index: {}]
  %s3 = inlined_call_operand.vmem [shape: f32[128,1], index: 3, kind: input, shape index: {}]
  %s4 = inlined_call_operand.vmem [shape: bf16[128,128], index: 4, kind: input, shape index: {}]
  %s5 = inlined_call_operand.vmem [shape: f32[1,128], index: 5, kind: input, shape index: {}]
  %s6 = inlined_call_operand.vmem [shape: f32[128,128], index: 6, kind: output, shape index: {}]
  %s7 = sld [smem:[#allocation0]]
  $region42: #{gcn_forward.3} parent=0
    _
  %s9 = ssub.s32 1, %s7
  %s10 = scalar_select 0, %s9, %s7
  // Predicated region
  $region2: #{gcn_forward.3} parent=0 // pred_check
    _
  $region3: #{gcn_forward.3} parent=0 // pred_check_branch
    %12 = sbr.rel (0) target = $region5
  $region4: #{gcn_forward.3} parent=0 // pred_region
    _
  $region5: #{gcn_forward.3} parent=0 // pred_fallthru
    _
  // Predicated region
  $region6: #{gcn_forward.3} parent=0 // pred_check
    _
  $region7: #{gcn_forward.3} parent=0 // pred_check_branch
    %14 = sbr.rel (0) target = $region9
  $region8: #{gcn_forward.3} parent=0 // pred_region
    _
  $region9: #{gcn_forward.3} parent=0 // pred_fallthru
    _
  // Predicated region
  $region10: #{gcn_forward.3} parent=0 // pred_check
    _
  $region11: #{gcn_forward.3} parent=0 // pred_check_branch
    %16 = sbr.rel (0) target = $region13
  $region12: #{gcn_forward.3} parent=0 // pred_region
    _
  $region13: #{gcn_forward.3} parent=0 // pred_fallthru
    _
  // Predicated region
  $region14: #{gcn_forward.3} parent=0 // pred_check
    _
  $region15: #{gcn_forward.3} parent=0 // pred_check_branch
    %18 = sbr.rel (0) target = $region17
  $region16: #{gcn_forward.3} parent=0 // pred_region
    _
  $region17: #{gcn_forward.3} parent=0 // pred_fallthru
    _
  // Predicated region
  $region18: #{gcn_forward.3} parent=0 // pred_check
    _
  $region19: #{gcn_forward.3} parent=0 // pred_check_branch
    %20 = sbr.rel (0) target = $region21
  $region20: #{gcn_forward.3} parent=0 // pred_region
    _
  $region21: #{gcn_forward.3} parent=0 // pred_fallthru
    _
  // Predicated region
  $region22: #{gcn_forward.3} parent=0 // pred_check
    _
  $region23: #{gcn_forward.3} parent=0 // pred_check_branch
    %22 = sbr.rel (0) target = $region25
  $region24: #{gcn_forward.3} parent=0 // pred_region
    _
  $region25: #{gcn_forward.3} parent=0 // pred_fallthru
    _
  %p24 = scmp.eq.s32.totalorder 0, 0
  // Predicated region
  $region26: #{gcn_forward.3} parent=0 // pred_check
    %p25 = pneg %p24
  $region27: #{gcn_forward.3} parent=0 // pred_check_branch
    %27 = sbr.rel (%p25) target = $region29
  $region28: #{gcn_forward.3} parent=0 // pred_region
    %28 = vst [vmem:[#allocation2] sm:$0xff] 0.0
    %29 = vst [vmem:[#allocation2 + $0x8] sm:$0xff] 0.0
    %30 = vst [vmem:[#allocation2 + $0x10] sm:$0xff] 0.0
    %31 = vst [vmem:[#allocation2 + $0x18] sm:$0xff] 0.0
    %32 = vst [vmem:[#allocation2 + $0x20] sm:$0xff] 0.0
    %33 = vst [vmem:[#allocation2 + $0x28] sm:$0xff] 0.0
    %34 = vst [vmem:[#allocation2 + $0x30] sm:$0xff] 0.0
    %35 = vst [vmem:[#allocation2 + $0x38] sm:$0xff] 0.0
    %36 = vst [vmem:[#allocation2 + $0x40] sm:$0xff] 0.0
    %37 = vst [vmem:[#allocation2 + $0x48] sm:$0xff] 0.0
    %38 = vst [vmem:[#allocation2 + $0x50] sm:$0xff] 0.0
    %39 = vst [vmem:[#allocation2 + $0x58] sm:$0xff] 0.0
    %40 = vst [vmem:[#allocation2 + $0x60] sm:$0xff] 0.0
    %41 = vst [vmem:[#allocation2 + $0x68] sm:$0xff] 0.0
    %42 = vst [vmem:[#allocation2 + $0x70] sm:$0xff] 0.0
    %43 = vst [vmem:[#allocation2 + $0x78] sm:$0xff] 0.0
  $region29: #{gcn_forward.3} parent=0 // pred_fallthru
    _
  %v44 = vld [vmem:[%s2] sm:$0xf]
  %v45 = vld [vmem:[%s2 + $0x4] sm:$0xf]
  %v46 = vld [vmem:[%s2 + $0x8] sm:$0xf]
  %v47 = vld [vmem:[%s2 + $0xc] sm:$0xf]
  %v48 = vld [vmem:[%s2 + $0x10] sm:$0xf]
  %v49 = vld [vmem:[%s2 + $0x14] sm:$0xf]
  %v50 = vld [vmem:[%s2 + $0x18] sm:$0xf]
  %v51 = vld [vmem:[%s2 + $0x1c] sm:$0xf]
  %v52 = vld [vmem:[%s2 + $0x20] sm:$0xf]
  %v53 = vld [vmem:[%s2 + $0x24] sm:$0xf]
  %v54 = vld [vmem:[%s2 + $0x28] sm:$0xf]
  %v55 = vld [vmem:[%s2 + $0x2c] sm:$0xf]
  %v56 = vld [vmem:[%s2 + $0x30] sm:$0xf]
  %v57 = vld [vmem:[%s2 + $0x34] sm:$0xf]
  %v58 = vld [vmem:[%s2 + $0x38] sm:$0xf]
  %v59 = vld [vmem:[%s2 + $0x3c] sm:$0xf]
  %v60 = vld [vmem:[%s2 + $0x40] sm:$0xf]
  %v61 = vld [vmem:[%s2 + $0x44] sm:$0xf]
  %v62 = vld [vmem:[%s2 + $0x48] sm:$0xf]
  %v63 = vld [vmem:[%s2 + $0x4c] sm:$0xf]
  %v64 = vld [vmem:[%s2 + $0x50] sm:$0xf]
  %v65 = vld [vmem:[%s2 + $0x54] sm:$0xf]
  %v66 = vld [vmem:[%s2 + $0x58] sm:$0xf]
  %v67 = vld [vmem:[%s2 + $0x5c] sm:$0xf]
  %v68 = vld [vmem:[%s2 + $0x60] sm:$0xf]
  %v69 = vld [vmem:[%s2 + $0x64] sm:$0xf]
  %v70 = vld [vmem:[%s2 + $0x68] sm:$0xf]
  %v71 = vld [vmem:[%s2 + $0x6c] sm:$0xf]
  %v72 = vld [vmem:[%s2 + $0x70] sm:$0xf]
  %v73 = vld [vmem:[%s2 + $0x74] sm:$0xf]
  %v74 = vld [vmem:[%s2 + $0x78] sm:$0xf]
  %v75 = vld [vmem:[%s2 + $0x7c] sm:$0xf]
  %v76 = vld [vmem:[%s2 + $0x80] sm:$0xf]
  %v77 = vld [vmem:[%s2 + $0x84] sm:$0xf]
  %v78 = vld [vmem:[%s2 + $0x88] sm:$0xf]
  %v79 = vld [vmem:[%s2 + $0x8c] sm:$0xf]
  %v80 = vld [vmem:[%s2 + $0x90] sm:$0xf]
  %v81 = vld [vmem:[%s2 + $0x94] sm:$0xf]
  %v82 = vld [vmem:[%s2 + $0x98] sm:$0xf]
  %v83 = vld [vmem:[%s2 + $0x9c] sm:$0xf]
  %v84 = vld [vmem:[%s2 + $0xa0] sm:$0xf]
  %v85 = vld [vmem:[%s2 + $0xa4] sm:$0xf]
  %v86 = vld [vmem:[%s2 + $0xa8] sm:$0xf]
  %v87 = vld [vmem:[%s2 + $0xac] sm:$0xf]
  %v88 = vld [vmem:[%s2 + $0xb0] sm:$0xf]
  %v89 = vld [vmem:[%s2 + $0xb4] sm:$0xf]
  %v90 = vld [vmem:[%s2 + $0xb8] sm:$0xf]
  %v91 = vld [vmem:[%s2 + $0xbc] sm:$0xf]
  %v92 = vunpack.c.l.bf16 %v44
  %v93 = vunpack.c.l.bf16 %v45
  %v94 = vunpack.c.l.bf16 %v46
  %v95 = vunpack.c.l.bf16 %v47
  %v96 = vunpack.c.l.bf16 %v48
  %v97 = vunpack.c.l.bf16 %v49
  %v98 = vunpack.c.l.bf16 %v50
  %v99 = vunpack.c.l.bf16 %v51
  %v100 = vunpack.c.l.bf16 %v52
  %v101 = vunpack.c.l.bf16 %v53
  %v102 = vunpack.c.l.bf16 %v54
  %v103 = vunpack.c.l.bf16 %v55
  %v104 = vunpack.c.l.bf16 %v56
  %v105 = vunpack.c.l.bf16 %v57
  %v106 = vunpack.c.l.bf16 %v58
  %v107 = vunpack.c.l.bf16 %v59
  %v108 = vunpack.c.l.bf16 %v60
  %v109 = vunpack.c.l.bf16 %v61
  %v110 = vunpack.c.l.bf16 %v62
  %v111 = vunpack.c.l.bf16 %v63
  %v112 = vunpack.c.l.bf16 %v64
  %v113 = vunpack.c.l.bf16 %v65
  %v114 = vunpack.c.l.bf16 %v66
  %v115 = vunpack.c.l.bf16 %v67
  %v116 = vunpack.c.l.bf16 %v68
  %v117 = vunpack.c.l.bf16 %v69
  %v118 = vunpack.c.l.bf16 %v70
  %v119 = vunpack.c.l.bf16 %v71
  %v120 = vunpack.c.l.bf16 %v72
  %v121 = vunpack.c.l.bf16 %v73
  %v122 = vunpack.c.l.bf16 %v74
  %v123 = vunpack.c.l.bf16 %v75
  %v124 = vunpack.c.l.bf16 %v76
  %v125 = vunpack.c.l.bf16 %v77
  %v126 = vunpack.c.l.bf16 %v78
  %v127 = vunpack.c.l.bf16 %v79
  %v128 = vunpack.c.l.bf16 %v80
  %v129 = vunpack.c.l.bf16 %v81
  %v130 = vunpack.c.l.bf16 %v82
  %v131 = vunpack.c.l.bf16 %v83
  %v132 = vunpack.c.l.bf16 %v84
  %v133 = vunpack.c.l.bf16 %v85
  %v134 = vunpack.c.l.bf16 %v86
  %v135 = vunpack.c.l.bf16 %v87
  %v136 = vunpack.c.l.bf16 %v88
  %v137 = vunpack.c.l.bf16 %v89
  %v138 = vunpack.c.l.bf16 %v90
  %v139 = vunpack.c.l.bf16 %v91
  %v140 = vld [vmem:[%s1] sm:$0xff]
  %v141 = vld [vmem:[%s1 + $0x8] sm:$0xff]
  %v142 = vld [vmem:[%s1 + $0x10] sm:$0xff]
  %v143 = vld [vmem:[%s1 + $0x18] sm:$0xff]
  %v144 = vld [vmem:[%s1 + $0x20] sm:$0xff]
  %v145 = vld [vmem:[%s1 + $0x28] sm:$0xff]
  %v146 = vld [vmem:[%s1 + $0x30] sm:$0xff]
  %v147 = vld [vmem:[%s1 + $0x38] sm:$0xff]
  %v148 = vld [vmem:[%s1 + $0x40] sm:$0xff]
  %v149 = vld [vmem:[%s1 + $0x48] sm:$0xff]
  %v150 = vld [vmem:[%s1 + $0x50] sm:$0xff]
  %v151 = vld [vmem:[%s1 + $0x58] sm:$0xff]
  %v152 = vld [vmem:[%s1 + $0x60] sm:$0xff]
  %v153 = vld [vmem:[%s1 + $0x68] sm:$0xff]
  %v154 = vld [vmem:[%s1 + $0x70] sm:$0xff]
  %v155 = vld [vmem:[%s1 + $0x78] sm:$0xff]
  %v156 = vld [vmem:[%s1 + $0x80] sm:$0xff]
  %v157 = vld [vmem:[%s1 + $0x88] sm:$0xff]
  %v158 = vld [vmem:[%s1 + $0x90] sm:$0xff]
  %v159 = vld [vmem:[%s1 + $0x98] sm:$0xff]
  %v160 = vld [vmem:[%s1 + $0xa0] sm:$0xff]
  %v161 = vld [vmem:[%s1 + $0xa8] sm:$0xff]
  %v162 = vld [vmem:[%s1 + $0xb0] sm:$0xff]
  %v163 = vld [vmem:[%s1 + $0xb8] sm:$0xff]
  %v164 = vld [vmem:[%s1 + $0xc0] sm:$0xff]
  %v165 = vld [vmem:[%s1 + $0xc8] sm:$0xff]
  %v166 = vld [vmem:[%s1 + $0xd0] sm:$0xff]
  %v167 = vld [vmem:[%s1 + $0xd8] sm:$0xff]
  %v168 = vld [vmem:[%s1 + $0xe0] sm:$0xff]
  %v169 = vld [vmem:[%s1 + $0xe8] sm:$0xff]
  %v170 = vld [vmem:[%s1 + $0xf0] sm:$0xff]
  %v171 = vld [vmem:[%s1 + $0xf8] sm:$0xff]
  %v172 = vld [vmem:[%s1 + $0x100] sm:$0xff]
  %v173 = vld [vmem:[%s1 + $0x108] sm:$0xff]
  %v174 = vld [vmem:[%s1 + $0x110] sm:$0xff]
  %v175 = vld [vmem:[%s1 + $0x118] sm:$0xff]
  %v176 = vld [vmem:[%s1 + $0x120] sm:$0xff]
  %v177 = vld [vmem:[%s1 + $0x128] sm:$0xff]
  %v178 = vld [vmem:[%s1 + $0x130] sm:$0xff]
  %v179 = vld [vmem:[%s1 + $0x138] sm:$0xff]
  %v180 = vld [vmem:[%s1 + $0x140] sm:$0xff]
  %v181 = vld [vmem:[%s1 + $0x148] sm:$0xff]
  %v182 = vld [vmem:[%s1 + $0x150] sm:$0xff]
  %v183 = vld [vmem:[%s1 + $0x158] sm:$0xff]
  %v184 = vld [vmem:[%s1 + $0x160] sm:$0xff]
  %v185 = vld [vmem:[%s1 + $0x168] sm:$0xff]
  %v186 = vld [vmem:[%s1 + $0x170] sm:$0xff]
  %v187 = vld [vmem:[%s1 + $0x178] sm:$0xff]
  %189 = vset.pattern.permute.xlu0 0
  %190 = vperm.xlu0 %189, %v140
  %v191 = vpop.permute.xlu0 %190
  %194 = vset.pattern.permute.xlu0 0
  %195 = vperm.xlu0 %194, %v141
  %v196 = vpop.permute.xlu0 %195
  %199 = vset.pattern.permute.xlu0 0
  %200 = vperm.xlu0 %199, %v142
  %v201 = vpop.permute.xlu0 %200
  %204 = vset.pattern.permute.xlu0 0
  %205 = vperm.xlu0 %204, %v143
  %v206 = vpop.permute.xlu0 %205
  %209 = vset.pattern.permute.xlu0 0
  %210 = vperm.xlu0 %209, %v144
  %v211 = vpop.permute.xlu0 %210
  %214 = vset.pattern.permute.xlu0 0
  %215 = vperm.xlu0 %214, %v145
  %v216 = vpop.permute.xlu0 %215
  %219 = vset.pattern.permute.xlu0 0
  %220 = vperm.xlu0 %219, %v146
  %v221 = vpop.permute.xlu0 %220
  %224 = vset.pattern.permute.xlu0 0
  %225 = vperm.xlu0 %224, %v147
  %v226 = vpop.permute.xlu0 %225
  %229 = vset.pattern.permute.xlu0 0
  %230 = vperm.xlu0 %229, %v148
  %v231 = vpop.permute.xlu0 %230
  %234 = vset.pattern.permute.xlu0 0
  %235 = vperm.xlu0 %234, %v149
  %v236 = vpop.permute.xlu0 %235
  %239 = vset.pattern.permute.xlu0 0
  %240 = vperm.xlu0 %239, %v150
  %v241 = vpop.permute.xlu0 %240
  %244 = vset.pattern.permute.xlu0 0
  %245 = vperm.xlu0 %244, %v151
  %v246 = vpop.permute.xlu0 %245
  %249 = vset.pattern.permute.xlu0 0
  %250 = vperm.xlu0 %249, %v152
  %v251 = vpop.permute.xlu0 %250
  %254 = vset.pattern.permute.xlu0 0
  %255 = vperm.xlu0 %254, %v153
  %v256 = vpop.permute.xlu0 %255
  %259 = vset.pattern.permute.xlu0 0
  %260 = vperm.xlu0 %259, %v154
  %v261 = vpop.permute.xlu0 %260
  %264 = vset.pattern.permute.xlu0 0
  %265 = vperm.xlu0 %264, %v155
  %v266 = vpop.permute.xlu0 %265
  %269 = vset.pattern.permute.xlu0 0
  %270 = vperm.xlu0 %269, %v156
  %v271 = vpop.permute.xlu0 %270
  %274 = vset.pattern.permute.xlu0 0
  %275 = vperm.xlu0 %274, %v157
  %v276 = vpop.permute.xlu0 %275
  %279 = vset.pattern.permute.xlu0 0
  %280 = vperm.xlu0 %279, %v158
  %v281 = vpop.permute.xlu0 %280
  %284 = vset.pattern.permute.xlu0 0
  %285 = vperm.xlu0 %284, %v159
  %v286 = vpop.permute.xlu0 %285
  %289 = vset.pattern.permute.xlu0 0
  %290 = vperm.xlu0 %289, %v160
  %v291 = vpop.permute.xlu0 %290
  %294 = vset.pattern.permute.xlu0 0
  %295 = vperm.xlu0 %294, %v161
  %v296 = vpop.permute.xlu0 %295
  %299 = vset.pattern.permute.xlu0 0
  %300 = vperm.xlu0 %299, %v162
  %v301 = vpop.permute.xlu0 %300
  %304 = vset.pattern.permute.xlu0 0
  %305 = vperm.xlu0 %304, %v163
  %v306 = vpop.permute.xlu0 %305
  %309 = vset.pattern.permute.xlu0 0
  %310 = vperm.xlu0 %309, %v164
  %v311 = vpop.permute.xlu0 %310
  %314 = vset.pattern.permute.xlu0 0
  %315 = vperm.xlu0 %314, %v165
  %v316 = vpop.permute.xlu0 %315
  %319 = vset.pattern.permute.xlu0 0
  %320 = vperm.xlu0 %319, %v166
  %v321 = vpop.permute.xlu0 %320
  %324 = vset.pattern.permute.xlu0 0
  %325 = vperm.xlu0 %324, %v167
  %v326 = vpop.permute.xlu0 %325
  %329 = vset.pattern.permute.xlu0 0
  %330 = vperm.xlu0 %329, %v168
  %v331 = vpop.permute.xlu0 %330
  %334 = vset.pattern.permute.xlu0 0
  %335 = vperm.xlu0 %334, %v169
  %v336 = vpop.permute.xlu0 %335
  %339 = vset.pattern.permute.xlu0 0
  %340 = vperm.xlu0 %339, %v170
  %v341 = vpop.permute.xlu0 %340
  %344 = vset.pattern.permute.xlu0 0
  %345 = vperm.xlu0 %344, %v171
  %v346 = vpop.permute.xlu0 %345
  %349 = vset.pattern.permute.xlu0 0
  %350 = vperm.xlu0 %349, %v172
  %v351 = vpop.permute.xlu0 %350
  %354 = vset.pattern.permute.xlu0 0
  %355 = vperm.xlu0 %354, %v173
  %v356 = vpop.permute.xlu0 %355
  %359 = vset.pattern.permute.xlu0 0
  %360 = vperm.xlu0 %359, %v174
  %v361 = vpop.permute.xlu0 %360
  %364 = vset.pattern.permute.xlu0 0
  %365 = vperm.xlu0 %364, %v175
  %v366 = vpop.permute.xlu0 %365
  %369 = vset.pattern.permute.xlu0 0
  %370 = vperm.xlu0 %369, %v176
  %v371 = vpop.permute.xlu0 %370
  %374 = vset.pattern.permute.xlu0 0
  %375 = vperm.xlu0 %374, %v177
  %v376 = vpop.permute.xlu0 %375
  %379 = vset.pattern.permute.xlu0 0
  %380 = vperm.xlu0 %379, %v178
  %v381 = vpop.permute.xlu0 %380
  %384 = vset.pattern.permute.xlu0 0
  %385 = vperm.xlu0 %384, %v179
  %v386 = vpop.permute.xlu0 %385
  %389 = vset.pattern.permute.xlu0 0
  %390 = vperm.xlu0 %389, %v180
  %v391 = vpop.permute.xlu0 %390
  %394 = vset.pattern.permute.xlu0 0
  %395 = vperm.xlu0 %394, %v181
  %v396 = vpop.permute.xlu0 %395
  %399 = vset.pattern.permute.xlu0 0
  %400 = vperm.xlu0 %399, %v182
  %v401 = vpop.permute.xlu0 %400
  %404 = vset.pattern.permute.xlu0 0
  %405 = vperm.xlu0 %404, %v183
  %v406 = vpop.permute.xlu0 %405
  %409 = vset.pattern.permute.xlu0 0
  %410 = vperm.xlu0 %409, %v184
  %v411 = vpop.permute.xlu0 %410
  %414 = vset.pattern.permute.xlu0 0
  %415 = vperm.xlu0 %414, %v185
  %v416 = vpop.permute.xlu0 %415
  %419 = vset.pattern.permute.xlu0 0
  %420 = vperm.xlu0 %419, %v186
  %v421 = vpop.permute.xlu0 %420
  %424 = vset.pattern.permute.xlu0 0
  %425 = vperm.xlu0 %424, %v187
  %v426 = vpop.permute.xlu0 %425
  %v428 = vmul.f32 %v92, %v191
  %v429 = vmul.f32 %v93, %v196
  %v430 = vmul.f32 %v94, %v201
  %v431 = vmul.f32 %v95, %v206
  %v432 = vmul.f32 %v96, %v211
  %v433 = vmul.f32 %v97, %v216
  %v434 = vmul.f32 %v98, %v221
  %v435 = vmul.f32 %v99, %v226
  %v436 = vmul.f32 %v100, %v231
  %v437 = vmul.f32 %v101, %v236
  %v438 = vmul.f32 %v102, %v241
  %v439 = vmul.f32 %v103, %v246
  %v440 = vmul.f32 %v104, %v251
  %v441 = vmul.f32 %v105, %v256
  %v442 = vmul.f32 %v106, %v261
  %v443 = vmul.f32 %v107, %v266
  %v444 = vmul.f32 %v108, %v271
  %v445 = vmul.f32 %v109, %v276
  %v446 = vmul.f32 %v110, %v281
  %v447 = vmul.f32 %v111, %v286
  %v448 = vmul.f32 %v112, %v291
  %v449 = vmul.f32 %v113, %v296
  %v450 = vmul.f32 %v114, %v301
  %v451 = vmul.f32 %v115, %v306
  %v452 = vmul.f32 %v116, %v311
  %v453 = vmul.f32 %v117, %v316
  %v454 = vmul.f32 %v118, %v321
  %v455 = vmul.f32 %v119, %v326
  %v456 = vmul.f32 %v120, %v331
  %v457 = vmul.f32 %v121, %v336
  %v458 = vmul.f32 %v122, %v341
  %v459 = vmul.f32 %v123, %v346
  %v460 = vmul.f32 %v124, %v351
  %v461 = vmul.f32 %v125, %v356
  %v462 = vmul.f32 %v126, %v361
  %v463 = vmul.f32 %v127, %v366
  %v464 = vmul.f32 %v128, %v371
  %v465 = vmul.f32 %v129, %v376
  %v466 = vmul.f32 %v130, %v381
  %v467 = vmul.f32 %v131, %v386
  %v468 = vmul.f32 %v132, %v391
  %v469 = vmul.f32 %v133, %v396
  %v470 = vmul.f32 %v134, %v401
  %v471 = vmul.f32 %v135, %v406
  %v472 = vmul.f32 %v136, %v411
  %v473 = vmul.f32 %v137, %v416
  %v474 = vmul.f32 %v138, %v421
  %v475 = vmul.f32 %v139, %v426
  %v476 = vpack.c.bf16 %v429, %v428
  %v477 = vpack.c.bf16 %v431, %v430
  %v478 = vpack.c.bf16 %v433, %v432
  %v479 = vpack.c.bf16 %v435, %v434
  %v480 = vpack.c.bf16 %v437, %v436
  %v481 = vpack.c.bf16 %v439, %v438
  %v482 = vpack.c.bf16 %v441, %v440
  %v483 = vpack.c.bf16 %v443, %v442
  %v484 = vpack.c.bf16 %v445, %v444
  %v485 = vpack.c.bf16 %v447, %v446
  %v486 = vpack.c.bf16 %v449, %v448
  %v487 = vpack.c.bf16 %v451, %v450
  %v488 = vpack.c.bf16 %v453, %v452
  %v489 = vpack.c.bf16 %v455, %v454
  %v490 = vpack.c.bf16 %v457, %v456
  %v491 = vpack.c.bf16 %v459, %v458
  %v492 = vpack.c.bf16 %v461, %v460
  %v493 = vpack.c.bf16 %v463, %v462
  %v494 = vpack.c.bf16 %v465, %v464
  %v495 = vpack.c.bf16 %v467, %v466
  %v496 = vpack.c.bf16 %v469, %v468
  %v497 = vpack.c.bf16 %v471, %v470
  %v498 = vpack.c.bf16 %v473, %v472
  %v499 = vpack.c.bf16 %v475, %v474
  %v500 = vld [vmem:[#allocation2] sm:$0xff]
  %v501 = vld [vmem:[#allocation2 + $0x8] sm:$0xff]
  %v502 = vld [vmem:[#allocation2 + $0x10] sm:$0xff]
  %v503 = vld [vmem:[#allocation2 + $0x18] sm:$0xff]
  %v504 = vld [vmem:[#allocation2 + $0x20] sm:$0xff]
  %v505 = vld [vmem:[#allocation2 + $0x28] sm:$0xff]
  %v506 = vld [vmem:[#allocation2 + $0x30] sm:$0xff]
  %v507 = vld [vmem:[#allocation2 + $0x38] sm:$0xff]
  %v508 = vld [vmem:[#allocation2 + $0x40] sm:$0xff]
  %v509 = vld [vmem:[#allocation2 + $0x48] sm:$0xff]
  %v510 = vld [vmem:[#allocation2 + $0x50] sm:$0xff]
  %v511 = vld [vmem:[#allocation2 + $0x58] sm:$0xff]
  %v512 = vld [vmem:[#allocation2 + $0x60] sm:$0xff]
  %v513 = vld [vmem:[#allocation2 + $0x68] sm:$0xff]
  %v514 = vld [vmem:[#allocation2 + $0x70] sm:$0xff]
  %v515 = vld [vmem:[#allocation2 + $0x78] sm:$0xff]
  %v516 = vld [vmem:[%s0] sm:$0xff]
  %v517 = vld [vmem:[%s0 + $0x8] sm:$0xf]
  %v518 = vld [vmem:[%s0 + $0xc] sm:$0xff]
  %v519 = vld [vmem:[%s0 + $0x14] sm:$0xf]
  %v520 = vld [vmem:[%s0 + $0x18] sm:$0xff]
  %v521 = vld [vmem:[%s0 + $0x20] sm:$0xf]
  %v522 = vld [vmem:[%s0 + $0x24] sm:$0xff]
  %v523 = vld [vmem:[%s0 + $0x2c] sm:$0xf]
  %v524 = vld [vmem:[%s0 + $0x30] sm:$0xff]
  %v525 = vld [vmem:[%s0 + $0x38] sm:$0xf]
  %v526 = vld [vmem:[%s0 + $0x3c] sm:$0xff]
  %v527 = vld [vmem:[%s0 + $0x44] sm:$0xf]
  %v528 = vld [vmem:[%s0 + $0x48] sm:$0xff]
  %v529 = vld [vmem:[%s0 + $0x50] sm:$0xf]
  %v530 = vld [vmem:[%s0 + $0x54] sm:$0xff]
  %v531 = vld [vmem:[%s0 + $0x5c] sm:$0xf]
  %v532 = vld [vmem:[%s0 + $0x60] sm:$0xff]
  %v533 = vld [vmem:[%s0 + $0x68] sm:$0xf]
  %v534 = vld [vmem:[%s0 + $0x6c] sm:$0xff]
  %v535 = vld [vmem:[%s0 + $0x74] sm:$0xf]
  %v536 = vld [vmem:[%s0 + $0x78] sm:$0xff]
  %v537 = vld [vmem:[%s0 + $0x80] sm:$0xf]
  %v538 = vld [vmem:[%s0 + $0x84] sm:$0xff]
  %v539 = vld [vmem:[%s0 + $0x8c] sm:$0xf]
  %v540 = vld [vmem:[%s0 + $0x90] sm:$0xff]
  %v541 = vld [vmem:[%s0 + $0x98] sm:$0xf]
  %v542 = vld [vmem:[%s0 + $0x9c] sm:$0xff]
  %v543 = vld [vmem:[%s0 + $0xa4] sm:$0xf]
  %v544 = vld [vmem:[%s0 + $0xa8] sm:$0xff]
  %v545 = vld [vmem:[%s0 + $0xb0] sm:$0xf]
  %v546 = vld [vmem:[%s0 + $0xb4] sm:$0xff]
  %v547 = vld [vmem:[%s0 + $0xbc] sm:$0xf]
  %v580 = vunpack.c.l.b16 %v516
  %v581 = vunpack.c.h.b16 %v516
  %v582 = vunpack.c.l.b16 %v517
  %v583 = vunpack.c.l.b16 %v518
  %v584 = vunpack.c.h.b16 %v518
  %v585 = vunpack.c.l.b16 %v519
  %v586 = vunpack.c.l.b16 %v520
  %v587 = vunpack.c.h.b16 %v520
  %v588 = vunpack.c.l.b16 %v521
  %v589 = vunpack.c.l.b16 %v522
  %v590 = vunpack.c.h.b16 %v522
  %v591 = vunpack.c.l.b16 %v523
  %v592 = vunpack.c.l.b16 %v524
  %v593 = vunpack.c.h.b16 %v524
  %v594 = vunpack.c.l.b16 %v525
  %v595 = vunpack.c.l.b16 %v526
  %v596 = vunpack.c.h.b16 %v526
  %v597 = vunpack.c.l.b16 %v527
  %v598 = vunpack.c.l.b16 %v528
  %v599 = vunpack.c.h.b16 %v528
  %v600 = vunpack.c.l.b16 %v529
  %v601 = vunpack.c.l.b16 %v530
  %v602 = vunpack.c.h.b16 %v530
  %v603 = vunpack.c.l.b16 %v531
  %v604 = vunpack.c.l.b16 %v532
  %v605 = vunpack.c.h.b16 %v532
  %v606 = vunpack.c.l.b16 %v533
  %v607 = vunpack.c.l.b16 %v534
  %v608 = vunpack.c.h.b16 %v534
  %v609 = vunpack.c.l.b16 %v535
  %v610 = vunpack.c.l.b16 %v536
  %v611 = vunpack.c.h.b16 %v536
  %v612 = vunpack.c.l.b16 %v537
  %v613 = vunpack.c.l.b16 %v538
  %v614 = vunpack.c.h.b16 %v538
  %v615 = vunpack.c.l.b16 %v539
  %v616 = vunpack.c.l.b16 %v540
  %v617 = vunpack.c.h.b16 %v540
  %v618 = vunpack.c.l.b16 %v541
  %v619 = vunpack.c.l.b16 %v542
  %v620 = vunpack.c.h.b16 %v542
  %v621 = vunpack.c.l.b16 %v543
  %v622 = vunpack.c.l.b16 %v544
  %v623 = vunpack.c.h.b16 %v544
  %v624 = vunpack.c.l.b16 %v545
  %v625 = vunpack.c.l.b16 %v546
  %v626 = vunpack.c.h.b16 %v546
  %v627 = vunpack.c.l.b16 %v547
  %v628 = vpack.c.b16 %v583, %v580
  %v629 = vpack.c.b16 %v584, %v581
  %v630 = vpack.c.b16 %v585, %v582
  %v631 = vpack.c.b16 %v589, %v586
  %v632 = vpack.c.b16 %v590, %v587
  %v633 = vpack.c.b16 %v591, %v588
  %v634 = vpack.c.b16 %v595, %v592
  %v635 = vpack.c.b16 %v596, %v593
  %v636 = vpack.c.b16 %v597, %v594
  %v637 = vpack.c.b16 %v601, %v598
  %v638 = vpack.c.b16 %v602, %v599
  %v639 = vpack.c.b16 %v603, %v600
  %v640 = vpack.c.b16 %v607, %v604
  %v641 = vpack.c.b16 %v608, %v605
  %v642 = vpack.c.b16 %v609, %v606
  %v643 = vpack.c.b16 %v613, %v610
  %v644 = vpack.c.b16 %v614, %v611
  %v645 = vpack.c.b16 %v615, %v612
  %v646 = vpack.c.b16 %v619, %v616
  %v647 = vpack.c.b16 %v620, %v617
  %v648 = vpack.c.b16 %v621, %v618
  %v649 = vpack.c.b16 %v625, %v622
  %v650 = vpack.c.b16 %v626, %v623
  %v651 = vpack.c.b16 %v627, %v624
  %676 = vmatprep.subr.bf16.mxu0 0
  %677 = vmatpush1.bf16.msra.mxu0 %v476
  %678 = vmatprep.subr.bf16.mxu0 0
  %679 = vmatpush1.bf16.msra.mxu0 %v477
  %680 = vmatprep.subr.bf16.mxu0 0
  %681 = vmatpush1.bf16.msra.mxu0 %v478
  %682 = vmatprep.subr.bf16.mxu0 0
  %683 = vmatpush1.bf16.msra.mxu0 %v479
  %684 = vmatprep.subr.bf16.mxu0 0
  %685 = vmatpush1.bf16.msra.mxu0 %v480
  %686 = vmatprep.subr.bf16.mxu0 0
  %687 = vmatpush1.bf16.msra.mxu0 %v481
  %688 = vmatprep.subr.bf16.mxu0 0
  %689 = vmatpush1.bf16.msra.mxu0 %v482
  %690 = vmatprep.subr.bf16.mxu0 0
  %691 = vmatpush1.bf16.msra.mxu0 %v483
  %692 = vmatprep.subr.bf16.mxu0 0
  %693 = vmatpush1.bf16.msra.mxu0 %v484
  %694 = vmatprep.subr.bf16.mxu0 0
  %695 = vmatpush1.bf16.msra.mxu0 %v485
  %696 = vmatprep.subr.bf16.mxu0 0
  %697 = vmatpush1.bf16.msra.mxu0 %v486
  %698 = vmatprep.subr.bf16.mxu0 0
  %699 = vmatpush1.bf16.msra.mxu0 %v487
  %700 = vmatprep.subr.bf16.mxu0 0
  %701 = vmatpush1.bf16.msra.mxu0 %v488
  %702 = vmatprep.subr.bf16.mxu0 0
  %703 = vmatpush1.bf16.msra.mxu0 %v489
  %704 = vmatprep.subr.bf16.mxu0 0
  %705 = vmatpush1.bf16.msra.mxu0 %v490
  %706 = vmatprep.subr.bf16.mxu0 0
  %707 = vmatpush1.bf16.msra.mxu0 %v491
  %708 = vmatprep.mubr.bf16.mxu0 %v629
  %709 = vmatmul.mubr.bf16.gmra.mrb[0].mxu0 %v628
  %v710 = vpop.f32.mrb[0].mxu0
  %v711 = vadd.f32 0.0, %v710
  %v712 = vpop.f32.mrb[0].mxu0
  %v713 = vpop.f32.mrb[0].mxu0
  %v714 = vadd.f32 0.0, %v713
  %v715 = vpop.f32.mrb[0].mxu0
  %716 = vmatprep.mubr.bf16.mxu0 %v632
  %717 = vmatmul.mubr.bf16.gmra.mrb[0].mxu0 %v631
  %v718 = vpop.f32.mrb[0].mxu0
  %v719 = vadd.f32 0.0, %v718
  %v720 = vpop.f32.mrb[0].mxu0
  %v721 = vpop.f32.mrb[0].mxu0
  %v722 = vadd.f32 0.0, %v721
  %v723 = vpop.f32.mrb[0].mxu0
  %724 = vmatprep.mubr.bf16.mxu0 %v635
  %725 = vmatmul.mubr.bf16.gmra.mrb[0].mxu0 %v634
  %v726 = vpop.f32.mrb[0].mxu0
  %v727 = vadd.f32 0.0, %v726
  %v728 = vpop.f32.mrb[0].mxu0
  %v729 = vpop.f32.mrb[0].mxu0
  %v730 = vadd.f32 0.0, %v729
  %v731 = vpop.f32.mrb[0].mxu0
  %732 = vmatprep.mubr.bf16.mxu0 %v638
  %733 = vmatmul.mubr.bf16.gmra.mrb[0].mxu0 %v637
  %v734 = vpop.f32.mrb[0].mxu0
  %v735 = vadd.f32 0.0, %v734
  %v736 = vpop.f32.mrb[0].mxu0
  %v737 = vpop.f32.mrb[0].mxu0
  %v738 = vadd.f32 0.0, %v737
  %v739 = vpop.f32.mrb[0].mxu0
  %740 = vmatprep.mubr.bf16.mxu0 %v641
  %741 = vmatmul.mubr.bf16.gmra.mrb[0].mxu0 %v640
  %v742 = vpop.f32.mrb[0].mxu0
  %v743 = vadd.f32 0.0, %v742
  %v744 = vpop.f32.mrb[0].mxu0
  %v745 = vpop.f32.mrb[0].mxu0
  %v746 = vadd.f32 0.0, %v745
  %v747 = vpop.f32.mrb[0].mxu0
  %748 = vmatprep.mubr.bf16.mxu0 %v644
  %749 = vmatmul.mubr.bf16.gmra.mrb[0].mxu0 %v643
  %v750 = vpop.f32.mrb[0].mxu0
  %v751 = vadd.f32 0.0, %v750
  %v752 = vpop.f32.mrb[0].mxu0
  %v753 = vpop.f32.mrb[0].mxu0
  %v754 = vadd.f32 0.0, %v753
  %v755 = vpop.f32.mrb[0].mxu0
  %756 = vmatprep.mubr.bf16.mxu0 %v647
  %757 = vmatmul.mubr.bf16.gmra.mrb[0].mxu0 %v646
  %v758 = vpop.f32.mrb[0].mxu0
  %v759 = vadd.f32 0.0, %v758
  %v760 = vpop.f32.mrb[0].mxu0
  %v761 = vpop.f32.mrb[0].mxu0
  %v762 = vadd.f32 0.0, %v761
  %v763 = vpop.f32.mrb[0].mxu0
  %764 = vmatprep.mubr.bf16.mxu0 %v650
  %765 = vmatmul.mubr.bf16.gmra.mrb[0].mxu0 %v649
  %v766 = vpop.f32.mrb[0].mxu0
  %v767 = vadd.f32 0.0, %v766
  %v768 = vpop.f32.mrb[0].mxu0
  %v769 = vpop.f32.mrb[0].mxu0
  %v770 = vadd.f32 0.0, %v769
  %v771 = vpop.f32.mrb[0].mxu0
  %772 = vdwg.mxu0
  %773 = vmatprep.subr.bf16.mxu0 0
  %774 = vmatpush1.bf16.msra.mxu0 %v492
  %775 = vmatprep.subr.bf16.mxu0 0
  %776 = vmatpush1.bf16.msra.mxu0 %v493
  %777 = vmatprep.subr.bf16.mxu0 0
  %778 = vmatpush1.bf16.msra.mxu0 %v494
  %779 = vmatprep.subr.bf16.mxu0 0
  %780 = vmatpush1.bf16.msra.mxu0 %v495
  %781 = vmatprep.subr.bf16.mxu0 0
  %782 = vmatpush1.bf16.msra.mxu0 %v496
  %783 = vmatprep.subr.bf16.mxu0 0
  %784 = vmatpush1.bf16.msra.mxu0 %v497
  %785 = vmatprep.subr.bf16.mxu0 0
  %786 = vmatpush1.bf16.msra.mxu0 %v498
  %787 = vmatprep.subr.bf16.mxu0 0
  %788 = vmatpush1.bf16.msra.mxu0 %v499
  %789 = vmatprep.subr.bf16.mxu0 0
  %790 = vmatpush1.bf16.msra.mxu0 0
  %791 = vmatprep.subr.bf16.mxu0 0
  %792 = vmatpush1.bf16.msra.mxu0 0
  %793 = vmatprep.subr.bf16.mxu0 0
  %794 = vmatpush1.bf16.msra.mxu0 0
  %795 = vmatprep.subr.bf16.mxu0 0
  %796 = vmatpush1.bf16.msra.mxu0 0
  %797 = vmatprep.subr.bf16.mxu0 0
  %798 = vmatpush1.bf16.msra.mxu0 0
  %799 = vmatprep.subr.bf16.mxu0 0
  %800 = vmatpush1.bf16.msra.mxu0 0
  %801 = vmatprep.subr.bf16.mxu0 0
  %802 = vmatpush1.bf16.msra.mxu0 0
  %803 = vmatprep.subr.bf16.mxu0 0
  %804 = vmatpush1.bf16.msra.mxu0 0
  %805 = vmatprep.mubr.bf16.mxu0 0
  %806 = vmatmul.mubr.bf16.gmra.mrb[0].mxu0 %v630
  %v807 = vpop.f32.mrb[0].mxu0
  %v808 = vadd.f32 %v711, %v807
  %v809 = vpop.f32.mrb[0].mxu0
  %v810 = vpop.f32.mrb[0].mxu0
  %v811 = vadd.f32 %v714, %v810
  %v812 = vpop.f32.mrb[0].mxu0
  %813 = vmatprep.mubr.bf16.mxu0 0
  %814 = vmatmul.mubr.bf16.gmra.mrb[0].mxu0 %v633
  %v815 = vpop.f32.mrb[0].mxu0
  %v816 = vadd.f32 %v719, %v815
  %v817 = vpop.f32.mrb[0].mxu0
  %v818 = vpop.f32.mrb[0].mxu0
  %v819 = vadd.f32 %v722, %v818
  %v820 = vpop.f32.mrb[0].mxu0
  %821 = vmatprep.mubr.bf16.mxu0 0
  %822 = vmatmul.mubr.bf16.gmra.mrb[0].mxu0 %v636
  %v823 = vpop.f32.mrb[0].mxu0
  %v824 = vadd.f32 %v727, %v823
  %v825 = vpop.f32.mrb[0].mxu0
  %v826 = vpop.f32.mrb[0].mxu0
  %v827 = vadd.f32 %v730, %v826
  %v828 = vpop.f32.mrb[0].mxu0
  %829 = vmatprep.mubr.bf16.mxu0 0
  %830 = vmatmul.mubr.bf16.gmra.mrb[0].mxu0 %v639
  %v831 = vpop.f32.mrb[0].mxu0
  %v832 = vadd.f32 %v735, %v831
  %v833 = vpop.f32.mrb[0].mxu0
  %v834 = vpop.f32.mrb[0].mxu0
  %v835 = vadd.f32 %v738, %v834
  %v836 = vpop.f32.mrb[0].mxu0
  %837 = vmatprep.mubr.bf16.mxu0 0
  %838 = vmatmul.mubr.bf16.gmra.mrb[0].mxu0 %v642
  %v839 = vpop.f32.mrb[0].mxu0
  %v840 = vadd.f32 %v743, %v839
  %v841 = vpop.f32.mrb[0].mxu0
  %v842 = vpop.f32.mrb[0].mxu0
  %v843 = vadd.f32 %v746, %v842
  %v844 = vpop.f32.mrb[0].mxu0
  %845 = vmatprep.mubr.bf16.mxu0 0
  %846 = vmatmul.mubr.bf16.gmra.mrb[0].mxu0 %v645
  %v847 = vpop.f32.mrb[0].mxu0
  %v848 = vadd.f32 %v751, %v847
  %v849 = vpop.f32.mrb[0].mxu0
  %v850 = vpop.f32.mrb[0].mxu0
  %v851 = vadd.f32 %v754, %v850
  %v852 = vpop.f32.mrb[0].mxu0
  %853 = vmatprep.mubr.bf16.mxu0 0
  %854 = vmatmul.mubr.bf16.gmra.mrb[0].mxu0 %v648
  %v855 = vpop.f32.mrb[0].mxu0
  %v856 = vadd.f32 %v759, %v855
  %v857 = vpop.f32.mrb[0].mxu0
  %v858 = vpop.f32.mrb[0].mxu0
  %v859 = vadd.f32 %v762, %v858
  %v860 = vpop.f32.mrb[0].mxu0
  %861 = vmatprep.mubr.bf16.mxu0 0
  %862 = vmatmul.mubr.bf16.gmra.mrb[0].mxu0 %v651
  %v863 = vpop.f32.mrb[0].mxu0
  %v864 = vadd.f32 %v767, %v863
  %v865 = vpop.f32.mrb[0].mxu0
  %v866 = vpop.f32.mrb[0].mxu0
  %v867 = vadd.f32 %v770, %v866
  %v868 = vpop.f32.mrb[0].mxu0
  %869 = vdwg.mxu0
  %v870 = vadd.f32 %v500, %v808
  %v871 = vadd.f32 %v501, %v811
  %v872 = vadd.f32 %v502, %v816
  %v873 = vadd.f32 %v503, %v819
  %v874 = vadd.f32 %v504, %v824
  %v875 = vadd.f32 %v505, %v827
  %v876 = vadd.f32 %v506, %v832
  %v877 = vadd.f32 %v507, %v835
  %v878 = vadd.f32 %v508, %v840
  %v879 = vadd.f32 %v509, %v843
  %v880 = vadd.f32 %v510, %v848
  %v881 = vadd.f32 %v511, %v851
  %v882 = vadd.f32 %v512, %v856
  %v883 = vadd.f32 %v513, %v859
  %v884 = vadd.f32 %v514, %v864
  %v885 = vadd.f32 %v515, %v867
  %886 = vst [vmem:[#allocation2] sm:$0xff] %v870
  %887 = vst [vmem:[#allocation2 + $0x8] sm:$0xff] %v871
  %888 = vst [vmem:[#allocation2 + $0x10] sm:$0xff] %v872
  %889 = vst [vmem:[#allocation2 + $0x18] sm:$0xff] %v873
  %890 = vst [vmem:[#allocation2 + $0x20] sm:$0xff] %v874
  %891 = vst [vmem:[#allocation2 + $0x28] sm:$0xff] %v875
  %892 = vst [vmem:[#allocation2 + $0x30] sm:$0xff] %v876
  %893 = vst [vmem:[#allocation2 + $0x38] sm:$0xff] %v877
  %894 = vst [vmem:[#allocation2 + $0x40] sm:$0xff] %v878
  %895 = vst [vmem:[#allocation2 + $0x48] sm:$0xff] %v879
  %896 = vst [vmem:[#allocation2 + $0x50] sm:$0xff] %v880
  %897 = vst [vmem:[#allocation2 + $0x58] sm:$0xff] %v881
  %898 = vst [vmem:[#allocation2 + $0x60] sm:$0xff] %v882
  %899 = vst [vmem:[#allocation2 + $0x68] sm:$0xff] %v883
  %900 = vst [vmem:[#allocation2 + $0x70] sm:$0xff] %v884
  %901 = vst [vmem:[#allocation2 + $0x78] sm:$0xff] %v885
  // Predicated region
  $region30: #{gcn_forward.3} parent=0 // pred_check
    %p902 = pneg %p24
  $region31: #{gcn_forward.3} parent=0 // pred_check_branch
    %904 = sbr.rel (%p902) target = $region33
  $region32: #{gcn_forward.3} parent=0 // pred_region
    %v905 = vld [vmem:[#allocation2] sm:$0xff]
    %v906 = vld [vmem:[#allocation2 + $0x8] sm:$0xff]
    %v907 = vld [vmem:[#allocation2 + $0x10] sm:$0xff]
    %v908 = vld [vmem:[#allocation2 + $0x18] sm:$0xff]
    %v909 = vld [vmem:[#allocation2 + $0x20] sm:$0xff]
    %v910 = vld [vmem:[#allocation2 + $0x28] sm:$0xff]
    %v911 = vld [vmem:[#allocation2 + $0x30] sm:$0xff]
    %v912 = vld [vmem:[#allocation2 + $0x38] sm:$0xff]
    %v913 = vld [vmem:[#allocation2 + $0x40] sm:$0xff]
    %v914 = vld [vmem:[#allocation2 + $0x48] sm:$0xff]
    %v915 = vld [vmem:[#allocation2 + $0x50] sm:$0xff]
    %v916 = vld [vmem:[#allocation2 + $0x58] sm:$0xff]
    %v917 = vld [vmem:[#allocation2 + $0x60] sm:$0xff]
    %v918 = vld [vmem:[#allocation2 + $0x68] sm:$0xff]
    %v919 = vld [vmem:[#allocation2 + $0x70] sm:$0xff]
    %v920 = vld [vmem:[#allocation2 + $0x78] sm:$0xff]
    %v921 = vld [vmem:[%s3] sm:$0xff]
    %v922 = vld [vmem:[%s3 + $0x8] sm:$0xff]
    %v923 = vld [vmem:[%s3 + $0x10] sm:$0xff]
    %v924 = vld [vmem:[%s3 + $0x18] sm:$0xff]
    %v925 = vld [vmem:[%s3 + $0x20] sm:$0xff]
    %v926 = vld [vmem:[%s3 + $0x28] sm:$0xff]
    %v927 = vld [vmem:[%s3 + $0x30] sm:$0xff]
    %v928 = vld [vmem:[%s3 + $0x38] sm:$0xff]
    %v929 = vld [vmem:[%s3 + $0x40] sm:$0xff]
    %v930 = vld [vmem:[%s3 + $0x48] sm:$0xff]
    %v931 = vld [vmem:[%s3 + $0x50] sm:$0xff]
    %v932 = vld [vmem:[%s3 + $0x58] sm:$0xff]
    %v933 = vld [vmem:[%s3 + $0x60] sm:$0xff]
    %v934 = vld [vmem:[%s3 + $0x68] sm:$0xff]
    %v935 = vld [vmem:[%s3 + $0x70] sm:$0xff]
    %v936 = vld [vmem:[%s3 + $0x78] sm:$0xff]
    %938 = vset.pattern.permute.xlu0 0
    %939 = vperm.xlu0 %938, %v921
    %v940 = vpop.permute.xlu0 %939
    %943 = vset.pattern.permute.xlu0 0
    %944 = vperm.xlu0 %943, %v922
    %v945 = vpop.permute.xlu0 %944
    %948 = vset.pattern.permute.xlu0 0
    %949 = vperm.xlu0 %948, %v923
    %v950 = vpop.permute.xlu0 %949
    %953 = vset.pattern.permute.xlu0 0
    %954 = vperm.xlu0 %953, %v924
    %v955 = vpop.permute.xlu0 %954
    %958 = vset.pattern.permute.xlu0 0
    %959 = vperm.xlu0 %958, %v925
    %v960 = vpop.permute.xlu0 %959
    %963 = vset.pattern.permute.xlu0 0
    %964 = vperm.xlu0 %963, %v926
    %v965 = vpop.permute.xlu0 %964
    %968 = vset.pattern.permute.xlu0 0
    %969 = vperm.xlu0 %968, %v927
    %v970 = vpop.permute.xlu0 %969
    %973 = vset.pattern.permute.xlu0 0
    %974 = vperm.xlu0 %973, %v928
    %v975 = vpop.permute.xlu0 %974
    %978 = vset.pattern.permute.xlu0 0
    %979 = vperm.xlu0 %978, %v929
    %v980 = vpop.permute.xlu0 %979
    %983 = vset.pattern.permute.xlu0 0
    %984 = vperm.xlu0 %983, %v930
    %v985 = vpop.permute.xlu0 %984
    %988 = vset.pattern.permute.xlu0 0
    %989 = vperm.xlu0 %988, %v931
    %v990 = vpop.permute.xlu0 %989
    %993 = vset.pattern.permute.xlu0 0
    %994 = vperm.xlu0 %993, %v932
    %v995 = vpop.permute.xlu0 %994
    %998 = vset.pattern.permute.xlu0 0
    %999 = vperm.xlu0 %998, %v933
    %v1000 = vpop.permute.xlu0 %999
    %1003 = vset.pattern.permute.xlu0 0
    %1004 = vperm.xlu0 %1003, %v934
    %v1005 = vpop.permute.xlu0 %1004
    %1008 = vset.pattern.permute.xlu0 0
    %1009 = vperm.xlu0 %1008, %v935
    %v1010 = vpop.permute.xlu0 %1009
    %1013 = vset.pattern.permute.xlu0 0
    %1014 = vperm.xlu0 %1013, %v936
    %v1015 = vpop.permute.xlu0 %1014
    %v1017 = vmul.f32 %v905, %v940
    %v1018 = vmul.f32 %v906, %v945
    %v1019 = vmul.f32 %v907, %v950
    %v1020 = vmul.f32 %v908, %v955
    %v1021 = vmul.f32 %v909, %v960
    %v1022 = vmul.f32 %v910, %v965
    %v1023 = vmul.f32 %v911, %v970
    %v1024 = vmul.f32 %v912, %v975
    %v1025 = vmul.f32 %v913, %v980
    %v1026 = vmul.f32 %v914, %v985
    %v1027 = vmul.f32 %v915, %v990
    %v1028 = vmul.f32 %v916, %v995
    %v1029 = vmul.f32 %v917, %v1000
    %v1030 = vmul.f32 %v918, %v1005
    %v1031 = vmul.f32 %v919, %v1010
    %v1032 = vmul.f32 %v920, %v1015
    %v1033 = vpack.c.bf16 %v1018, %v1017
    %v1034 = vpack.c.bf16 %v1020, %v1019
    %v1035 = vpack.c.bf16 %v1022, %v1021
    %v1036 = vpack.c.bf16 %v1024, %v1023
    %v1037 = vpack.c.bf16 %v1026, %v1025
    %v1038 = vpack.c.bf16 %v1028, %v1027
    %v1039 = vpack.c.bf16 %v1030, %v1029
    %v1040 = vpack.c.bf16 %v1032, %v1031
    %v1041 = vld [vmem:[%s4] sm:$0xf]
    %v1042 = vld [vmem:[%s4 + $0x4] sm:$0xf]
    %v1043 = vld [vmem:[%s4 + $0x8] sm:$0xf]
    %v1044 = vld [vmem:[%s4 + $0xc] sm:$0xf]
    %v1045 = vld [vmem:[%s4 + $0x10] sm:$0xf]
    %v1046 = vld [vmem:[%s4 + $0x14] sm:$0xf]
    %v1047 = vld [vmem:[%s4 + $0x18] sm:$0xf]
    %v1048 = vld [vmem:[%s4 + $0x1c] sm:$0xf]
    %v1049 = vld [vmem:[%s4 + $0x20] sm:$0xf]
    %v1050 = vld [vmem:[%s4 + $0x24] sm:$0xf]
    %v1051 = vld [vmem:[%s4 + $0x28] sm:$0xf]
    %v1052 = vld [vmem:[%s4 + $0x2c] sm:$0xf]
    %v1053 = vld [vmem:[%s4 + $0x30] sm:$0xf]
    %v1054 = vld [vmem:[%s4 + $0x34] sm:$0xf]
    %v1055 = vld [vmem:[%s4 + $0x38] sm:$0xf]
    %v1056 = vld [vmem:[%s4 + $0x3c] sm:$0xf]
    %v1057 = vld [vmem:[%s5] sm:$0x1]
    %v1059 = vlaneseq
    %v1060 = vshrl.u32 %v1059, 7
    %v1061 = vsub.s32 0, %v1060
    %v1062 = vrot.slane %v1057, %v1061
    %v1080 = vunpack.c.l.b16 %v1041
    %v1081 = vunpack.c.l.b16 %v1042
    %v1082 = vunpack.c.l.b16 %v1043
    %v1083 = vunpack.c.l.b16 %v1044
    %v1084 = vunpack.c.l.b16 %v1045
    %v1085 = vunpack.c.l.b16 %v1046
    %v1086 = vunpack.c.l.b16 %v1047
    %v1087 = vunpack.c.l.b16 %v1048
    %v1088 = vunpack.c.l.b16 %v1049
    %v1089 = vunpack.c.l.b16 %v1050
    %v1090 = vunpack.c.l.b16 %v1051
    %v1091 = vunpack.c.l.b16 %v1052
    %v1092 = vunpack.c.l.b16 %v1053
    %v1093 = vunpack.c.l.b16 %v1054
    %v1094 = vunpack.c.l.b16 %v1055
    %v1095 = vunpack.c.l.b16 %v1056
    %v1096 = vpack.c.b16 %v1081, %v1080
    %v1097 = vpack.c.b16 %v1083, %v1082
    %v1098 = vpack.c.b16 %v1085, %v1084
    %v1099 = vpack.c.b16 %v1087, %v1086
    %v1100 = vpack.c.b16 %v1089, %v1088
    %v1101 = vpack.c.b16 %v1091, %v1090
    %v1102 = vpack.c.b16 %v1093, %v1092
    %v1103 = vpack.c.b16 %v1095, %v1094
    %1112 = vmatprep.subr.bf16.mxu0 0
    %1113 = vmatpush1.bf16.msra.mxu0 %v1096
    %1114 = vmatprep.subr.bf16.mxu0 0
    %1115 = vmatpush1.bf16.msra.mxu0 %v1097
    %1116 = vmatprep.subr.bf16.mxu0 0
    %1117 = vmatpush1.bf16.msra.mxu0 %v1098
    %1118 = vmatprep.subr.bf16.mxu0 0
    %1119 = vmatpush1.bf16.msra.mxu0 %v1099
    %1120 = vmatprep.subr.bf16.mxu0 0
    %1121 = vmatpush1.bf16.msra.mxu0 %v1100
    %1122 = vmatprep.subr.bf16.mxu0 0
    %1123 = vmatpush1.bf16.msra.mxu0 %v1101
    %1124 = vmatprep.subr.bf16.mxu0 0
    %1125 = vmatpush1.bf16.msra.mxu0 %v1102
    %1126 = vmatprep.subr.bf16.mxu0 0
    %1127 = vmatpush1.bf16.msra.mxu0 %v1103
    %1128 = vmatprep.subr.bf16.mxu0 0
    %1129 = vmatpush1.bf16.msra.mxu0 0
    %1130 = vmatprep.subr.bf16.mxu0 0
    %1131 = vmatpush1.bf16.msra.mxu0 0
    %1132 = vmatprep.subr.bf16.mxu0 0
    %1133 = vmatpush1.bf16.msra.mxu0 0
    %1134 = vmatprep.subr.bf16.mxu0 0
    %1135 = vmatpush1.bf16.msra.mxu0 0
    %1136 = vmatprep.subr.bf16.mxu0 0
    %1137 = vmatpush1.bf16.msra.mxu0 0
    %1138 = vmatprep.subr.bf16.mxu0 0
    %1139 = vmatpush1.bf16.msra.mxu0 0
    %1140 = vmatprep.subr.bf16.mxu0 0
    %1141 = vmatpush1.bf16.msra.mxu0 0
    %1142 = vmatprep.subr.bf16.mxu0 0
    %1143 = vmatpush1.bf16.msra.mxu0 0
    %1144 = vmatprep.mubr.bf16.mxu0 0
    %1145 = vmatmul.mubr.bf16.gmra.mrb[0].mxu0 %v1033
    %v1146 = vpop.f32.mrb[0].mxu0
    %v1147 = vadd.f32 %v1062, %v1146
    %v1148 = vpop.f32.mrb[0].mxu0
    %v1149 = vpop.f32.mrb[0].mxu0
    %v1150 = vadd.f32 %v1062, %v1149
    %v1151 = vpop.f32.mrb[0].mxu0
    %1152 = vmatprep.mubr.bf16.mxu0 0
    %1153 = vmatmul.mubr.bf16.gmra.mrb[0].mxu0 %v1034
    %v1154 = vpop.f32.mrb[0].mxu0
    %v1155 = vadd.f32 %v1062, %v1154
    %v1156 = vpop.f32.mrb[0].mxu0
    %v1157 = vpop.f32.mrb[0].mxu0
    %v1158 = vadd.f32 %v1062, %v1157
    %v1159 = vpop.f32.mrb[0].mxu0
    %1160 = vmatprep.mubr.bf16.mxu0 0
    %1161 = vmatmul.mubr.bf16.gmra.mrb[0].mxu0 %v1035
    %v1162 = vpop.f32.mrb[0].mxu0
    %v1163 = vadd.f32 %v1062, %v1162
    %v1164 = vpop.f32.mrb[0].mxu0
    %v1165 = vpop.f32.mrb[0].mxu0
    %v1166 = vadd.f32 %v1062, %v1165
    %v1167 = vpop.f32.mrb[0].mxu0
    %1168 = vmatprep.mubr.bf16.mxu0 0
    %1169 = vmatmul.mubr.bf16.gmra.mrb[0].mxu0 %v1036
    %v1170 = vpop.f32.mrb[0].mxu0
    %v1171 = vadd.f32 %v1062, %v1170
    %v1172 = vpop.f32.mrb[0].mxu0
    %v1173 = vpop.f32.mrb[0].mxu0
    %v1174 = vadd.f32 %v1062, %v1173
    %v1175 = vpop.f32.mrb[0].mxu0
    %1176 = vmatprep.mubr.bf16.mxu0 0
    %1177 = vmatmul.mubr.bf16.gmra.mrb[0].mxu0 %v1037
    %v1178 = vpop.f32.mrb[0].mxu0
    %v1179 = vadd.f32 %v1062, %v1178
    %v1180 = vpop.f32.mrb[0].mxu0
    %v1181 = vpop.f32.mrb[0].mxu0
    %v1182 = vadd.f32 %v1062, %v1181
    %v1183 = vpop.f32.mrb[0].mxu0
    %1184 = vmatprep.mubr.bf16.mxu0 0
    %1185 = vmatmul.mubr.bf16.gmra.mrb[0].mxu0 %v1038
    %v1186 = vpop.f32.mrb[0].mxu0
    %v1187 = vadd.f32 %v1062, %v1186
    %v1188 = vpop.f32.mrb[0].mxu0
    %v1189 = vpop.f32.mrb[0].mxu0
    %v1190 = vadd.f32 %v1062, %v1189
    %v1191 = vpop.f32.mrb[0].mxu0
    %1192 = vmatprep.mubr.bf16.mxu0 0
    %1193 = vmatmul.mubr.bf16.gmra.mrb[0].mxu0 %v1039
    %v1194 = vpop.f32.mrb[0].mxu0
    %v1195 = vadd.f32 %v1062, %v1194
    %v1196 = vpop.f32.mrb[0].mxu0
    %v1197 = vpop.f32.mrb[0].mxu0
    %v1198 = vadd.f32 %v1062, %v1197
    %v1199 = vpop.f32.mrb[0].mxu0
    %1200 = vmatprep.mubr.bf16.mxu0 0
    %1201 = vmatmul.mubr.bf16.gmra.mrb[0].mxu0 %v1040
    %v1202 = vpop.f32.mrb[0].mxu0
    %v1203 = vadd.f32 %v1062, %v1202
    %v1204 = vpop.f32.mrb[0].mxu0
    %v1205 = vpop.f32.mrb[0].mxu0
    %v1206 = vadd.f32 %v1062, %v1205
    %v1207 = vpop.f32.mrb[0].mxu0
    %1208 = vdwg.mxu0
    %1209 = vst [vmem:[%s6] sm:$0xff] %v1147
    %1210 = vst [vmem:[%s6 + $0x8] sm:$0xff] %v1150
    %1211 = vst [vmem:[%s6 + $0x10] sm:$0xff] %v1155
    %1212 = vst [vmem:[%s6 + $0x18] sm:$0xff] %v1158
    %1213 = vst [vmem:[%s6 + $0x20] sm:$0xff] %v1163
    %1214 = vst [vmem:[%s6 + $0x28] sm:$0xff] %v1166
    %1215 = vst [vmem:[%s6 + $0x30] sm:$0xff] %v1171
    %1216 = vst [vmem:[%s6 + $0x38] sm:$0xff] %v1174
    %1217 = vst [vmem:[%s6 + $0x40] sm:$0xff] %v1179
    %1218 = vst [vmem:[%s6 + $0x48] sm:$0xff] %v1182
    %1219 = vst [vmem:[%s6 + $0x50] sm:$0xff] %v1187
    %1220 = vst [vmem:[%s6 + $0x58] sm:$0xff] %v1190
    %1221 = vst [vmem:[%s6 + $0x60] sm:$0xff] %v1195
    %1222 = vst [vmem:[%s6 + $0x68] sm:$0xff] %v1198
    %1223 = vst [vmem:[%s6 + $0x70] sm:$0xff] %v1203
    %1224 = vst [vmem:[%s6 + $0x78] sm:$0xff] %v1206
  $region33: #{gcn_forward.3} parent=0 // pred_fallthru
    _
  // Predicated region
  $region34: #{gcn_forward.3} parent=0 // pred_check
    _
  $region35: #{gcn_forward.3} parent=0 // pred_check_branch
    %1226 = sbr.rel (0) target = $region37
  $region36: #{gcn_forward.3} parent=0 // pred_region
    _
  $region37: #{gcn_forward.3} parent=0 // pred_fallthru
    _
  // Predicated region
  $region38: #{gcn_forward.3} parent=0 // pred_check
    _
  $region39: #{gcn_forward.3} parent=0 // pred_check_branch
    %1228 = sbr.rel (0) target = $region41
  $region40: #{gcn_forward.3} parent=0 // pred_region
    _
  $region41: #{gcn_forward.3} parent=0 // pred_fallthru
    _

// kernel: gcn_forward.2
$region0: #{gcn_forward.2}
  #allocation0 [shape = 'u32[]', space=smem, size = 0x4, offset = 0x4, fixed_abs, tag = 'smem constant byte address 0x4 - core index']
  #allocation1 [shape = 'u32[144,128]{1,0:T(1,128)}', space=vmem, size = 0x12000, scoped, tag = 'internal scratch']
  #allocation2 [shape = 'f32[256,128]{1,0:T(8,128)}', space=vmem, size = 0x20000, scoped, tag = 'scratch operand']
  %s0 = inlined_call_operand.vmem [shape: bf16[512,1024], index: 0, kind: input, shape index: {}]
  %s1 = inlined_call_operand.vmem [shape: f32[1024,1], index: 1, kind: input, shape index: {}]
  %s2 = inlined_call_operand.vmem [shape: bf16[1024,128], index: 2, kind: input, shape index: {}]
  %s3 = inlined_call_operand.vmem [shape: f32[512,1], index: 3, kind: input, shape index: {}]
  %s4 = inlined_call_operand.vmem [shape: bf16[128,128], index: 4, kind: input, shape index: {}]
  %s5 = inlined_call_operand.vmem [shape: f32[1,128], index: 5, kind: input, shape index: {}]
  %s6 = inlined_call_operand.vmem [shape: bf16[512,128], index: 6, kind: output, shape index: {}]
  %s7 = sld [smem:[#allocation0]]
  $region88: #{gcn_forward.2} parent=0
    _
  %s9 = ssub.s32 1, %s7
  %s10 = scalar_select 0, %s9, %s7
  $region1: #{gcn_forward.2} parent=0
    #allocation3 [shape = 'u8[524288]{0}', space=vmem, size = 0x80000, scoped, tag = 'input window, operand 0']
    loop: start=0, step=1, limit=6
    $region2: #{gcn_forward.2} parent=1 // loop_pre_header
      _
    $region3: #{gcn_forward.2} parent=1 // loop_header
      %s12 = sphi 0, %s16
      %p13 = scmp.ge.s32.totalorder %s12, 6
      %s19 = sphi 0, %s31
      %s20 = sphi 0, %s27
      %s21 = sphi 0, %s19
      %s22 = sphi 0, %s20
      %s23 = sphi 0, %s21
      %s24 = sphi 0, %s22
      %s36 = sphi 0, %s38
      %s39 = sphi 0, %s36
      %s40 = sphi 0, %s39
      %s56 = sphi 0, %s40
      %s62 = sphi 0, %s64
      %s65 = sphi 0, %s62
      %s66 = sphi 0, %s65
      %s82 = sphi 0, %s66
      %s88 = sphi 0, %s90
      %s91 = sphi 0, %s88
      %s92 = sphi 0, %s91
      %s108 = sphi 0, %s92
      %s114 = sphi 0, %s116
      %s117 = sphi 0, %s114
      %s118 = sphi 0, %s117
      %s134 = sphi 0, %s118
      %s138 = sphi 0, %s138
      %s140 = sphi 0, %s138
      %s141 = sphi 0, %s140
      %s155 = sphi 0, %s141
      %s159 = sphi 0, %s159
      %s161 = sphi 0, %s159
      %s162 = sphi 0, %s161
      %s176 = sphi 0, %s162
      %s182 = sphi 0, %s184
      %s185 = sphi 0, %s182
      %s186 = sphi 0, %s185
      %s202 = sphi 0, %s186
    $region4: #{gcn_forward.2} parent=1 // loop_header_branch
      %15 = sbr.rel (%p13) target = $region8
    $region5: #{gcn_forward.2} parent=1 // loop_body
      %s17 = ssub.s32 %s12, 1
      %s18 = ssub.s32 %s12, 2
      %s25 = sadd.s32 1, %s20
      %p26 = scmp.ge.s32.totalorder %s25, 2
      %s27 = scalar_select %p26, 0, %s25
      %s28 = sadd.s32 1, %s19
      %s29 = scalar_select %p26, %s28, %s19
      %p30 = scmp.ge.s32.totalorder %s29, 2
      %s31 = scalar_select %p30, 0, %s29
      %s32 = ssub.s32 %s19, %s31
      %s33 = ssub.s32 %s20, %s27
      %s34 = sor.u32 %s32, %s33
      %p35 = scmp.eq.s32.totalorder %s34, 0
      %s37 = sadd.s32 %s36, 1
      %s38 = scalar_select %p35, %s36, %s37
      %p41 = pneg %p35
      %p42 = scmp.eq.s32.totalorder %s12, 3
      %p43 = por %p41, %p42
      %p44 = scmp.ne.s32.totalorder %s36, %s39
      %p45 = scmp.eq.s32.totalorder %s12, 0
      %p46 = por %p44, %p45
      %p47 = scmp.ne.s32.totalorder %s36, %s39
      %p48 = scmp.eq.s32.totalorder %s17, 3
      %p49 = por %p47, %p48
      %p50 = scmp.ne.s32.totalorder %s39, %s40
      %p51 = scmp.eq.s32.totalorder %s17, 0
      %p52 = por %p50, %p51
      %p53 = scmp.ne.s32.totalorder %s39, %s40
      %p54 = scmp.eq.s32.totalorder %s18, 3
      %p55 = por %p53, %p54
      %p57 = scmp.ne.s32.totalorder %s40, %s56
      %p58 = scmp.eq.s32.totalorder %s18, 0
      %p59 = por %p57, %p58
      %s60 = ssub.s32 %s20, %s27
      %p61 = scmp.eq.s32.totalorder %s60, 0
      %s63 = sadd.s32 %s62, 1
      %s64 = scalar_select %p61, %s62, %s63
      %p67 = pneg %p61
      %p68 = scmp.eq.s32.totalorder %s12, 3
      %p69 = por %p67, %p68
      %p70 = scmp.ne.s32.totalorder %s62, %s65
      %p71 = scmp.eq.s32.totalorder %s12, 0
      %p72 = por %p70, %p71
      %p73 = scmp.ne.s32.totalorder %s62, %s65
      %p74 = scmp.eq.s32.totalorder %s17, 3
      %p75 = por %p73, %p74
      %p76 = scmp.ne.s32.totalorder %s65, %s66
      %p77 = scmp.eq.s32.totalorder %s17, 0
      %p78 = por %p76, %p77
      %p79 = scmp.ne.s32.totalorder %s65, %s66
      %p80 = scmp.eq.s32.totalorder %s18, 3
      %p81 = por %p79, %p80
      %p83 = scmp.ne.s32.totalorder %s66, %s82
      %p84 = scmp.eq.s32.totalorder %s18, 0
      %p85 = por %p83, %p84
      %s86 = ssub.s32 %s20, %s27
      %p87 = scmp.eq.s32.totalorder %s86, 0
      %s89 = sadd.s32 %s88, 1
      %s90 = scalar_select %p87, %s88, %s89
      %p93 = pneg %p87
      %p94 = scmp.eq.s32.totalorder %s12, 3
      %p95 = por %p93, %p94
      %p96 = scmp.ne.s32.totalorder %s88, %s91
      %p97 = scmp.eq.s32.totalorder %s12, 0
      %p98 = por %p96, %p97
      %p99 = scmp.ne.s32.totalorder %s88, %s91
      %p100 = scmp.eq.s32.totalorder %s17, 3
      %p101 = por %p99, %p100
      %p102 = scmp.ne.s32.totalorder %s91, %s92
      %p103 = scmp.eq.s32.totalorder %s17, 0
      %p104 = por %p102, %p103
      %p105 = scmp.ne.s32.totalorder %s91, %s92
      %p106 = scmp.eq.s32.totalorder %s18, 3
      %p107 = por %p105, %p106
      %p109 = scmp.ne.s32.totalorder %s92, %s108
      %p110 = scmp.eq.s32.totalorder %s18, 0
      %p111 = por %p109, %p110
      %s112 = ssub.s32 %s19, %s31
      %p113 = scmp.eq.s32.totalorder %s112, 0
      %s115 = sadd.s32 %s114, 1
      %s116 = scalar_select %p113, %s114, %s115
      %p119 = pneg %p113
      %p120 = scmp.eq.s32.totalorder %s12, 3
      %p121 = por %p119, %p120
      %p122 = scmp.ne.s32.totalorder %s114, %s117
      %p123 = scmp.eq.s32.totalorder %s12, 0
      %p124 = por %p122, %p123
      %p125 = scmp.ne.s32.totalorder %s114, %s117
      %p126 = scmp.eq.s32.totalorder %s17, 3
      %p127 = por %p125, %p126
      %p128 = scmp.ne.s32.totalorder %s117, %s118
      %p129 = scmp.eq.s32.totalorder %s17, 0
      %p130 = por %p128, %p129
      %p131 = scmp.ne.s32.totalorder %s117, %s118
      %p132 = scmp.eq.s32.totalorder %s18, 3
      %p133 = por %p131, %p132
      %p135 = scmp.ne.s32.totalorder %s118, %s134
      %p136 = scmp.eq.s32.totalorder %s18, 0
      %p137 = por %p135, %p136
      %s139 = sadd.s32 %s138, 1
      %p142 = scmp.eq.s32.totalorder %s12, 3
      %p143 = scmp.ne.s32.totalorder %s138, %s140
      %p144 = scmp.eq.s32.totalorder %s12, 0
      %p145 = por %p143, %p144
      %p146 = scmp.ne.s32.totalorder %s138, %s140
      %p147 = scmp.eq.s32.totalorder %s17, 3
      %p148 = por %p146, %p147
      %p149 = scmp.ne.s32.totalorder %s140, %s141
      %p150 = scmp.eq.s32.totalorder %s17, 0
      %p151 = por %p149, %p150
      %p152 = scmp.ne.s32.totalorder %s140, %s141
      %p153 = scmp.eq.s32.totalorder %s18, 3
      %p154 = por %p152, %p153
      %p156 = scmp.ne.s32.totalorder %s141, %s155
      %p157 = scmp.eq.s32.totalorder %s18, 0
      %p158 = por %p156, %p157
      %s160 = sadd.s32 %s159, 1
      %p163 = scmp.eq.s32.totalorder %s12, 3
      %p164 = scmp.ne.s32.totalorder %s159, %s161
      %p165 = scmp.eq.s32.totalorder %s12, 0
      %p166 = por %p164, %p165
      %p167 = scmp.ne.s32.totalorder %s159, %s161
      %p168 = scmp.eq.s32.totalorder %s17, 3
      %p169 = por %p167, %p168
      %p170 = scmp.ne.s32.totalorder %s161, %s162
      %p171 = scmp.eq.s32.totalorder %s17, 0
      %p172 = por %p170, %p171
      %p173 = scmp.ne.s32.totalorder %s161, %s162
      %p174 = scmp.eq.s32.totalorder %s18, 3
      %p175 = por %p173, %p174
      %p177 = scmp.ne.s32.totalorder %s162, %s176
      %p178 = scmp.eq.s32.totalorder %s18, 0
      %p179 = por %p177, %p178
      %s180 = ssub.s32 %s19, %s31
      %p181 = scmp.eq.s32.totalorder %s180, 0
      %s183 = sadd.s32 %s182, 1
      %s184 = scalar_select %p181, %s182, %s183
      %p187 = pneg %p181
      %p188 = scmp.eq.s32.totalorder %s12, 3
      %p189 = por %p187, %p188
      %p190 = scmp.ne.s32.totalorder %s182, %s185
      %p191 = scmp.eq.s32.totalorder %s12, 0
      %p192 = por %p190, %p191
      %p193 = scmp.ne.s32.totalorder %s182, %s185
      %p194 = scmp.eq.s32.totalorder %s17, 3
      %p195 = por %p193, %p194
      %p196 = scmp.ne.s32.totalorder %s185, %s186
      %p197 = scmp.eq.s32.totalorder %s17, 0
      %p198 = por %p196, %p197
      %p199 = scmp.ne.s32.totalorder %s185, %s186
      %p200 = scmp.eq.s32.totalorder %s18, 3
      %p201 = por %p199, %p200
      %p203 = scmp.ne.s32.totalorder %s186, %s202
      %p204 = scmp.eq.s32.totalorder %s18, 0
      %p205 = por %p203, %p204
      %p206 = scmp.le.s32.totalorder 1, %s12
      %p207 = scmp.lt.s32.totalorder %s12, 5
      %p208 = pnand %p206, %p207
      %p209 = pneg %p208
      // Predicated region
      $region9: #{gcn_forward.2} parent=5 // pred_check
        _
      $region10: #{gcn_forward.2} parent=5 // pred_check_branch
        %211 = sbr.rel (%p208) target = $region12
      $region11: #{gcn_forward.2} parent=5 // pred_region
        %s212 = ssub.s32 %s12, 1
        // Predicated region
        $region13: #{gcn_forward.2} parent=11 // pred_check
          %p213 = pneg %p151
        $region14: #{gcn_forward.2} parent=11 // pred_check_branch
          %215 = sbr.rel (%p213) target = $region16
        $region15: #{gcn_forward.2} parent=11 // pred_region
          _
        $region16: #{gcn_forward.2} parent=11 // pred_fallthru
          _
        // Predicated region
        $region17: #{gcn_forward.2} parent=11 // pred_check
          %p216 = pneg %p172
        $region18: #{gcn_forward.2} parent=11 // pred_check_branch
          %218 = sbr.rel (%p216) target = $region20
        $region19: #{gcn_forward.2} parent=11 // pred_region
          _
        $region20: #{gcn_forward.2} parent=11 // pred_fallthru
          _
      $region12: #{gcn_forward.2} parent=5 // pred_fallthru
        _
      %p219 = scmp.lt.s32.totalorder %s12, 4
      // Predicated region
      $region21: #{gcn_forward.2} parent=5 // pred_check
        %p220 = pneg %p219
      $region22: #{gcn_forward.2} parent=5 // pred_check_branch
        %222 = sbr.rel (%p220) target = $region24
      $region23: #{gcn_forward.2} parent=5 // pred_region
        // Predicated region
        $region25: #{gcn_forward.2} parent=23 // pred_check
          %p223 = pneg %p46
        $region26: #{gcn_forward.2} parent=23 // pred_check_branch
          %225 = sbr.rel (%p223) target = $region28
        $region27: #{gcn_forward.2} parent=23 // pred_region
          %s226 = sand.u32 %s36, 1
          %s227 = sand.u32 %s36, 1
          %s228 = smul.addr %s227, 512
          %s229 = scalar_lea.vmem [#allocation3], %s228
          %s230 = smul.u32 32, %s19
          %s231 = smul.u32 4, %s20
          %s232 = smul.addr %s230, 8
          %s233 = sadd.s32 %s231, %s232
          %s234 = smul.addr %s233, 4
          %s235 = scalar_lea.vmem %s0, %s234
          // Predicated region
          $region29: #{gcn_forward.2} parent=27 // pred_check
            _
          $region30: #{gcn_forward.2} parent=27 // pred_check_branch
            %237 = sbr.rel (0) target = $region32
          $region31: #{gcn_forward.2} parent=27 // pred_region
            // Predicated region
            $region33: #{gcn_forward.2} parent=31 // pred_check
              _
            $region34: #{gcn_forward.2} parent=31 // pred_check_branch
              %239 = sbr.rel (0) target = $region36
            $region35: #{gcn_forward.2} parent=31 // pred_region
              loop: start=0, step=1, limit=1
              $region37: #{gcn_forward.2} parent=35 // loop_pre_header
                _
              $region38: #{gcn_forward.2} parent=35 // loop_header
                %s241 = sphi 0, %s245
                %p242 = scmp.ge.s32.totalorder %s241, 1
                %s246 = sphi %s235, %s235
                %s247 = sphi %s229, %s229
              $region39: #{gcn_forward.2} parent=35 // loop_header_branch
                %244 = sbr.rel (%p242) target = $region43
              $region40: #{gcn_forward.2} parent=35 // loop_body
                %v248 = vld [vmem:[%s246] sm:$0xff]
                %249 = vst [vmem:[%s247] sm:$0xff] %v248
                %v250 = vld [vmem:[%s246 + $0x8] sm:$0xff]
                %251 = vst [vmem:[%s247 + $0x8] sm:$0xff] %v250
                %v252 = vld [vmem:[%s246 + $0x20] sm:$0xff]
                %253 = vst [vmem:[%s247 + $0x10] sm:$0xff] %v252
                %v254 = vld [vmem:[%s246 + $0x28] sm:$0xff]
                %255 = vst [vmem:[%s247 + $0x18] sm:$0xff] %v254
                %v256 = vld [vmem:[%s246 + $0x40] sm:$0xff]
                %257 = vst [vmem:[%s247 + $0x20] sm:$0xff] %v256
                %v258 = vld [vmem:[%s246 + $0x48] sm:$0xff]
                %259 = vst [vmem:[%s247 + $0x28] sm:$0xff] %v258
                %v260 = vld [vmem:[%s246 + $0x60] sm:$0xff]
                %261 = vst [vmem:[%s247 + $0x30] sm:$0xff] %v260
                %v262 = vld [vmem:[%s246 + $0x68] sm:$0xff]
                %263 = vst [vmem:[%s247 + $0x38] sm:$0xff] %v262
                %v264 = vld [vmem:[%s246 + $0x80] sm:$0xff]
                %265 = vst [vmem:[%s247 + $0x40] sm:$0xff] %v264
                %v266 = vld [vmem:[%s246 + $0x88] sm:$0xff]
                %267 = vst [vmem:[%s247 + $0x48] sm:$0xff] %v266
                %v268 = vld [vmem:[%s246 + $0xa0] sm:$0xff]
                %269 = vst [vmem:[%s247 + $0x50] sm:$0xff] %v268
                %v270 = vld [vmem:[%s246 + $0xa8] sm:$0xff]
                %271 = vst [vmem:[%s247 + $0x58] sm:$0xff] %v270
                %v272 = vld [vmem:[%s246 + $0xc0] sm:$0xff]
                %273 = vst [vmem:[%s247 + $0x60] sm:$0xff] %v272
                %v274 = vld [vmem:[%s246 + $0xc8] sm:$0xff]
                %275 = vst [vmem:[%s247 + $0x68] sm:$0xff] %v274
                %v276 = vld [vmem:[%s246 + $0xe0] sm:$0xff]
                %277 = vst [vmem:[%s247 + $0x70] sm:$0xff] %v276
                %v278 = vld [vmem:[%s246 + $0xe8] sm:$0xff]
                %279 = vst [vmem:[%s247 + $0x78] sm:$0xff] %v278
                %v280 = vld [vmem:[%s246 + $0x100] sm:$0xff]
                %281 = vst [vmem:[%s247 + $0x80] sm:$0xff] %v280
                %v282 = vld [vmem:[%s246 + $0x108] sm:$0xff]
                %283 = vst [vmem:[%s247 + $0x88] sm:$0xff] %v282
                %v284 = vld [vmem:[%s246 + $0x120] sm:$0xff]
                %285 = vst [vmem:[%s247 + $0x90] sm:$0xff] %v284
                %v286 = vld [vmem:[%s246 + $0x128] sm:$0xff]
                %287 = vst [vmem:[%s247 + $0x98] sm:$0xff] %v286
                %v288 = vld [vmem:[%s246 + $0x140] sm:$0xff]
                %289 = vst [vmem:[%s247 + $0xa0] sm:$0xff] %v288
                %v290 = vld [vmem:[%s246 + $0x148] sm:$0xff]
                %291 = vst [vmem:[%s247 + $0xa8] sm:$0xff] %v290
                %v292 = vld [vmem:[%s246 + $0x160] sm:$0xff]
                %293 = vst [vmem:[%s247 + $0xb0] sm:$0xff] %v292
                %v294 = vld [vmem:[%s246 + $0x168] sm:$0xff]
                %295 = vst [vmem:[%s247 + $0xb8] sm:$0xff] %v294
                %v296 = vld [vmem:[%s246 + $0x180] sm:$0xff]
                %297 = vst [vmem:[%s247 + $0xc0] sm:$0xff] %v296
                %v298 = vld [vmem:[%s246 + $0x188] sm:$0xff]
                %299 = vst [vmem:[%s247 + $0xc8] sm:$0xff] %v298
                %v300 = vld [vmem:[%s246 + $0x1a0] sm:$0xff]
                %301 = vst [vmem:[%s247 + $0xd0] sm:$0xff] %v300
                %v302 = vld [vmem:[%s246 + $0x1a8] sm:$0xff]
                %303 = vst [vmem:[%s247 + $0xd8] sm:$0xff] %v302
                %v304 = vld [vmem:[%s246 + $0x1c0] sm:$0xff]
                %305 = vst [vmem:[%s247 + $0xe0] sm:$0xff] %v304
                %v306 = vld [vmem:[%s246 + $0x1c8] sm:$0xff]
                %307 = vst [vmem:[%s247 + $0xe8] sm:$0xff] %v306
                %v308 = vld [vmem:[%s246 + $0x1e0] sm:$0xff]
                %309 = vst [vmem:[%s247 + $0xf0] sm:$0xff] %v308
                %v310 = vld [vmem:[%s246 + $0x1e8] sm:$0xff]
                %311 = vst [vmem:[%s247 + $0xf8] sm:$0xff] %v310
                %v312 = vld [vmem:[%s246 + $0x200] sm:$0xff]
                %313 = vst [vmem:[%s247 + $0x100] sm:$0xff] %v312
                %v314 = vld [vmem:[%s246 + $0x208] sm:$0xff]
                %315 = vst [vmem:[%s247 + $0x108] sm:$0xff] %v314
                %v316 = vld [vmem:[%s246 + $0x220] sm:$0xff]
                %317 = vst [vmem:[%s247 + $0x110] sm:$0xff] %v316
                %v318 = vld [vmem:[%s246 + $0x228] sm:$0xff]
                %319 = vst [vmem:[%s247 + $0x118] sm:$0xff] %v318
                %v320 = vld [vmem:[%s246 + $0x240] sm:$0xff]
                %321 = vst [vmem:[%s247 + $0x120] sm:$0xff] %v320
                %v322 = vld [vmem:[%s246 + $0x248] sm:$0xff]
                %323 = vst [vmem:[%s247 + $0x128] sm:$0xff] %v322
                %v324 = vld [vmem:[%s246 + $0x260] sm:$0xff]
                %325 = vst [vmem:[%s247 + $0x130] sm:$0xff] %v324
                %v326 = vld [vmem:[%s246 + $0x268] sm:$0xff]
                %327 = vst [vmem:[%s247 + $0x138] sm:$0xff] %v326
                %v328 = vld [vmem:[%s246 + $0x280] sm:$0xff]
                %329 = vst [vmem:[%s247 + $0x140] sm:$0xff] %v328
                %v330 = vld [vmem:[%s246 + $0x288] sm:$0xff]
                %331 = vst [vmem:[%s247 + $0x148] sm:$0xff] %v330
                %v332 = vld [vmem:[%s246 + $0x2a0] sm:$0xff]
                %333 = vst [vmem:[%s247 + $0x150] sm:$0xff] %v332
                %v334 = vld [vmem:[%s246 + $0x2a8] sm:$0xff]
                %335 = vst [vmem:[%s247 + $0x158] sm:$0xff] %v334
                %v336 = vld [vmem:[%s246 + $0x2c0] sm:$0xff]
                %337 = vst [vmem:[%s247 + $0x160] sm:$0xff] %v336
                %v338 = vld [vmem:[%s246 + $0x2c8] sm:$0xff]
                %339 = vst [vmem:[%s247 + $0x168] sm:$0xff] %v338
                %v340 = vld [vmem:[%s246 + $0x2e0] sm:$0xff]
                %341 = vst [vmem:[%s247 + $0x170] sm:$0xff] %v340
                %v342 = vld [vmem:[%s246 + $0x2e8] sm:$0xff]
                %343 = vst [vmem:[%s247 + $0x178] sm:$0xff] %v342
                %v344 = vld [vmem:[%s246 + $0x300] sm:$0xff]
                %345 = vst [vmem:[%s247 + $0x180] sm:$0xff] %v344
                %v346 = vld [vmem:[%s246 + $0x308] sm:$0xff]
                %347 = vst [vmem:[%s247 + $0x188] sm:$0xff] %v346
                %v348 = vld [vmem:[%s246 + $0x320] sm:$0xff]
                %349 = vst [vmem:[%s247 + $0x190] sm:$0xff] %v348
                %v350 = vld [vmem:[%s246 + $0x328] sm:$0xff]
                %351 = vst [vmem:[%s247 + $0x198] sm:$0xff] %v350
                %v352 = vld [vmem:[%s246 + $0x340] sm:$0xff]
                %353 = vst [vmem:[%s247 + $0x1a0] sm:$0xff] %v352
                %v354 = vld [vmem:[%s246 + $0x348] sm:$0xff]
                %355 = vst [vmem:[%s247 + $0x1a8] sm:$0xff] %v354
                %v356 = vld [vmem:[%s246 + $0x360] sm:$0xff]
                %357 = vst [vmem:[%s247 + $0x1b0] sm:$0xff] %v356
                %v358 = vld [vmem:[%s246 + $0x368] sm:$0xff]
                %359 = vst [vmem:[%s247 + $0x1b8] sm:$0xff] %v358
                %v360 = vld [vmem:[%s246 + $0x380] sm:$0xff]
                %361 = vst [vmem:[%s247 + $0x1c0] sm:$0xff] %v360
                %v362 = vld [vmem:[%s246 + $0x388] sm:$0xff]
                %363 = vst [vmem:[%s247 + $0x1c8] sm:$0xff] %v362
                %v364 = vld [vmem:[%s246 + $0x3a0] sm:$0xff]
                %365 = vst [vmem:[%s247 + $0x1d0] sm:$0xff] %v364
                %v366 = vld [vmem:[%s246 + $0x3a8] sm:$0xff]
                %367 = vst [vmem:[%s247 + $0x1d8] sm:$0xff] %v366
                %v368 = vld [vmem:[%s246 + $0x3c0] sm:$0xff]
                %369 = vst [vmem:[%s247 + $0x1e0] sm:$0xff] %v368
                %v370 = vld [vmem:[%s246 + $0x3c8] sm:$0xff]
                %371 = vst [vmem:[%s247 + $0x1e8] sm:$0xff] %v370
                %v372 = vld [vmem:[%s246 + $0x3e0] sm:$0xff]
                %373 = vst [vmem:[%s247 + $0x1f0] sm:$0xff] %v372
                %v374 = vld [vmem:[%s246 + $0x3e8] sm:$0xff]
                %375 = vst [vmem:[%s247 + $0x1f8] sm:$0xff] %v374
              $region41: #{gcn_forward.2} parent=35 // loop_footer
                %s245 = sadd.s32 1, %s241
              $region42: #{gcn_forward.2} parent=35 // loop_footer_branch
                %240 = sbr.rel target = $region38
              $region43: #{gcn_forward.2} parent=35 // loop_exit
                _
            $region36: #{gcn_forward.2} parent=31 // pred_fallthru
              _
            // Predicated region
            $region44: #{gcn_forward.2} parent=31 // pred_check
              _
            $region45: #{gcn_forward.2} parent=31 // pred_check_branch
              %377 = sbr.rel target = $region47
            $region46: #{gcn_forward.2} parent=31 // pred_region
              _
            $region47: #{gcn_forward.2} parent=31 // pred_fallthru
              _
          $region32: #{gcn_forward.2} parent=27 // pred_fallthru
            _
          %378 = vnop
        $region28: #{gcn_forward.2} parent=23 // pred_fallthru
          _
        // Predicated region
        $region48: #{gcn_forward.2} parent=23 // pred_check
          %p379 = pneg %p72
        $region49: #{gcn_forward.2} parent=23 // pred_check_branch
          %381 = sbr.rel (%p379) target = $region51
        $region50: #{gcn_forward.2} parent=23 // pred_region
          %s382 = smul.u32 64, %s20
          %p383 = scmp.lt.s32.totalorder %s382, 127
          %s384 = scalar_select %p383, %s382, 127
          %s385 = smul.addr %s384, 8
          %s386 = scalar_lea.vmem %s1, %s385
          %s387 = smul.u32 64, %s20
        $region51: #{gcn_forward.2} parent=23 // pred_fallthru
          _
        // Predicated region
        $region52: #{gcn_forward.2} parent=23 // pred_check
          %p388 = pneg %p98
        $region53: #{gcn_forward.2} parent=23 // pred_check_branch
          %390 = sbr.rel (%p388) target = $region55
        $region54: #{gcn_forward.2} parent=23 // pred_region
          %s391 = smul.u32 64, %s20
          %p392 = scmp.lt.s32.totalorder %s391, 127
          %s393 = scalar_select %p392, %s391, 127
          %s394 = smul.addr %s393, 4
          %s395 = scalar_lea.vmem %s2, %s394
          %s396 = smul.u32 64, %s20
        $region55: #{gcn_forward.2} parent=23 // pred_fallthru
          _
        // Predicated region
        $region56: #{gcn_forward.2} parent=23 // pred_check
          %p397 = pneg %p124
        $region57: #{gcn_forward.2} parent=23 // pred_check_branch
          %399 = sbr.rel (%p397) target = $region59
        $region58: #{gcn_forward.2} parent=23 // pred_region
          %s400 = smul.u32 32, %s19
          %p401 = scmp.lt.s32.totalorder %s400, 63
          %s402 = scalar_select %p401, %s400, 63
          %s403 = smul.addr %s402, 8
          %s404 = scalar_lea.vmem %s3, %s403
          %s405 = smul.u32 32, %s19
        $region59: #{gcn_forward.2} parent=23 // pred_fallthru
          _
      $region24: #{gcn_forward.2} parent=5 // pred_fallthru
        _
      %p406 = scmp.le.s32.totalorder 1, %s12
      %p407 = scmp.lt.s32.totalorder %s12, 5
      %p408 = pnand %p406, %p407
      %p409 = pneg %p408
      // Predicated region
      $region60: #{gcn_forward.2} parent=5 // pred_check
        _
      $region61: #{gcn_forward.2} parent=5 // pred_check_branch
        %411 = sbr.rel (%p408) target = $region63
      $region62: #{gcn_forward.2} parent=5 // pred_region
        %s412 = ssub.s32 %s12, 1
        %s413 = sand.u32 %s39, 1
        %s414 = sand.u32 %s39, 1
        %s415 = smul.addr %s414, 512
        %s416 = scalar_lea.vmem [#allocation3], %s415
        // Predicated region
        $region64: #{gcn_forward.2} parent=62 // pred_check
          %p417 = pneg %p52
        $region65: #{gcn_forward.2} parent=62 // pred_check_branch
          %419 = sbr.rel (%p417) target = $region67
        $region66: #{gcn_forward.2} parent=62 // pred_region
          _
        $region67: #{gcn_forward.2} parent=62 // pred_fallthru
          _
        %s420 = sand.u32 %s39, 1
        %s421 = sand.u32 %s39, 1
        %s422 = smul.addr %s421, 512
        %s423 = scalar_lea.vmem [#allocation3], %s422
        %p424 = pneg %p52
        %p425 = pneg %p49
        %s426 = smul.u32 64, %s22
        %p427 = scmp.lt.s32.totalorder %s426, 127
        %s428 = scalar_select %p427, %s426, 127
        %s429 = smul.addr %s428, 8
        %s430 = scalar_lea.vmem %s1, %s429
        %p431 = pneg %p78
        %p432 = pneg %p75
        %s433 = smul.u32 64, %s22
        %p434 = scmp.lt.s32.totalorder %s433, 127
        %s435 = scalar_select %p434, %s433, 127
        %s436 = smul.addr %s435, 4
        %s437 = scalar_lea.vmem %s2, %s436
        %p438 = pneg %p104
        %p439 = pneg %p101
        %s440 = smul.u32 32, %s21
        %p441 = scmp.lt.s32.totalorder %s440, 63
        %s442 = scalar_select %p441, %s440, 63
        %s443 = smul.addr %s442, 8
        %s444 = scalar_lea.vmem %s3, %s443
        %p445 = pneg %p130
        %p446 = pneg %p127
        %p447 = pneg %p151
        %p448 = pneg %p148
        %p449 = pneg %p172
        %p450 = pneg %p169
        %p451 = pneg %p198
        %p452 = pneg %p195
        %s453 = smul.u32 32, %s21
        %p454 = scmp.lt.s32.totalorder %s453, 63
        %s455 = scalar_select %p454, %s453, 63
        %s456 = smul.addr %s455, 4
        %s457 = scalar_lea.vmem %s6, %s456
        %s458 = smul.u32 32, %s21
        %s459 = smul.u32 4, %s22
        %s460 = smul.u32 64, %s22
        %p461 = scmp.lt.s32.totalorder %s460, 127
        %s462 = scalar_select %p461, %s460, 127
        %s463 = smul.addr %s462, 8
        %s464 = scalar_lea.vmem %s1, %s463
        %s465 = smul.u32 64, %s22
        %s466 = smul.u32 64, %s22
        %p467 = scmp.lt.s32.totalorder %s466, 127
        %s468 = scalar_select %p467, %s466, 127
        %s469 = smul.addr %s468, 4
        %s470 = scalar_lea.vmem %s2, %s469
        %s471 = smul.u32 64, %s22
        %s472 = smul.u32 32, %s21
        %p473 = scmp.lt.s32.totalorder %s472, 63
        %s474 = scalar_select %p473, %s472, 63
        %s475 = smul.addr %s474, 8
        %s476 = scalar_lea.vmem %s3, %s475
        %s477 = smul.u32 32, %s21
        %s478 = smul.u32 32, %s21
        %p479 = scmp.lt.s32.totalorder %s478, 63
        %s480 = scalar_select %p479, %s478, 63
        %s481 = smul.addr %s480, 4
        %s482 = scalar_lea.vmem %s6, %s481
        %s483 = smul.u32 32, %s21
        %p485 = scmp.eq.s32.totalorder %s22, 0
        // Predicated region
        $region68: #{gcn_forward.2} parent=62 // pred_check
          %p486 = pneg %p485
        $region69: #{gcn_forward.2} parent=62 // pred_check_branch
          %488 = sbr.rel (%p486) target = $region71
        $region70: #{gcn_forward.2} parent=62 // pred_region
          %489 = vst [vmem:[#allocation2] sm:$0xff] 0.0
          %490 = vst [vmem:[#allocation2 + $0x8] sm:$0xff] 0.0
          %491 = vst [vmem:[#allocation2 + $0x10] sm:$0xff] 0.0
          %492 = vst [vmem:[#allocation2 + $0x18] sm:$0xff] 0.0
          %493 = vst [vmem:[#allocation2 + $0x20] sm:$0xff] 0.0
          %494 = vst [vmem:[#allocation2 + $0x28] sm:$0xff] 0.0
          %495 = vst [vmem:[#allocation2 + $0x30] sm:$0xff] 0.0
          %496 = vst [vmem:[#allocation2 + $0x38] sm:$0xff] 0.0
          %497 = vst [vmem:[#allocation2 + $0x40] sm:$0xff] 0.0
          %498 = vst [vmem:[#allocation2 + $0x48] sm:$0xff] 0.0
          %499 = vst [vmem:[#allocation2 + $0x50] sm:$0xff] 0.0
          %500 = vst [vmem:[#allocation2 + $0x58] sm:$0xff] 0.0
          %501 = vst [vmem:[#allocation2 + $0x60] sm:$0xff] 0.0
          %502 = vst [vmem:[#allocation2 + $0x68] sm:$0xff] 0.0
          %503 = vst [vmem:[#allocation2 + $0x70] sm:$0xff] 0.0
          %504 = vst [vmem:[#allocation2 + $0x78] sm:$0xff] 0.0
          %505 = vst [vmem:[#allocation2 + $0x80] sm:$0xff] 0.0
          %506 = vst [vmem:[#allocation2 + $0x88] sm:$0xff] 0.0
          %507 = vst [vmem:[#allocation2 + $0x90] sm:$0xff] 0.0
          %508 = vst [vmem:[#allocation2 + $0x98] sm:$0xff] 0.0
          %509 = vst [vmem:[#allocation2 + $0xa0] sm:$0xff] 0.0
          %510 = vst [vmem:[#allocation2 + $0xa8] sm:$0xff] 0.0
          %511 = vst [vmem:[#allocation2 + $0xb0] sm:$0xff] 0.0
          %512 = vst [vmem:[#allocation2 + $0xb8] sm:$0xff] 0.0
          %513 = vst [vmem:[#allocation2 + $0xc0] sm:$0xff] 0.0
          %514 = vst [vmem:[#allocation2 + $0xc8] sm:$0xff] 0.0
          %515 = vst [vmem:[#allocation2 + $0xd0] sm:$0xff] 0.0
          %516 = vst [vmem:[#allocation2 + $0xd8] sm:$0xff] 0.0
          %517 = vst [vmem:[#allocation2 + $0xe0] sm:$0xff] 0.0
          %518 = vst [vmem:[#allocation2 + $0xe8] sm:$0xff] 0.0
          %519 = vst [vmem:[#allocation2 + $0xf0] sm:$0xff] 0.0
          %520 = vst [vmem:[#allocation2 + $0xf8] sm:$0xff] 0.0
        $region71: #{gcn_forward.2} parent=62 // pred_fallthru
          _
        %v521 = vld [vmem:[%s470] sm:$0xf]
        %v522 = vld [vmem:[%s470 + $0x4] sm:$0xf]
        %v523 = vld [vmem:[%s470 + $0x8] sm:$0xf]
        %v524 = vld [vmem:[%s470 + $0xc] sm:$0xf]
        %v525 = vld [vmem:[%s470 + $0x10] sm:$0xf]
        %v526 = vld [vmem:[%s470 + $0x14] sm:$0xf]
        %v527 = vld [vmem:[%s470 + $0x18] sm:$0xf]
        %v528 = vld [vmem:[%s470 + $0x1c] sm:$0xf]
        %v529 = vld [vmem:[%s470 + $0x20] sm:$0xf]
        %v530 = vld [vmem:[%s470 + $0x24] sm:$0xf]
        %v531 = vld [vmem:[%s470 + $0x28] sm:$0xf]
        %v532 = vld [vmem:[%s470 + $0x2c] sm:$0xf]
        %v533 = vld [vmem:[%s470 + $0x30] sm:$0xf]
        %v534 = vld [vmem:[%s470 + $0x34] sm:$0xf]
        %v535 = vld [vmem:[%s470 + $0x38] sm:$0xf]
        %v536 = vld [vmem:[%s470 + $0x3c] sm:$0xf]
        %v537 = vld [vmem:[%s470 + $0x40] sm:$0xf]
        %v538 = vld [vmem:[%s470 + $0x44] sm:$0xf]
        %v539 = vld [vmem:[%s470 + $0x48] sm:$0xf]
        %v540 = vld [vmem:[%s470 + $0x4c] sm:$0xf]
        %v541 = vld [vmem:[%s470 + $0x50] sm:$0xf]
        %v542 = vld [vmem:[%s470 + $0x54] sm:$0xf]
        %v543 = vld [vmem:[%s470 + $0x58] sm:$0xf]
        %v544 = vld [vmem:[%s470 + $0x5c] sm:$0xf]
        %v545 = vld [vmem:[%s470 + $0x60] sm:$0xf]
        %v546 = vld [vmem:[%s470 + $0x64] sm:$0xf]
        %v547 = vld [vmem:[%s470 + $0x68] sm:$0xf]
        %v548 = vld [vmem:[%s470 + $0x6c] sm:$0xf]
        %v549 = vld [vmem:[%s470 + $0x70] sm:$0xf]
        %v550 = vld [vmem:[%s470 + $0x74] sm:$0xf]
        %v551 = vld [vmem:[%s470 + $0x78] sm:$0xf]
        %v552 = vld [vmem:[%s470 + $0x7c] sm:$0xf]
        %v553 = vld [vmem:[%s470 + $0x80] sm:$0xf]
        %v554 = vld [vmem:[%s470 + $0x84] sm:$0xf]
        %v555 = vld [vmem:[%s470 + $0x88] sm:$0xf]
        %v556 = vld [vmem:[%s470 + $0x8c] sm:$0xf]
        %v557 = vld [vmem:[%s470 + $0x90] sm:$0xf]
        %v558 = vld [vmem:[%s470 + $0x94] sm:$0xf]
        %v559 = vld [vmem:[%s470 + $0x98] sm:$0xf]
        %v560 = vld [vmem:[%s470 + $0x9c] sm:$0xf]
        %v561 = vld [vmem:[%s470 + $0xa0] sm:$0xf]
        %v562 = vld [vmem:[%s470 + $0xa4] sm:$0xf]
        %v563 = vld [vmem:[%s470 + $0xa8] sm:$0xf]
        %v564 = vld [vmem:[%s470 + $0xac] sm:$0xf]
        %v565 = vld [vmem:[%s470 + $0xb0] sm:$0xf]
        %v566 = vld [vmem:[%s470 + $0xb4] sm:$0xf]
        %v567 = vld [vmem:[%s470 + $0xb8] sm:$0xf]
        %v568 = vld [vmem:[%s470 + $0xbc] sm:$0xf]
        %v569 = vld [vmem:[%s470 + $0xc0] sm:$0xf]
        %v570 = vld [vmem:[%s470 + $0xc4] sm:$0xf]
        %v571 = vld [vmem:[%s470 + $0xc8] sm:$0xf]
        %v572 = vld [vmem:[%s470 + $0xcc] sm:$0xf]
        %v573 = vld [vmem:[%s470 + $0xd0] sm:$0xf]
        %v574 = vld [vmem:[%s470 + $0xd4] sm:$0xf]
        %v575 = vld [vmem:[%s470 + $0xd8] sm:$0xf]
        %v576 = vld [vmem:[%s470 + $0xdc] sm:$0xf]
        %v577 = vld [vmem:[%s470 + $0xe0] sm:$0xf]
        %v578 = vld [vmem:[%s470 + $0xe4] sm:$0xf]
        %v579 = vld [vmem:[%s470 + $0xe8] sm:$0xf]
        %v580 = vld [vmem:[%s470 + $0xec] sm:$0xf]
        %v581 = vld [vmem:[%s470 + $0xf0] sm:$0xf]
        %v582 = vld [vmem:[%s470 + $0xf4] sm:$0xf]
        %v583 = vld [vmem:[%s470 + $0xf8] sm:$0xf]
        %v584 = vld [vmem:[%s470 + $0xfc] sm:$0xf]
        %v585 = vunpack.c.l.bf16 %v521
        %v586 = vunpack.c.l.bf16 %v522
        %v587 = vunpack.c.l.bf16 %v523
        %v588 = vunpack.c.l.bf16 %v524
        %v589 = vunpack.c.l.bf16 %v525
        %v590 = vunpack.c.l.bf16 %v526
        %v591 = vunpack.c.l.bf16 %v527
        %v592 = vunpack.c.l.bf16 %v528
        %v593 = vunpack.c.l.bf16 %v529
        %v594 = vunpack.c.l.bf16 %v530
        %v595 = vunpack.c.l.bf16 %v531
        %v596 = vunpack.c.l.bf16 %v532
        %v597 = vunpack.c.l.bf16 %v533
        %v598 = vunpack.c.l.bf16 %v534
        %v599 = vunpack.c.l.bf16 %v535
        %v600 = vunpack.c.l.bf16 %v536
        %v601 = vunpack.c.l.bf16 %v537
        %v602 = vunpack.c.l.bf16 %v538
        %v603 = vunpack.c.l.bf16 %v539
        %v604 = vunpack.c.l.bf16 %v540
        %v605 = vunpack.c.l.bf16 %v541
        %v606 = vunpack.c.l.bf16 %v542
        %v607 = vunpack.c.l.bf16 %v543
        %v608 = vunpack.c.l.bf16 %v544
        %v609 = vunpack.c.l.bf16 %v545
        %v610 = vunpack.c.l.bf16 %v546
        %v611 = vunpack.c.l.bf16 %v547
        %v612 = vunpack.c.l.bf16 %v548
        %v613 = vunpack.c.l.bf16 %v549
        %v614 = vunpack.c.l.bf16 %v550
        %v615 = vunpack.c.l.bf16 %v551
        %v616 = vunpack.c.l.bf16 %v552
        %v617 = vunpack.c.l.bf16 %v553
        %v618 = vunpack.c.l.bf16 %v554
        %v619 = vunpack.c.l.bf16 %v555
        %v620 = vunpack.c.l.bf16 %v556
        %v621 = vunpack.c.l.bf16 %v557
        %v622 = vunpack.c.l.bf16 %v558
        %v623 = vunpack.c.l.bf16 %v559
        %v624 = vunpack.c.l.bf16 %v560
        %v625 = vunpack.c.l.bf16 %v561
        %v626 = vunpack.c.l.bf16 %v562
        %v627 = vunpack.c.l.bf16 %v563
        %v628 = vunpack.c.l.bf16 %v564
        %v629 = vunpack.c.l.bf16 %v565
        %v630 = vunpack.c.l.bf16 %v566
        %v631 = vunpack.c.l.bf16 %v567
        %v632 = vunpack.c.l.bf16 %v568
        %v633 = vunpack.c.l.bf16 %v569
        %v634 = vunpack.c.l.bf16 %v570
        %v635 = vunpack.c.l.bf16 %v571
        %v636 = vunpack.c.l.bf16 %v572
        %v637 = vunpack.c.l.bf16 %v573
        %v638 = vunpack.c.l.bf16 %v574
        %v639 = vunpack.c.l.bf16 %v575
        %v640 = vunpack.c.l.bf16 %v576
        %v641 = vunpack.c.l.bf16 %v577
        %v642 = vunpack.c.l.bf16 %v578
        %v643 = vunpack.c.l.bf16 %v579
        %v644 = vunpack.c.l.bf16 %v580
        %v645 = vunpack.c.l.bf16 %v581
        %v646 = vunpack.c.l.bf16 %v582
        %v647 = vunpack.c.l.bf16 %v583
        %v648 = vunpack.c.l.bf16 %v584
        %v649 = vld [vmem:[%s464] sm:$0xff]
        %v650 = vld [vmem:[%s464 + $0x8] sm:$0xff]
        %v651 = vld [vmem:[%s464 + $0x10] sm:$0xff]
        %v652 = vld [vmem:[%s464 + $0x18] sm:$0xff]
        %v653 = vld [vmem:[%s464 + $0x20] sm:$0xff]
        %v654 = vld [vmem:[%s464 + $0x28] sm:$0xff]
        %v655 = vld [vmem:[%s464 + $0x30] sm:$0xff]
        %v656 = vld [vmem:[%s464 + $0x38] sm:$0xff]
        %v657 = vld [vmem:[%s464 + $0x40] sm:$0xff]
        %v658 = vld [vmem:[%s464 + $0x48] sm:$0xff]
        %v659 = vld [vmem:[%s464 + $0x50] sm:$0xff]
        %v660 = vld [vmem:[%s464 + $0x58] sm:$0xff]
        %v661 = vld [vmem:[%s464 + $0x60] sm:$0xff]
        %v662 = vld [vmem:[%s464 + $0x68] sm:$0xff]
        %v663 = vld [vmem:[%s464 + $0x70] sm:$0xff]
        %v664 = vld [vmem:[%s464 + $0x78] sm:$0xff]
        %v665 = vld [vmem:[%s464 + $0x80] sm:$0xff]
        %v666 = vld [vmem:[%s464 + $0x88] sm:$0xff]
        %v667 = vld [vmem:[%s464 + $0x90] sm:$0xff]
        %v668 = vld [vmem:[%s464 + $0x98] sm:$0xff]
        %v669 = vld [vmem:[%s464 + $0xa0] sm:$0xff]
        %v670 = vld [vmem:[%s464 + $0xa8] sm:$0xff]
        %v671 = vld [vmem:[%s464 + $0xb0] sm:$0xff]
        %v672 = vld [vmem:[%s464 + $0xb8] sm:$0xff]
        %v673 = vld [vmem:[%s464 + $0xc0] sm:$0xff]
        %v674 = vld [vmem:[%s464 + $0xc8] sm:$0xff]
        %v675 = vld [vmem:[%s464 + $0xd0] sm:$0xff]
        %v676 = vld [vmem:[%s464 + $0xd8] sm:$0xff]
        %v677 = vld [vmem:[%s464 + $0xe0] sm:$0xff]
        %v678 = vld [vmem:[%s464 + $0xe8] sm:$0xff]
        %v679 = vld [vmem:[%s464 + $0xf0] sm:$0xff]
        %v680 = vld [vmem:[%s464 + $0xf8] sm:$0xff]
        %v681 = vld [vmem:[%s464 + $0x100] sm:$0xff]
        %v682 = vld [vmem:[%s464 + $0x108] sm:$0xff]
        %v683 = vld [vmem:[%s464 + $0x110] sm:$0xff]
        %v684 = vld [vmem:[%s464 + $0x118] sm:$0xff]
        %v685 = vld [vmem:[%s464 + $0x120] sm:$0xff]
        %v686 = vld [vmem:[%s464 + $0x128] sm:$0xff]
        %v687 = vld [vmem:[%s464 + $0x130] sm:$0xff]
        %v688 = vld [vmem:[%s464 + $0x138] sm:$0xff]
        %v689 = vld [vmem:[%s464 + $0x140] sm:$0xff]
        %v690 = vld [vmem:[%s464 + $0x148] sm:$0xff]
        %v691 = vld [vmem:[%s464 + $0x150] sm:$0xff]
        %v692 = vld [vmem:[%s464 + $0x158] sm:$0xff]
        %v693 = vld [vmem:[%s464 + $0x160] sm:$0xff]
        %v694 = vld [vmem:[%s464 + $0x168] sm:$0xff]
        %v695 = vld [vmem:[%s464 + $0x170] sm:$0xff]
        %v696 = vld [vmem:[%s464 + $0x178] sm:$0xff]
        %v697 = vld [vmem:[%s464 + $0x180] sm:$0xff]
        %v698 = vld [vmem:[%s464 + $0x188] sm:$0xff]
        %v699 = vld [vmem:[%s464 + $0x190] sm:$0xff]
        %v700 = vld [vmem:[%s464 + $0x198] sm:$0xff]
        %v701 = vld [vmem:[%s464 + $0x1a0] sm:$0xff]
        %v702 = vld [vmem:[%s464 + $0x1a8] sm:$0xff]
        %v703 = vld [vmem:[%s464 + $0x1b0] sm:$0xff]
        %v704 = vld [vmem:[%s464 + $0x1b8] sm:$0xff]
        %v705 = vld [vmem:[%s464 + $0x1c0] sm:$0xff]
        %v706 = vld [vmem:[%s464 + $0x1c8] sm:$0xff]
        %v707 = vld [vmem:[%s464 + $0x1d0] sm:$0xff]
        %v708 = vld [vmem:[%s464 + $0x1d8] sm:$0xff]
        %v709 = vld [vmem:[%s464 + $0x1e0] sm:$0xff]
        %v710 = vld [vmem:[%s464 + $0x1e8] sm:$0xff]
        %v711 = vld [vmem:[%s464 + $0x1f0] sm:$0xff]
        %v712 = vld [vmem:[%s464 + $0x1f8] sm:$0xff]
        %714 = vset.pattern.permute.xlu0 0
        %715 = vperm.xlu0 %714, %v649
        %v716 = vpop.permute.xlu0 %715
        %719 = vset.pattern.permute.xlu0 0
        %720 = vperm.xlu0 %719, %v650
        %v721 = vpop.permute.xlu0 %720
        %724 = vset.pattern.permute.xlu0 0
        %725 = vperm.xlu0 %724, %v651
        %v726 = vpop.permute.xlu0 %725
        %729 = vset.pattern.permute.xlu0 0
        %730 = vperm.xlu0 %729, %v652
        %v731 = vpop.permute.xlu0 %730
        %734 = vset.pattern.permute.xlu0 0
        %735 = vperm.xlu0 %734, %v653
        %v736 = vpop.permute.xlu0 %735
        %739 = vset.pattern.permute.xlu0 0
        %740 = vperm.xlu0 %739, %v654
        %v741 = vpop.permute.xlu0 %740
        %744 = vset.pattern.permute.xlu0 0
        %745 = vperm.xlu0 %744, %v655
        %v746 = vpop.permute.xlu0 %745
        %749 = vset.pattern.permute.xlu0 0
        %750 = vperm.xlu0 %749, %v656
        %v751 = vpop.permute.xlu0 %750
        %754 = vset.pattern.permute.xlu0 0
        %755 = vperm.xlu0 %754, %v657
        %v756 = vpop.permute.xlu0 %755
        %759 = vset.pattern.permute.xlu0 0
        %760 = vperm.xlu0 %759, %v658
        %v761 = vpop.permute.xlu0 %760
        %764 = vset.pattern.permute.xlu0 0
        %765 = vperm.xlu0 %764, %v659
        %v766 = vpop.permute.xlu0 %765
        %769 = vset.pattern.permute.xlu0 0
        %770 = vperm.xlu0 %769, %v660
        %v771 = vpop.permute.xlu0 %770
        %774 = vset.pattern.permute.xlu0 0
        %775 = vperm.xlu0 %774, %v661
        %v776 = vpop.permute.xlu0 %775
        %779 = vset.pattern.permute.xlu0 0
        %780 = vperm.xlu0 %779, %v662
        %v781 = vpop.permute.xlu0 %780
        %784 = vset.pattern.permute.xlu0 0
        %785 = vperm.xlu0 %784, %v663
        %v786 = vpop.permute.xlu0 %785
        %789 = vset.pattern.permute.xlu0 0
        %790 = vperm.xlu0 %789, %v664
        %v791 = vpop.permute.xlu0 %790
        %794 = vset.pattern.permute.xlu0 0
        %795 = vperm.xlu0 %794, %v665
        %v796 = vpop.permute.xlu0 %795
        %799 = vset.pattern.permute.xlu0 0
        %800 = vperm.xlu0 %799, %v666
        %v801 = vpop.permute.xlu0 %800
        %804 = vset.pattern.permute.xlu0 0
        %805 = vperm.xlu0 %804, %v667
        %v806 = vpop.permute.xlu0 %805
        %809 = vset.pattern.permute.xlu0 0
        %810 = vperm.xlu0 %809, %v668
        %v811 = vpop.permute.xlu0 %810
        %814 = vset.pattern.permute.xlu0 0
        %815 = vperm.xlu0 %814, %v669
        %v816 = vpop.permute.xlu0 %815
        %819 = vset.pattern.permute.xlu0 0
        %820 = vperm.xlu0 %819, %v670
        %v821 = vpop.permute.xlu0 %820
        %824 = vset.pattern.permute.xlu0 0
        %825 = vperm.xlu0 %824, %v671
        %v826 = vpop.permute.xlu0 %825
        %829 = vset.pattern.permute.xlu0 0
        %830 = vperm.xlu0 %829, %v672
        %v831 = vpop.permute.xlu0 %830
        %834 = vset.pattern.permute.xlu0 0
        %835 = vperm.xlu0 %834, %v673
        %v836 = vpop.permute.xlu0 %835
        %839 = vset.pattern.permute.xlu0 0
        %840 = vperm.xlu0 %839, %v674
        %v841 = vpop.permute.xlu0 %840
        %844 = vset.pattern.permute.xlu0 0
        %845 = vperm.xlu0 %844, %v675
        %v846 = vpop.permute.xlu0 %845
        %849 = vset.pattern.permute.xlu0 0
        %850 = vperm.xlu0 %849, %v676
        %v851 = vpop.permute.xlu0 %850
        %854 = vset.pattern.permute.xlu0 0
        %855 = vperm.xlu0 %854, %v677
        %v856 = vpop.permute.xlu0 %855
        %859 = vset.pattern.permute.xlu0 0
        %860 = vperm.xlu0 %859, %v678
        %v861 = vpop.permute.xlu0 %860
        %864 = vset.pattern.permute.xlu0 0
        %865 = vperm.xlu0 %864, %v679
        %v866 = vpop.permute.xlu0 %865
        %869 = vset.pattern.permute.xlu0 0
        %870 = vperm.xlu0 %869, %v680
        %v871 = vpop.permute.xlu0 %870
        %874 = vset.pattern.permute.xlu0 0
        %875 = vperm.xlu0 %874, %v681
        %v876 = vpop.permute.xlu0 %875
        %879 = vset.pattern.permute.xlu0 0
        %880 = vperm.xlu0 %879, %v682
        %v881 = vpop.permute.xlu0 %880
        %884 = vset.pattern.permute.xlu0 0
        %885 = vperm.xlu0 %884, %v683
        %v886 = vpop.permute.xlu0 %885
        %889 = vset.pattern.permute.xlu0 0
        %890 = vperm.xlu0 %889, %v684
        %v891 = vpop.permute.xlu0 %890
        %894 = vset.pattern.permute.xlu0 0
        %895 = vperm.xlu0 %894, %v685
        %v896 = vpop.permute.xlu0 %895
        %899 = vset.pattern.permute.xlu0 0
        %900 = vperm.xlu0 %899, %v686
        %v901 = vpop.permute.xlu0 %900
        %904 = vset.pattern.permute.xlu0 0
        %905 = vperm.xlu0 %904, %v687
        %v906 = vpop.permute.xlu0 %905
        %909 = vset.pattern.permute.xlu0 0
        %910 = vperm.xlu0 %909, %v688
        %v911 = vpop.permute.xlu0 %910
        %914 = vset.pattern.permute.xlu0 0
        %915 = vperm.xlu0 %914, %v689
        %v916 = vpop.permute.xlu0 %915
        %919 = vset.pattern.permute.xlu0 0
        %920 = vperm.xlu0 %919, %v690
        %v921 = vpop.permute.xlu0 %920
        %924 = vset.pattern.permute.xlu0 0
        %925 = vperm.xlu0 %924, %v691
        %v926 = vpop.permute.xlu0 %925
        %929 = vset.pattern.permute.xlu0 0
        %930 = vperm.xlu0 %929, %v692
        %v931 = vpop.permute.xlu0 %930
        %934 = vset.pattern.permute.xlu0 0
        %935 = vperm.xlu0 %934, %v693
        %v936 = vpop.permute.xlu0 %935
        %939 = vset.pattern.permute.xlu0 0
        %940 = vperm.xlu0 %939, %v694
        %v941 = vpop.permute.xlu0 %940
        %944 = vset.pattern.permute.xlu0 0
        %945 = vperm.xlu0 %944, %v695
        %v946 = vpop.permute.xlu0 %945
        %949 = vset.pattern.permute.xlu0 0
        %950 = vperm.xlu0 %949, %v696
        %v951 = vpop.permute.xlu0 %950
        %954 = vset.pattern.permute.xlu0 0
        %955 = vperm.xlu0 %954, %v697
        %v956 = vpop.permute.xlu0 %955
        %959 = vset.pattern.permute.xlu0 0
        %960 = vperm.xlu0 %959, %v698
        %v961 = vpop.permute.xlu0 %960
        %964 = vset.pattern.permute.xlu0 0
        %965 = vperm.xlu0 %964, %v699
        %v966 = vpop.permute.xlu0 %965
        %969 = vset.pattern.permute.xlu0 0
        %970 = vperm.xlu0 %969, %v700
        %v971 = vpop.permute.xlu0 %970
        %974 = vset.pattern.permute.xlu0 0
        %975 = vperm.xlu0 %974, %v701
        %v976 = vpop.permute.xlu0 %975
        %979 = vset.pattern.permute.xlu0 0
        %980 = vperm.xlu0 %979, %v702
        %v981 = vpop.permute.xlu0 %980
        %984 = vset.pattern.permute.xlu0 0
        %985 = vperm.xlu0 %984, %v703
        %v986 = vpop.permute.xlu0 %985
        %989 = vset.pattern.permute.xlu0 0
        %990 = vperm.xlu0 %989, %v704
        %v991 = vpop.permute.xlu0 %990
        %994 = vset.pattern.permute.xlu0 0
        %995 = vperm.xlu0 %994, %v705
        %v996 = vpop.permute.xlu0 %995
        %999 = vset.pattern.permute.xlu0 0
        %1000 = vperm.xlu0 %999, %v706
        %v1001 = vpop.permute.xlu0 %1000
        %1004 = vset.pattern.permute.xlu0 0
        %1005 = vperm.xlu0 %1004, %v707
        %v1006 = vpop.permute.xlu0 %1005
        %1009 = vset.pattern.permute.xlu0 0
        %1010 = vperm.xlu0 %1009, %v708
        %v1011 = vpop.permute.xlu0 %1010
        %1014 = vset.pattern.permute.xlu0 0
        %1015 = vperm.xlu0 %1014, %v709
        %v1016 = vpop.permute.xlu0 %1015
        %1019 = vset.pattern.permute.xlu0 0
        %1020 = vperm.xlu0 %1019, %v710
        %v1021 = vpop.permute.xlu0 %1020
        %1024 = vset.pattern.permute.xlu0 0
        %1025 = vperm.xlu0 %1024, %v711
        %v1026 = vpop.permute.xlu0 %1025
        %1029 = vset.pattern.permute.xlu0 0
        %1030 = vperm.xlu0 %1029, %v712
        %v1031 = vpop.permute.xlu0 %1030
        %v1033 = vmul.f32 %v585, %v716
        %v1034 = vmul.f32 %v586, %v721
        %v1035 = vmul.f32 %v587, %v726
        %v1036 = vmul.f32 %v588, %v731
        %v1037 = vmul.f32 %v589, %v736
        %v1038 = vmul.f32 %v590, %v741
        %v1039 = vmul.f32 %v591, %v746
        %v1040 = vmul.f32 %v592, %v751
        %v1041 = vmul.f32 %v593, %v756
        %v1042 = vmul.f32 %v594, %v761
        %v1043 = vmul.f32 %v595, %v766
        %v1044 = vmul.f32 %v596, %v771
        %v1045 = vmul.f32 %v597, %v776
        %v1046 = vmul.f32 %v598, %v781
        %v1047 = vmul.f32 %v599, %v786
        %v1048 = vmul.f32 %v600, %v791
        %v1049 = vmul.f32 %v601, %v796
        %v1050 = vmul.f32 %v602, %v801
        %v1051 = vmul.f32 %v603, %v806
        %v1052 = vmul.f32 %v604, %v811
        %v1053 = vmul.f32 %v605, %v816
        %v1054 = vmul.f32 %v606, %v821
        %v1055 = vmul.f32 %v607, %v826
        %v1056 = vmul.f32 %v608, %v831
        %v1057 = vmul.f32 %v609, %v836
        %v1058 = vmul.f32 %v610, %v841
        %v1059 = vmul.f32 %v611, %v846
        %v1060 = vmul.f32 %v612, %v851
        %v1061 = vmul.f32 %v613, %v856
        %v1062 = vmul.f32 %v614, %v861
        %v1063 = vmul.f32 %v615, %v866
        %v1064 = vmul.f32 %v616, %v871
        %v1065 = vmul.f32 %v617, %v876
        %v1066 = vmul.f32 %v618, %v881
        %v1067 = vmul.f32 %v619, %v886
        %v1068 = vmul.f32 %v620, %v891
        %v1069 = vmul.f32 %v621, %v896
        %v1070 = vmul.f32 %v622, %v901
        %v1071 = vmul.f32 %v623, %v906
        %v1072 = vmul.f32 %v624, %v911
        %v1073 = vmul.f32 %v625, %v916
        %v1074 = vmul.f32 %v626, %v921
        %v1075 = vmul.f32 %v627, %v926
        %v1076 = vmul.f32 %v628, %v931
        %v1077 = vmul.f32 %v629, %v936
        %v1078 = vmul.f32 %v630, %v941
        %v1079 = vmul.f32 %v631, %v946
        %v1080 = vmul.f32 %v632, %v951
        %v1081 = vmul.f32 %v633, %v956
        %v1082 = vmul.f32 %v634, %v961
        %v1083 = vmul.f32 %v635, %v966
        %v1084 = vmul.f32 %v636, %v971
        %v1085 = vmul.f32 %v637, %v976
        %v1086 = vmul.f32 %v638, %v981
        %v1087 = vmul.f32 %v639, %v986
        %v1088 = vmul.f32 %v640, %v991
        %v1089 = vmul.f32 %v641, %v996
        %v1090 = vmul.f32 %v642, %v1001
        %v1091 = vmul.f32 %v643, %v1006
        %v1092 = vmul.f32 %v644, %v1011
        %v1093 = vmul.f32 %v645, %v1016
        %v1094 = vmul.f32 %v646, %v1021
        %v1095 = vmul.f32 %v647, %v1026
        %v1096 = vmul.f32 %v648, %v1031
        %v1097 = vpack.c.bf16 %v1034, %v1033
        %v1098 = vpack.c.bf16 %v1036, %v1035
        %v1099 = vpack.c.bf16 %v1038, %v1037
        %v1100 = vpack.c.bf16 %v1040, %v1039
        %v1101 = vpack.c.bf16 %v1042, %v1041
        %v1102 = vpack.c.bf16 %v1044, %v1043
        %v1103 = vpack.c.bf16 %v1046, %v1045
        %v1104 = vpack.c.bf16 %v1048, %v1047
        %v1105 = vpack.c.bf16 %v1050, %v1049
        %v1106 = vpack.c.bf16 %v1052, %v1051
        %v1107 = vpack.c.bf16 %v1054, %v1053
        %v1108 = vpack.c.bf16 %v1056, %v1055
        %v1109 = vpack.c.bf16 %v1058, %v1057
        %v1110 = vpack.c.bf16 %v1060, %v1059
        %v1111 = vpack.c.bf16 %v1062, %v1061
        %v1112 = vpack.c.bf16 %v1064, %v1063
        %v1113 = vpack.c.bf16 %v1066, %v1065
        %v1114 = vpack.c.bf16 %v1068, %v1067
        %v1115 = vpack.c.bf16 %v1070, %v1069
        %v1116 = vpack.c.bf16 %v1072, %v1071
        %v1117 = vpack.c.bf16 %v1074, %v1073
        %v1118 = vpack.c.bf16 %v1076, %v1075
        %v1119 = vpack.c.bf16 %v1078, %v1077
        %v1120 = vpack.c.bf16 %v1080, %v1079
        %v1121 = vpack.c.bf16 %v1082, %v1081
        %v1122 = vpack.c.bf16 %v1084, %v1083
        %v1123 = vpack.c.bf16 %v1086, %v1085
        %v1124 = vpack.c.bf16 %v1088, %v1087
        %v1125 = vpack.c.bf16 %v1090, %v1089
        %v1126 = vpack.c.bf16 %v1092, %v1091
        %v1127 = vpack.c.bf16 %v1094, %v1093
        %v1128 = vpack.c.bf16 %v1096, %v1095
        %v1129 = vld [vmem:[#allocation2] sm:$0xff]
        %v1130 = vld [vmem:[#allocation2 + $0x8] sm:$0xff]
        %v1131 = vld [vmem:[#allocation2 + $0x10] sm:$0xff]
        %v1132 = vld [vmem:[#allocation2 + $0x18] sm:$0xff]
        %v1133 = vld [vmem:[#allocation2 + $0x20] sm:$0xff]
        %v1134 = vld [vmem:[#allocation2 + $0x28] sm:$0xff]
        %v1135 = vld [vmem:[#allocation2 + $0x30] sm:$0xff]
        %v1136 = vld [vmem:[#allocation2 + $0x38] sm:$0xff]
        %v1137 = vld [vmem:[#allocation2 + $0x40] sm:$0xff]
        %v1138 = vld [vmem:[#allocation2 + $0x48] sm:$0xff]
        %v1139 = vld [vmem:[#allocation2 + $0x50] sm:$0xff]
        %v1140 = vld [vmem:[#allocation2 + $0x58] sm:$0xff]
        %v1141 = vld [vmem:[#allocation2 + $0x60] sm:$0xff]
        %v1142 = vld [vmem:[#allocation2 + $0x68] sm:$0xff]
        %v1143 = vld [vmem:[#allocation2 + $0x70] sm:$0xff]
        %v1144 = vld [vmem:[#allocation2 + $0x78] sm:$0xff]
        %v1145 = vld [vmem:[#allocation2 + $0x80] sm:$0xff]
        %v1146 = vld [vmem:[#allocation2 + $0x88] sm:$0xff]
        %v1147 = vld [vmem:[#allocation2 + $0x90] sm:$0xff]
        %v1148 = vld [vmem:[#allocation2 + $0x98] sm:$0xff]
        %v1149 = vld [vmem:[#allocation2 + $0xa0] sm:$0xff]
        %v1150 = vld [vmem:[#allocation2 + $0xa8] sm:$0xff]
        %v1151 = vld [vmem:[#allocation2 + $0xb0] sm:$0xff]
        %v1152 = vld [vmem:[#allocation2 + $0xb8] sm:$0xff]
        %v1153 = vld [vmem:[#allocation2 + $0xc0] sm:$0xff]
        %v1154 = vld [vmem:[#allocation2 + $0xc8] sm:$0xff]
        %v1155 = vld [vmem:[#allocation2 + $0xd0] sm:$0xff]
        %v1156 = vld [vmem:[#allocation2 + $0xd8] sm:$0xff]
        %v1157 = vld [vmem:[#allocation2 + $0xe0] sm:$0xff]
        %v1158 = vld [vmem:[#allocation2 + $0xe8] sm:$0xff]
        %v1159 = vld [vmem:[#allocation2 + $0xf0] sm:$0xff]
        %v1160 = vld [vmem:[#allocation2 + $0xf8] sm:$0xff]
        %v1161 = vld [vmem:[%s416] sm:$0xff]
        %v1162 = vld [vmem:[%s416 + $0x8] sm:$0xff]
        %v1163 = vld [vmem:[%s416 + $0x10] sm:$0xff]
        %v1164 = vld [vmem:[%s416 + $0x18] sm:$0xff]
        %v1165 = vld [vmem:[%s416 + $0x20] sm:$0xff]
        %v1166 = vld [vmem:[%s416 + $0x28] sm:$0xff]
        %v1167 = vld [vmem:[%s416 + $0x30] sm:$0xff]
        %v1168 = vld [vmem:[%s416 + $0x38] sm:$0xff]
        %v1169 = vld [vmem:[%s416 + $0x40] sm:$0xff]
        %v1170 = vld [vmem:[%s416 + $0x48] sm:$0xff]
        %v1171 = vld [vmem:[%s416 + $0x50] sm:$0xff]
        %v1172 = vld [vmem:[%s416 + $0x58] sm:$0xff]
        %v1173 = vld [vmem:[%s416 + $0x60] sm:$0xff]
        %v1174 = vld [vmem:[%s416 + $0x68] sm:$0xff]
        %v1175 = vld [vmem:[%s416 + $0x70] sm:$0xff]
        %v1176 = vld [vmem:[%s416 + $0x78] sm:$0xff]
        %v1177 = vld [vmem:[%s416 + $0x80] sm:$0xff]
        %v1178 = vld [vmem:[%s416 + $0x88] sm:$0xff]
        %v1179 = vld [vmem:[%s416 + $0x90] sm:$0xff]
        %v1180 = vld [vmem:[%s416 + $0x98] sm:$0xff]
        %v1181 = vld [vmem:[%s416 + $0xa0] sm:$0xff]
        %v1182 = vld [vmem:[%s416 + $0xa8] sm:$0xff]
        %v1183 = vld [vmem:[%s416 + $0xb0] sm:$0xff]
        %v1184 = vld [vmem:[%s416 + $0xb8] sm:$0xff]
        %v1185 = vld [vmem:[%s416 + $0xc0] sm:$0xff]
        %v1186 = vld [vmem:[%s416 + $0xc8] sm:$0xff]
        %v1187 = vld [vmem:[%s416 + $0xd0] sm:$0xff]
        %v1188 = vld [vmem:[%s416 + $0xd8] sm:$0xff]
        %v1189 = vld [vmem:[%s416 + $0xe0] sm:$0xff]
        %v1190 = vld [vmem:[%s416 + $0xe8] sm:$0xff]
        %v1191 = vld [vmem:[%s416 + $0xf0] sm:$0xff]
        %v1192 = vld [vmem:[%s416 + $0xf8] sm:$0xff]
        %v1193 = vld [vmem:[%s416 + $0x100] sm:$0xff]
        %v1194 = vld [vmem:[%s416 + $0x108] sm:$0xff]
        %v1195 = vld [vmem:[%s416 + $0x110] sm:$0xff]
        %v1196 = vld [vmem:[%s416 + $0x118] sm:$0xff]
        %v1197 = vld [vmem:[%s416 + $0x120] sm:$0xff]
        %v1198 = vld [vmem:[%s416 + $0x128] sm:$0xff]
        %v1199 = vld [vmem:[%s416 + $0x130] sm:$0xff]
        %v1200 = vld [vmem:[%s416 + $0x138] sm:$0xff]
        %v1201 = vld [vmem:[%s416 + $0x140] sm:$0xff]
        %v1202 = vld [vmem:[%s416 + $0x148] sm:$0xff]
        %v1203 = vld [vmem:[%s416 + $0x150] sm:$0xff]
        %v1204 = vld [vmem:[%s416 + $0x158] sm:$0xff]
        %v1205 = vld [vmem:[%s416 + $0x160] sm:$0xff]
        %v1206 = vld [vmem:[%s416 + $0x168] sm:$0xff]
        %v1207 = vld [vmem:[%s416 + $0x170] sm:$0xff]
        %v1208 = vld [vmem:[%s416 + $0x178] sm:$0xff]
        %v1209 = vld [vmem:[%s416 + $0x180] sm:$0xff]
        %v1210 = vld [vmem:[%s416 + $0x188] sm:$0xff]
        %v1211 = vld [vmem:[%s416 + $0x190] sm:$0xff]
        %v1212 = vld [vmem:[%s416 + $0x198] sm:$0xff]
        %v1213 = vld [vmem:[%s416 + $0x1a0] sm:$0xff]
        %v1214 = vld [vmem:[%s416 + $0x1a8] sm:$0xff]
        %v1215 = vld [vmem:[%s416 + $0x1b0] sm:$0xff]
        %v1216 = vld [vmem:[%s416 + $0x1b8] sm:$0xff]
        %v1217 = vld [vmem:[%s416 + $0x1c0] sm:$0xff]
        %v1218 = vld [vmem:[%s416 + $0x1c8] sm:$0xff]
        %v1219 = vld [vmem:[%s416 + $0x1d0] sm:$0xff]
        %v1220 = vld [vmem:[%s416 + $0x1d8] sm:$0xff]
        %v1221 = vld [vmem:[%s416 + $0x1e0] sm:$0xff]
        %v1222 = vld [vmem:[%s416 + $0x1e8] sm:$0xff]
        %v1223 = vld [vmem:[%s416 + $0x1f0] sm:$0xff]
        %v1224 = vld [vmem:[%s416 + $0x1f8] sm:$0xff]
        %v1289 = vunpack.c.l.b16 %v1161
        %v1290 = vunpack.c.h.b16 %v1161
        %v1291 = vunpack.c.l.b16 %v1162
        %v1292 = vunpack.c.h.b16 %v1162
        %v1293 = vunpack.c.l.b16 %v1163
        %v1294 = vunpack.c.h.b16 %v1163
        %v1295 = vunpack.c.l.b16 %v1164
        %v1296 = vunpack.c.h.b16 %v1164
        %v1297 = vunpack.c.l.b16 %v1165
        %v1298 = vunpack.c.h.b16 %v1165
        %v1299 = vunpack.c.l.b16 %v1166
        %v1300 = vunpack.c.h.b16 %v1166
        %v1301 = vunpack.c.l.b16 %v1167
        %v1302 = vunpack.c.h.b16 %v1167
        %v1303 = vunpack.c.l.b16 %v1168
        %v1304 = vunpack.c.h.b16 %v1168
        %v1305 = vunpack.c.l.b16 %v1169
        %v1306 = vunpack.c.h.b16 %v1169
        %v1307 = vunpack.c.l.b16 %v1170
        %v1308 = vunpack.c.h.b16 %v1170
        %v1309 = vunpack.c.l.b16 %v1171
        %v1310 = vunpack.c.h.b16 %v1171
        %v1311 = vunpack.c.l.b16 %v1172
        %v1312 = vunpack.c.h.b16 %v1172
        %v1313 = vunpack.c.l.b16 %v1173
        %v1314 = vunpack.c.h.b16 %v1173
        %v1315 = vunpack.c.l.b16 %v1174
        %v1316 = vunpack.c.h.b16 %v1174
        %v1317 = vunpack.c.l.b16 %v1175
        %v1318 = vunpack.c.h.b16 %v1175
        %v1319 = vunpack.c.l.b16 %v1176
        %v1320 = vunpack.c.h.b16 %v1176
        %v1321 = vunpack.c.l.b16 %v1177
        %v1322 = vunpack.c.h.b16 %v1177
        %v1323 = vunpack.c.l.b16 %v1178
        %v1324 = vunpack.c.h.b16 %v1178
        %v1325 = vunpack.c.l.b16 %v1179
        %v1326 = vunpack.c.h.b16 %v1179
        %v1327 = vunpack.c.l.b16 %v1180
        %v1328 = vunpack.c.h.b16 %v1180
        %v1329 = vunpack.c.l.b16 %v1181
        %v1330 = vunpack.c.h.b16 %v1181
        %v1331 = vunpack.c.l.b16 %v1182
        %v1332 = vunpack.c.h.b16 %v1182
        %v1333 = vunpack.c.l.b16 %v1183
        %v1334 = vunpack.c.h.b16 %v1183
        %v1335 = vunpack.c.l.b16 %v1184
        %v1336 = vunpack.c.h.b16 %v1184
        %v1337 = vunpack.c.l.b16 %v1185
        %v1338 = vunpack.c.h.b16 %v1185
        %v1339 = vunpack.c.l.b16 %v1186
        %v1340 = vunpack.c.h.b16 %v1186
        %v1341 = vunpack.c.l.b16 %v1187
        %v1342 = vunpack.c.h.b16 %v1187
        %v1343 = vunpack.c.l.b16 %v1188
        %v1344 = vunpack.c.h.b16 %v1188
        %v1345 = vunpack.c.l.b16 %v1189
        %v1346 = vunpack.c.h.b16 %v1189
        %v1347 = vunpack.c.l.b16 %v1190
        %v1348 = vunpack.c.h.b16 %v1190
        %v1349 = vunpack.c.l.b16 %v1191
        %v1350 = vunpack.c.h.b16 %v1191
        %v1351 = vunpack.c.l.b16 %v1192
        %v1352 = vunpack.c.h.b16 %v1192
        %v1353 = vunpack.c.l.b16 %v1193
        %v1354 = vunpack.c.h.b16 %v1193
        %v1355 = vunpack.c.l.b16 %v1194
        %v1356 = vunpack.c.h.b16 %v1194
        %v1357 = vunpack.c.l.b16 %v1195
        %v1358 = vunpack.c.h.b16 %v1195
        %v1359 = vunpack.c.l.b16 %v1196
        %v1360 = vunpack.c.h.b16 %v1196
        %v1361 = vunpack.c.l.b16 %v1197
        %v1362 = vunpack.c.h.b16 %v1197
        %v1363 = vunpack.c.l.b16 %v1198
        %v1364 = vunpack.c.h.b16 %v1198
        %v1365 = vunpack.c.l.b16 %v1199
        %v1366 = vunpack.c.h.b16 %v1199
        %v1367 = vunpack.c.l.b16 %v1200
        %v1368 = vunpack.c.h.b16 %v1200
        %v1369 = vunpack.c.l.b16 %v1201
        %v1370 = vunpack.c.h.b16 %v1201
        %v1371 = vunpack.c.l.b16 %v1202
        %v1372 = vunpack.c.h.b16 %v1202
        %v1373 = vunpack.c.l.b16 %v1203
        %v1374 = vunpack.c.h.b16 %v1203
        %v1375 = vunpack.c.l.b16 %v1204
        %v1376 = vunpack.c.h.b16 %v1204
        %v1377 = vunpack.c.l.b16 %v1205
        %v1378 = vunpack.c.h.b16 %v1205
        %v1379 = vunpack.c.l.b16 %v1206
        %v1380 = vunpack.c.h.b16 %v1206
        %v1381 = vunpack.c.l.b16 %v1207
        %v1382 = vunpack.c.h.b16 %v1207
        %v1383 = vunpack.c.l.b16 %v1208
        %v1384 = vunpack.c.h.b16 %v1208
        %v1385 = vunpack.c.l.b16 %v1209
        %v1386 = vunpack.c.h.b16 %v1209
        %v1387 = vunpack.c.l.b16 %v1210
        %v1388 = vunpack.c.h.b16 %v1210
        %v1389 = vunpack.c.l.b16 %v1211
        %v1390 = vunpack.c.h.b16 %v1211
        %v1391 = vunpack.c.l.b16 %v1212
        %v1392 = vunpack.c.h.b16 %v1212
        %v1393 = vunpack.c.l.b16 %v1213
        %v1394 = vunpack.c.h.b16 %v1213
        %v1395 = vunpack.c.l.b16 %v1214
        %v1396 = vunpack.c.h.b16 %v1214
        %v1397 = vunpack.c.l.b16 %v1215
        %v1398 = vunpack.c.h.b16 %v1215
        %v1399 = vunpack.c.l.b16 %v1216
        %v1400 = vunpack.c.h.b16 %v1216
        %v1401 = vunpack.c.l.b16 %v1217
        %v1402 = vunpack.c.h.b16 %v1217
        %v1403 = vunpack.c.l.b16 %v1218
        %v1404 = vunpack.c.h.b16 %v1218
        %v1405 = vunpack.c.l.b16 %v1219
        %v1406 = vunpack.c.h.b16 %v1219
        %v1407 = vunpack.c.l.b16 %v1220
        %v1408 = vunpack.c.h.b16 %v1220
        %v1409 = vunpack.c.l.b16 %v1221
        %v1410 = vunpack.c.h.b16 %v1221
        %v1411 = vunpack.c.l.b16 %v1222
        %v1412 = vunpack.c.h.b16 %v1222
        %v1413 = vunpack.c.l.b16 %v1223
        %v1414 = vunpack.c.h.b16 %v1223
        %v1415 = vunpack.c.l.b16 %v1224
        %v1416 = vunpack.c.h.b16 %v1224
        %v1417 = vpack.c.b16 %v1293, %v1289
        %v1418 = vpack.c.b16 %v1294, %v1290
        %v1419 = vpack.c.b16 %v1295, %v1291
        %v1420 = vpack.c.b16 %v1296, %v1292
        %v1421 = vpack.c.b16 %v1301, %v1297
        %v1422 = vpack.c.b16 %v1302, %v1298
        %v1423 = vpack.c.b16 %v1303, %v1299
        %v1424 = vpack.c.b16 %v1304, %v1300
        %v1425 = vpack.c.b16 %v1309, %v1305
        %v1426 = vpack.c.b16 %v1310, %v1306
        %v1427 = vpack.c.b16 %v1311, %v1307
        %v1428 = vpack.c.b16 %v1312, %v1308
        %v1429 = vpack.c.b16 %v1317, %v1313
        %v1430 = vpack.c.b16 %v1318, %v1314
        %v1431 = vpack.c.b16 %v1319, %v1315
        %v1432 = vpack.c.b16 %v1320, %v1316
        %v1433 = vpack.c.b16 %v1325, %v1321
        %v1434 = vpack.c.b16 %v1326, %v1322
        %v1435 = vpack.c.b16 %v1327, %v1323
        %v1436 = vpack.c.b16 %v1328, %v1324
        %v1437 = vpack.c.b16 %v1333, %v1329
        %v1438 = vpack.c.b16 %v1334, %v1330
        %v1439 = vpack.c.b16 %v1335, %v1331
        %v1440 = vpack.c.b16 %v1336, %v1332
        %v1441 = vpack.c.b16 %v1341, %v1337
        %v1442 = vpack.c.b16 %v1342, %v1338
        %v1443 = vpack.c.b16 %v1343, %v1339
        %v1444 = vpack.c.b16 %v1344, %v1340
        %v1445 = vpack.c.b16 %v1349, %v1345
        %v1446 = vpack.c.b16 %v1350, %v1346
        %v1447 = vpack.c.b16 %v1351, %v1347
        %v1448 = vpack.c.b16 %v1352, %v1348
        %v1449 = vpack.c.b16 %v1357, %v1353
        %v1450 = vpack.c.b16 %v1358, %v1354
        %v1451 = vpack.c.b16 %v1359, %v1355
        %v1452 = vpack.c.b16 %v1360, %v1356
        %v1453 = vpack.c.b16 %v1365, %v1361
        %v1454 = vpack.c.b16 %v1366, %v1362
        %v1455 = vpack.c.b16 %v1367, %v1363
        %v1456 = vpack.c.b16 %v1368, %v1364
        %v1457 = vpack.c.b16 %v1373, %v1369
        %v1458 = vpack.c.b16 %v1374, %v1370
        %v1459 = vpack.c.b16 %v1375, %v1371
        %v1460 = vpack.c.b16 %v1376, %v1372
        %v1461 = vpack.c.b16 %v1381, %v1377
        %v1462 = vpack.c.b16 %v1382, %v1378
        %v1463 = vpack.c.b16 %v1383, %v1379
        %v1464 = vpack.c.b16 %v1384, %v1380
        %v1465 = vpack.c.b16 %v1389, %v1385
        %v1466 = vpack.c.b16 %v1390, %v1386
        %v1467 = vpack.c.b16 %v1391, %v1387
        %v1468 = vpack.c.b16 %v1392, %v1388
        %v1469 = vpack.c.b16 %v1397, %v1393
        %v1470 = vpack.c.b16 %v1398, %v1394
        %v1471 = vpack.c.b16 %v1399, %v1395
        %v1472 = vpack.c.b16 %v1400, %v1396
        %v1473 = vpack.c.b16 %v1405, %v1401
        %v1474 = vpack.c.b16 %v1406, %v1402
        %v1475 = vpack.c.b16 %v1407, %v1403
        %v1476 = vpack.c.b16 %v1408, %v1404
        %v1477 = vpack.c.b16 %v1413, %v1409
        %v1478 = vpack.c.b16 %v1414, %v1410
        %v1479 = vpack.c.b16 %v1415, %v1411
        %v1480 = vpack.c.b16 %v1416, %v1412
        %1545 = vmatprep.subr.bf16.mxu0 0
        %1546 = vmatpush1.bf16.msra.mxu0 %v1097
        %1547 = vmatprep.subr.bf16.mxu0 0
        %1548 = vmatpush1.bf16.msra.mxu0 %v1098
        %1549 = vmatprep.subr.bf16.mxu0 0
        %1550 = vmatpush1.bf16.msra.mxu0 %v1099
        %1551 = vmatprep.subr.bf16.mxu0 0
        %1552 = vmatpush1.bf16.msra.mxu0 %v1100
        %1553 = vmatprep.subr.bf16.mxu0 0
        %1554 = vmatpush1.bf16.msra.mxu0 %v1101
        %1555 = vmatprep.subr.bf16.mxu0 0
        %1556 = vmatpush1.bf16.msra.mxu0 %v1102
        %1557 = vmatprep.subr.bf16.mxu0 0
        %1558 = vmatpush1.bf16.msra.mxu0 %v1103
        %1559 = vmatprep.subr.bf16.mxu0 0
        %1560 = vmatpush1.bf16.msra.mxu0 %v1104
        %1561 = vmatprep.subr.bf16.mxu0 0
        %1562 = vmatpush1.bf16.msra.mxu0 %v1105
        %1563 = vmatprep.subr.bf16.mxu0 0
        %1564 = vmatpush1.bf16.msra.mxu0 %v1106
        %1565 = vmatprep.subr.bf16.mxu0 0
        %1566 = vmatpush1.bf16.msra.mxu0 %v1107
        %1567 = vmatprep.subr.bf16.mxu0 0
        %1568 = vmatpush1.bf16.msra.mxu0 %v1108
        %1569 = vmatprep.subr.bf16.mxu0 0
        %1570 = vmatpush1.bf16.msra.mxu0 %v1109
        %1571 = vmatprep.subr.bf16.mxu0 0
        %1572 = vmatpush1.bf16.msra.mxu0 %v1110
        %1573 = vmatprep.subr.bf16.mxu0 0
        %1574 = vmatpush1.bf16.msra.mxu0 %v1111
        %1575 = vmatprep.subr.bf16.mxu0 0
        %1576 = vmatpush1.bf16.msra.mxu0 %v1112
        %1577 = vmatprep.mubr.bf16.mxu0 %v1418
        %1578 = vmatmul.mubr.bf16.gmra.mrb[0].mxu0 %v1417
        %v1579 = vpop.f32.mrb[0].mxu0
        %v1580 = vadd.f32 0.0, %v1579
        %v1581 = vpop.f32.mrb[0].mxu0
        %v1582 = vpop.f32.mrb[0].mxu0
        %v1583 = vadd.f32 0.0, %v1582
        %v1584 = vpop.f32.mrb[0].mxu0
        %1585 = vmatprep.mubr.bf16.mxu0 %v1422
        %1586 = vmatmul.mubr.bf16.gmra.mrb[0].mxu0 %v1421
        %v1587 = vpop.f32.mrb[0].mxu0
        %v1588 = vadd.f32 0.0, %v1587
        %v1589 = vpop.f32.mrb[0].mxu0
        %v1590 = vpop.f32.mrb[0].mxu0
        %v1591 = vadd.f32 0.0, %v1590
        %v1592 = vpop.f32.mrb[0].mxu0
        %1593 = vmatprep.mubr.bf16.mxu0 %v1426
        %1594 = vmatmul.mubr.bf16.gmra.mrb[0].mxu0 %v1425
        %v1595 = vpop.f32.mrb[0].mxu0
        %v1596 = vadd.f32 0.0, %v1595
        %v1597 = vpop.f32.mrb[0].mxu0
        %v1598 = vpop.f32.mrb[0].mxu0
        %v1599 = vadd.f32 0.0, %v1598
        %v1600 = vpop.f32.mrb[0].mxu0
        %1601 = vmatprep.mubr.bf16.mxu0 %v1430
        %1602 = vmatmul.mubr.bf16.gmra.mrb[0].mxu0 %v1429
        %v1603 = vpop.f32.mrb[0].mxu0
        %v1604 = vadd.f32 0.0, %v1603
        %v1605 = vpop.f32.mrb[0].mxu0
        %v1606 = vpop.f32.mrb[0].mxu0
        %v1607 = vadd.f32 0.0, %v1606
        %v1608 = vpop.f32.mrb[0].mxu0
        %1609 = vmatprep.mubr.bf16.mxu0 %v1434
        %1610 = vmatmul.mubr.bf16.gmra.mrb[0].mxu0 %v1433
        %v1611 = vpop.f32.mrb[0].mxu0
        %v1612 = vadd.f32 0.0, %v1611
        %v1613 = vpop.f32.mrb[0].mxu0
        %v1614 = vpop.f32.mrb[0].mxu0
        %v1615 = vadd.f32 0.0, %v1614
        %v1616 = vpop.f32.mrb[0].mxu0
        %1617 = vmatprep.mubr.bf16.mxu0 %v1438
        %1618 = vmatmul.mubr.bf16.gmra.mrb[0].mxu0 %v1437
        %v1619 = vpop.f32.mrb[0].mxu0
        %v1620 = vadd.f32 0.0, %v1619
        %v1621 = vpop.f32.mrb[0].mxu0
        %v1622 = vpop.f32.mrb[0].mxu0
        %v1623 = vadd.f32 0.0, %v1622
        %v1624 = vpop.f32.mrb[0].mxu0
        %1625 = vmatprep.mubr.bf16.mxu0 %v1442
        %1626 = vmatmul.mubr.bf16.gmra.mrb[0].mxu0 %v1441
        %v1627 = vpop.f32.mrb[0].mxu0
        %v1628 = vadd.f32 0.0, %v1627
        %v1629 = vpop.f32.mrb[0].mxu0
        %v1630 = vpop.f32.mrb[0].mxu0
        %v1631 = vadd.f32 0.0, %v1630
        %v1632 = vpop.f32.mrb[0].mxu0
        %1633 = vmatprep.mubr.bf16.mxu0 %v1446
        %1634 = vmatmul.mubr.bf16.gmra.mrb[0].mxu0 %v1445
        %v1635 = vpop.f32.mrb[0].mxu0
        %v1636 = vadd.f32 0.0, %v1635
        %v1637 = vpop.f32.mrb[0].mxu0
        %v1638 = vpop.f32.mrb[0].mxu0
        %v1639 = vadd.f32 0.0, %v1638
        %v1640 = vpop.f32.mrb[0].mxu0
        %1641 = vmatprep.mubr.bf16.mxu0 %v1450
        %1642 = vmatmul.mubr.bf16.gmra.mrb[0].mxu0 %v1449
        %v1643 = vpop.f32.mrb[0].mxu0
        %v1644 = vadd.f32 0.0, %v1643
        %v1645 = vpop.f32.mrb[0].mxu0
        %v1646 = vpop.f32.mrb[0].mxu0
        %v1647 = vadd.f32 0.0, %v1646
        %v1648 = vpop.f32.mrb[0].mxu0
        %1649 = vmatprep.mubr.bf16.mxu0 %v1454
        %1650 = vmatmul.mubr.bf16.gmra.mrb[0].mxu0 %v1453
        %v1651 = vpop.f32.mrb[0].mxu0
        %v1652 = vadd.f32 0.0, %v1651
        %v1653 = vpop.f32.mrb[0].mxu0
        %v1654 = vpop.f32.mrb[0].mxu0
        %v1655 = vadd.f32 0.0, %v1654
        %v1656 = vpop.f32.mrb[0].mxu0
        %1657 = vmatprep.mubr.bf16.mxu0 %v1458
        %1658 = vmatmul.mubr.bf16.gmra.mrb[0].mxu0 %v1457
        %v1659 = vpop.f32.mrb[0].mxu0
        %v1660 = vadd.f32 0.0, %v1659
        %v1661 = vpop.f32.mrb[0].mxu0
        %v1662 = vpop.f32.mrb[0].mxu0
        %v1663 = vadd.f32 0.0, %v1662
        %v1664 = vpop.f32.mrb[0].mxu0
        %1665 = vmatprep.mubr.bf16.mxu0 %v1462
        %1666 = vmatmul.mubr.bf16.gmra.mrb[0].mxu0 %v1461
        %v1667 = vpop.f32.mrb[0].mxu0
        %v1668 = vadd.f32 0.0, %v1667
        %v1669 = vpop.f32.mrb[0].mxu0
        %v1670 = vpop.f32.mrb[0].mxu0
        %v1671 = vadd.f32 0.0, %v1670
        %v1672 = vpop.f32.mrb[0].mxu0
        %1673 = vmatprep.mubr.bf16.mxu0 %v1466
        %1674 = vmatmul.mubr.bf16.gmra.mrb[0].mxu0 %v1465
        %v1675 = vpop.f32.mrb[0].mxu0
        %v1676 = vadd.f32 0.0, %v1675
        %v1677 = vpop.f32.mrb[0].mxu0
        %v1678 = vpop.f32.mrb[0].mxu0
        %v1679 = vadd.f32 0.0, %v1678
        %v1680 = vpop.f32.mrb[0].mxu0
        %1681 = vmatprep.mubr.bf16.mxu0 %v1470
        %1682 = vmatmul.mubr.bf16.gmra.mrb[0].mxu0 %v1469
        %v1683 = vpop.f32.mrb[0].mxu0
        %v1684 = vadd.f32 0.0, %v1683
        %v1685 = vpop.f32.mrb[0].mxu0
        %v1686 = vpop.f32.mrb[0].mxu0
        %v1687 = vadd.f32 0.0, %v1686
        %v1688 = vpop.f32.mrb[0].mxu0
        %1689 = vmatprep.mubr.bf16.mxu0 %v1474
        %1690 = vmatmul.mubr.bf16.gmra.mrb[0].mxu0 %v1473
        %v1691 = vpop.f32.mrb[0].mxu0
        %v1692 = vadd.f32 0.0, %v1691
        %v1693 = vpop.f32.mrb[0].mxu0
        %v1694 = vpop.f32.mrb[0].mxu0
        %v1695 = vadd.f32 0.0, %v1694
        %v1696 = vpop.f32.mrb[0].mxu0
        %1697 = vmatprep.mubr.bf16.mxu0 %v1478
        %1698 = vmatmul.mubr.bf16.gmra.mrb[0].mxu0 %v1477
        %v1699 = vpop.f32.mrb[0].mxu0
        %v1700 = vadd.f32 0.0, %v1699
        %v1701 = vpop.f32.mrb[0].mxu0
        %v1702 = vpop.f32.mrb[0].mxu0
        %v1703 = vadd.f32 0.0, %v1702
        %v1704 = vpop.f32.mrb[0].mxu0
        %1705 = vdwg.mxu0
        %1706 = vmatprep.subr.bf16.mxu0 0
        %1707 = vmatpush1.bf16.msra.mxu0 %v1113
        %1708 = vmatprep.subr.bf16.mxu0 0
        %1709 = vmatpush1.bf16.msra.mxu0 %v1114
        %1710 = vmatprep.subr.bf16.mxu0 0
        %1711 = vmatpush1.bf16.msra.mxu0 %v1115
        %1712 = vmatprep.subr.bf16.mxu0 0
        %1713 = vmatpush1.bf16.msra.mxu0 %v1116
        %1714 = vmatprep.subr.bf16.mxu0 0
        %1715 = vmatpush1.bf16.msra.mxu0 %v1117
        %1716 = vmatprep.subr.bf16.mxu0 0
        %1717 = vmatpush1.bf16.msra.mxu0 %v1118
        %1718 = vmatprep.subr.bf16.mxu0 0
        %1719 = vmatpush1.bf16.msra.mxu0 %v1119
        %1720 = vmatprep.subr.bf16.mxu0 0
        %1721 = vmatpush1.bf16.msra.mxu0 %v1120
        %1722 = vmatprep.subr.bf16.mxu0 0
        %1723 = vmatpush1.bf16.msra.mxu0 %v1121
        %1724 = vmatprep.subr.bf16.mxu0 0
        %1725 = vmatpush1.bf16.msra.mxu0 %v1122
        %1726 = vmatprep.subr.bf16.mxu0 0
        %1727 = vmatpush1.bf16.msra.mxu0 %v1123
        %1728 = vmatprep.subr.bf16.mxu0 0
        %1729 = vmatpush1.bf16.msra.mxu0 %v1124
        %1730 = vmatprep.subr.bf16.mxu0 0
        %1731 = vmatpush1.bf16.msra.mxu0 %v1125
        %1732 = vmatprep.subr.bf16.mxu0 0
        %1733 = vmatpush1.bf16.msra.mxu0 %v1126
        %1734 = vmatprep.subr.bf16.mxu0 0
        %1735 = vmatpush1.bf16.msra.mxu0 %v1127
        %1736 = vmatprep.subr.bf16.mxu0 0
        %1737 = vmatpush1.bf16.msra.mxu0 %v1128
        %1738 = vmatprep.mubr.bf16.mxu0 %v1420
        %1739 = vmatmul.mubr.bf16.gmra.mrb[0].mxu0 %v1419
        %v1740 = vpop.f32.mrb[0].mxu0
        %v1741 = vadd.f32 %v1580, %v1740
        %v1742 = vpop.f32.mrb[0].mxu0
        %v1743 = vpop.f32.mrb[0].mxu0
        %v1744 = vadd.f32 %v1583, %v1743
        %v1745 = vpop.f32.mrb[0].mxu0
        %1746 = vmatprep.mubr.bf16.mxu0 %v1424
        %1747 = vmatmul.mubr.bf16.gmra.mrb[0].mxu0 %v1423
        %v1748 = vpop.f32.mrb[0].mxu0
        %v1749 = vadd.f32 %v1588, %v1748
        %v1750 = vpop.f32.mrb[0].mxu0
        %v1751 = vpop.f32.mrb[0].mxu0
        %v1752 = vadd.f32 %v1591, %v1751
        %v1753 = vpop.f32.mrb[0].mxu0
        %1754 = vmatprep.mubr.bf16.mxu0 %v1428
        %1755 = vmatmul.mubr.bf16.gmra.mrb[0].mxu0 %v1427
        %v1756 = vpop.f32.mrb[0].mxu0
        %v1757 = vadd.f32 %v1596, %v1756
        %v1758 = vpop.f32.mrb[0].mxu0
        %v1759 = vpop.f32.mrb[0].mxu0
        %v1760 = vadd.f32 %v1599, %v1759
        %v1761 = vpop.f32.mrb[0].mxu0
        %1762 = vmatprep.mubr.bf16.mxu0 %v1432
        %1763 = vmatmul.mubr.bf16.gmra.mrb[0].mxu0 %v1431
        %v1764 = vpop.f32.mrb[0].mxu0
        %v1765 = vadd.f32 %v1604, %v1764
        %v1766 = vpop.f32.mrb[0].mxu0
        %v1767 = vpop.f32.mrb[0].mxu0
        %v1768 = vadd.f32 %v1607, %v1767
        %v1769 = vpop.f32.mrb[0].mxu0
        %1770 = vmatprep.mubr.bf16.mxu0 %v1436
        %1771 = vmatmul.mubr.bf16.gmra.mrb[0].mxu0 %v1435
        %v1772 = vpop.f32.mrb[0].mxu0
        %v1773 = vadd.f32 %v1612, %v1772
        %v1774 = vpop.f32.mrb[0].mxu0
        %v1775 = vpop.f32.mrb[0].mxu0
        %v1776 = vadd.f32 %v1615, %v1775
        %v1777 = vpop.f32.mrb[0].mxu0
        %1778 = vmatprep.mubr.bf16.mxu0 %v1440
        %1779 = vmatmul.mubr.bf16.gmra.mrb[0].mxu0 %v1439
        %v1780 = vpop.f32.mrb[0].mxu0
        %v1781 = vadd.f32 %v1620, %v1780
        %v1782 = vpop.f32.mrb[0].mxu0
        %v1783 = vpop.f32.mrb[0].mxu0
        %v1784 = vadd.f32 %v1623, %v1783
        %v1785 = vpop.f32.mrb[0].mxu0
        %1786 = vmatprep.mubr.bf16.mxu0 %v1444
        %1787 = vmatmul.mubr.bf16.gmra.mrb[0].mxu0 %v1443
        %v1788 = vpop.f32.mrb[0].mxu0
        %v1789 = vadd.f32 %v1628, %v1788
        %v1790 = vpop.f32.mrb[0].mxu0
        %v1791 = vpop.f32.mrb[0].mxu0
        %v1792 = vadd.f32 %v1631, %v1791
        %v1793 = vpop.f32.mrb[0].mxu0
        %1794 = vmatprep.mubr.bf16.mxu0 %v1448
        %1795 = vmatmul.mubr.bf16.gmra.mrb[0].mxu0 %v1447
        %v1796 = vpop.f32.mrb[0].mxu0
        %v1797 = vadd.f32 %v1636, %v1796
        %v1798 = vpop.f32.mrb[0].mxu0
        %v1799 = vpop.f32.mrb[0].mxu0
        %v1800 = vadd.f32 %v1639, %v1799
        %v1801 = vpop.f32.mrb[0].mxu0
        %1802 = vmatprep.mubr.bf16.mxu0 %v1452
        %1803 = vmatmul.mubr.bf16.gmra.mrb[0].mxu0 %v1451
        %v1804 = vpop.f32.mrb[0].mxu0
        %v1805 = vadd.f32 %v1644, %v1804
        %v1806 = vpop.f32.mrb[0].mxu0
        %v1807 = vpop.f32.mrb[0].mxu0
        %v1808 = vadd.f32 %v1647, %v1807
        %v1809 = vpop.f32.mrb[0].mxu0
        %1810 = vmatprep.mubr.bf16.mxu0 %v1456
        %1811 = vmatmul.mubr.bf16.gmra.mrb[0].mxu0 %v1455
        %v1812 = vpop.f32.mrb[0].mxu0
        %v1813 = vadd.f32 %v1652, %v1812
        %v1814 = vpop.f32.mrb[0].mxu0
        %v1815 = vpop.f32.mrb[0].mxu0
        %v1816 = vadd.f32 %v1655, %v1815
        %v1817 = vpop.f32.mrb[0].mxu0
        %1818 = vmatprep.mubr.bf16.mxu0 %v1460
        %1819 = vmatmul.mubr.bf16.gmra.mrb[0].mxu0 %v1459
        %v1820 = vpop.f32.mrb[0].mxu0
        %v1821 = vadd.f32 %v1660, %v1820
        %v1822 = vpop.f32.mrb[0].mxu0
        %v1823 = vpop.f32.mrb[0].mxu0
        %v1824 = vadd.f32 %v1663, %v1823
        %v1825 = vpop.f32.mrb[0].mxu0
        %1826 = vmatprep.mubr.bf16.mxu0 %v1464
        %1827 = vmatmul.mubr.bf16.gmra.mrb[0].mxu0 %v1463
        %v1828 = vpop.f32.mrb[0].mxu0
        %v1829 = vadd.f32 %v1668, %v1828
        %v1830 = vpop.f32.mrb[0].mxu0
        %v1831 = vpop.f32.mrb[0].mxu0
        %v1832 = vadd.f32 %v1671, %v1831
        %v1833 = vpop.f32.mrb[0].mxu0
        %1834 = vmatprep.mubr.bf16.mxu0 %v1468
        %1835 = vmatmul.mubr.bf16.gmra.mrb[0].mxu0 %v1467
        %v1836 = vpop.f32.mrb[0].mxu0
        %v1837 = vadd.f32 %v1676, %v1836
        %v1838 = vpop.f32.mrb[0].mxu0
        %v1839 = vpop.f32.mrb[0].mxu0
        %v1840 = vadd.f32 %v1679, %v1839
        %v1841 = vpop.f32.mrb[0].mxu0
        %1842 = vmatprep.mubr.bf16.mxu0 %v1472
        %1843 = vmatmul.mubr.bf16.gmra.mrb[0].mxu0 %v1471
        %v1844 = vpop.f32.mrb[0].mxu0
        %v1845 = vadd.f32 %v1684, %v1844
        %v1846 = vpop.f32.mrb[0].mxu0
        %v1847 = vpop.f32.mrb[0].mxu0
        %v1848 = vadd.f32 %v1687, %v1847
        %v1849 = vpop.f32.mrb[0].mxu0
        %1850 = vmatprep.mubr.bf16.mxu0 %v1476
        %1851 = vmatmul.mubr.bf16.gmra.mrb[0].mxu0 %v1475
        %v1852 = vpop.f32.mrb[0].mxu0
        %v1853 = vadd.f32 %v1692, %v1852
        %v1854 = vpop.f32.mrb[0].mxu0
        %v1855 = vpop.f32.mrb[0].mxu0
        %v1856 = vadd.f32 %v1695, %v1855
        %v1857 = vpop.f32.mrb[0].mxu0
        %1858 = vmatprep.mubr.bf16.mxu0 %v1480
        %1859 = vmatmul.mubr.bf16.gmra.mrb[0].mxu0 %v1479
        %v1860 = vpop.f32.mrb[0].mxu0
        %v1861 = vadd.f32 %v1700, %v1860
        %v1862 = vpop.f32.mrb[0].mxu0
        %v1863 = vpop.f32.mrb[0].mxu0
        %v1864 = vadd.f32 %v1703, %v1863
        %v1865 = vpop.f32.mrb[0].mxu0
        %1866 = vdwg.mxu0
        %v1867 = vadd.f32 %v1129, %v1741
        %v1868 = vadd.f32 %v1130, %v1744
        %v1869 = vadd.f32 %v1131, %v1749
        %v1870 = vadd.f32 %v1132, %v1752
        %v1871 = vadd.f32 %v1133, %v1757
        %v1872 = vadd.f32 %v1134, %v1760
        %v1873 = vadd.f32 %v1135, %v1765
        %v1874 = vadd.f32 %v1136, %v1768
        %v1875 = vadd.f32 %v1137, %v1773
        %v1876 = vadd.f32 %v1138, %v1776
        %v1877 = vadd.f32 %v1139, %v1781
        %v1878 = vadd.f32 %v1140, %v1784
        %v1879 = vadd.f32 %v1141, %v1789
        %v1880 = vadd.f32 %v1142, %v1792
        %v1881 = vadd.f32 %v1143, %v1797
        %v1882 = vadd.f32 %v1144, %v1800
        %v1883 = vadd.f32 %v1145, %v1805
        %v1884 = vadd.f32 %v1146, %v1808
        %v1885 = vadd.f32 %v1147, %v1813
        %v1886 = vadd.f32 %v1148, %v1816
        %v1887 = vadd.f32 %v1149, %v1821
        %v1888 = vadd.f32 %v1150, %v1824
        %v1889 = vadd.f32 %v1151, %v1829
        %v1890 = vadd.f32 %v1152, %v1832
        %v1891 = vadd.f32 %v1153, %v1837
        %v1892 = vadd.f32 %v1154, %v1840
        %v1893 = vadd.f32 %v1155, %v1845
        %v1894 = vadd.f32 %v1156, %v1848
        %v1895 = vadd.f32 %v1157, %v1853
        %v1896 = vadd.f32 %v1158, %v1856
        %v1897 = vadd.f32 %v1159, %v1861
        %v1898 = vadd.f32 %v1160, %v1864
        %1899 = vst [vmem:[#allocation2] sm:$0xff] %v1867
        %1900 = vst [vmem:[#allocation2 + $0x8] sm:$0xff] %v1868
        %1901 = vst [vmem:[#allocation2 + $0x10] sm:$0xff] %v1869
        %1902 = vst [vmem:[#allocation2 + $0x18] sm:$0xff] %v1870
        %1903 = vst [vmem:[#allocation2 + $0x20] sm:$0xff] %v1871
        %1904 = vst [vmem:[#allocation2 + $0x28] sm:$0xff] %v1872
        %1905 = vst [vmem:[#allocation2 + $0x30] sm:$0xff] %v1873
        %1906 = vst [vmem:[#allocation2 + $0x38] sm:$0xff] %v1874
        %1907 = vst [vmem:[#allocation2 + $0x40] sm:$0xff] %v1875
        %1908 = vst [vmem:[#allocation2 + $0x48] sm:$0xff] %v1876
        %1909 = vst [vmem:[#allocation2 + $0x50] sm:$0xff] %v1877
        %1910 = vst [vmem:[#allocation2 + $0x58] sm:$0xff] %v1878
        %1911 = vst [vmem:[#allocation2 + $0x60] sm:$0xff] %v1879
        %1912 = vst [vmem:[#allocation2 + $0x68] sm:$0xff] %v1880
        %1913 = vst [vmem:[#allocation2 + $0x70] sm:$0xff] %v1881
        %1914 = vst [vmem:[#allocation2 + $0x78] sm:$0xff] %v1882
        %1915 = vst [vmem:[#allocation2 + $0x80] sm:$0xff] %v1883
        %1916 = vst [vmem:[#allocation2 + $0x88] sm:$0xff] %v1884
        %1917 = vst [vmem:[#allocation2 + $0x90] sm:$0xff] %v1885
        %1918 = vst [vmem:[#allocation2 + $0x98] sm:$0xff] %v1886
        %1919 = vst [vmem:[#allocation2 + $0xa0] sm:$0xff] %v1887
        %1920 = vst [vmem:[#allocation2 + $0xa8] sm:$0xff] %v1888
        %1921 = vst [vmem:[#allocation2 + $0xb0] sm:$0xff] %v1889
        %1922 = vst [vmem:[#allocation2 + $0xb8] sm:$0xff] %v1890
        %1923 = vst [vmem:[#allocation2 + $0xc0] sm:$0xff] %v1891
        %1924 = vst [vmem:[#allocation2 + $0xc8] sm:$0xff] %v1892
        %1925 = vst [vmem:[#allocation2 + $0xd0] sm:$0xff] %v1893
        %1926 = vst [vmem:[#allocation2 + $0xd8] sm:$0xff] %v1894
        %1927 = vst [vmem:[#allocation2 + $0xe0] sm:$0xff] %v1895
        %1928 = vst [vmem:[#allocation2 + $0xe8] sm:$0xff] %v1896
        %1929 = vst [vmem:[#allocation2 + $0xf0] sm:$0xff] %v1897
        %1930 = vst [vmem:[#allocation2 + $0xf8] sm:$0xff] %v1898
        %p1931 = scmp.eq.s32.totalorder %s22, 1
        // Predicated region
        $region72: #{gcn_forward.2} parent=62 // pred_check
          %p1932 = pneg %p1931
        $region73: #{gcn_forward.2} parent=62 // pred_check_branch
          %1934 = sbr.rel (%p1932) target = $region75
        $region74: #{gcn_forward.2} parent=62 // pred_region
          %v1935 = vld [vmem:[#allocation2] sm:$0xff]
          %v1936 = vld [vmem:[#allocation2 + $0x8] sm:$0xff]
          %v1937 = vld [vmem:[#allocation2 + $0x10] sm:$0xff]
          %v1938 = vld [vmem:[#allocation2 + $0x18] sm:$0xff]
          %v1939 = vld [vmem:[#allocation2 + $0x20] sm:$0xff]
          %v1940 = vld [vmem:[#allocation2 + $0x28] sm:$0xff]
          %v1941 = vld [vmem:[#allocation2 + $0x30] sm:$0xff]
          %v1942 = vld [vmem:[#allocation2 + $0x38] sm:$0xff]
          %v1943 = vld [vmem:[#allocation2 + $0x40] sm:$0xff]
          %v1944 = vld [vmem:[#allocation2 + $0x48] sm:$0xff]
          %v1945 = vld [vmem:[#allocation2 + $0x50] sm:$0xff]
          %v1946 = vld [vmem:[#allocation2 + $0x58] sm:$0xff]
          %v1947 = vld [vmem:[#allocation2 + $0x60] sm:$0xff]
          %v1948 = vld [vmem:[#allocation2 + $0x68] sm:$0xff]
          %v1949 = vld [vmem:[#allocation2 + $0x70] sm:$0xff]
          %v1950 = vld [vmem:[#allocation2 + $0x78] sm:$0xff]
          %v1951 = vld [vmem:[#allocation2 + $0x80] sm:$0xff]
          %v1952 = vld [vmem:[#allocation2 + $0x88] sm:$0xff]
          %v1953 = vld [vmem:[#allocation2 + $0x90] sm:$0xff]
          %v1954 = vld [vmem:[#allocation2 + $0x98] sm:$0xff]
          %v1955 = vld [vmem:[#allocation2 + $0xa0] sm:$0xff]
          %v1956 = vld [vmem:[#allocation2 + $0xa8] sm:$0xff]
          %v1957 = vld [vmem:[#allocation2 + $0xb0] sm:$0xff]
          %v1958 = vld [vmem:[#allocation2 + $0xb8] sm:$0xff]
          %v1959 = vld [vmem:[#allocation2 + $0xc0] sm:$0xff]
          %v1960 = vld [vmem:[#allocation2 + $0xc8] sm:$0xff]
          %v1961 = vld [vmem:[#allocation2 + $0xd0] sm:$0xff]
          %v1962 = vld [vmem:[#allocation2 + $0xd8] sm:$0xff]
          %v1963 = vld [vmem:[#allocation2 + $0xe0] sm:$0xff]
          %v1964 = vld [vmem:[#allocation2 + $0xe8] sm:$0xff]
          %v1965 = vld [vmem:[#allocation2 + $0xf0] sm:$0xff]
          %v1966 = vld [vmem:[#allocation2 + $0xf8] sm:$0xff]
          %v1967 = vld [vmem:[%s476] sm:$0xff]
          %v1968 = vld [vmem:[%s476 + $0x8] sm:$0xff]
          %v1969 = vld [vmem:[%s476 + $0x10] sm:$0xff]
          %v1970 = vld [vmem:[%s476 + $0x18] sm:$0xff]
          %v1971 = vld [vmem:[%s476 + $0x20] sm:$0xff]
          %v1972 = vld [vmem:[%s476 + $0x28] sm:$0xff]
          %v1973 = vld [vmem:[%s476 + $0x30] sm:$0xff]
          %v1974 = vld [vmem:[%s476 + $0x38] sm:$0xff]
          %v1975 = vld [vmem:[%s476 + $0x40] sm:$0xff]
          %v1976 = vld [vmem:[%s476 + $0x48] sm:$0xff]
          %v1977 = vld [vmem:[%s476 + $0x50] sm:$0xff]
          %v1978 = vld [vmem:[%s476 + $0x58] sm:$0xff]
          %v1979 = vld [vmem:[%s476 + $0x60] sm:$0xff]
          %v1980 = vld [vmem:[%s476 + $0x68] sm:$0xff]
          %v1981 = vld [vmem:[%s476 + $0x70] sm:$0xff]
          %v1982 = vld [vmem:[%s476 + $0x78] sm:$0xff]
          %v1983 = vld [vmem:[%s476 + $0x80] sm:$0xff]
          %v1984 = vld [vmem:[%s476 + $0x88] sm:$0xff]
          %v1985 = vld [vmem:[%s476 + $0x90] sm:$0xff]
          %v1986 = vld [vmem:[%s476 + $0x98] sm:$0xff]
          %v1987 = vld [vmem:[%s476 + $0xa0] sm:$0xff]
          %v1988 = vld [vmem:[%s476 + $0xa8] sm:$0xff]
          %v1989 = vld [vmem:[%s476 + $0xb0] sm:$0xff]
          %v1990 = vld [vmem:[%s476 + $0xb8] sm:$0xff]
          %v1991 = vld [vmem:[%s476 + $0xc0] sm:$0xff]
          %v1992 = vld [vmem:[%s476 + $0xc8] sm:$0xff]
          %v1993 = vld [vmem:[%s476 + $0xd0] sm:$0xff]
          %v1994 = vld [vmem:[%s476 + $0xd8] sm:$0xff]
          %v1995 = vld [vmem:[%s476 + $0xe0] sm:$0xff]
          %v1996 = vld [vmem:[%s476 + $0xe8] sm:$0xff]
          %v1997 = vld [vmem:[%s476 + $0xf0] sm:$0xff]
          %v1998 = vld [vmem:[%s476 + $0xf8] sm:$0xff]
          %2000 = vset.pattern.permute.xlu0 0
          %2001 = vperm.xlu0 %2000, %v1967
          %v2002 = vpop.permute.xlu0 %2001
          %2005 = vset.pattern.permute.xlu0 0
          %2006 = vperm.xlu0 %2005, %v1968
          %v2007 = vpop.permute.xlu0 %2006
          %2010 = vset.pattern.permute.xlu0 0
          %2011 = vperm.xlu0 %2010, %v1969
          %v2012 = vpop.permute.xlu0 %2011
          %2015 = vset.pattern.permute.xlu0 0
          %2016 = vperm.xlu0 %2015, %v1970
          %v2017 = vpop.permute.xlu0 %2016
          %2020 = vset.pattern.permute.xlu0 0
          %2021 = vperm.xlu0 %2020, %v1971
          %v2022 = vpop.permute.xlu0 %2021
          %2025 = vset.pattern.permute.xlu0 0
          %2026 = vperm.xlu0 %2025, %v1972
          %v2027 = vpop.permute.xlu0 %2026
          %2030 = vset.pattern.permute.xlu0 0
          %2031 = vperm.xlu0 %2030, %v1973
          %v2032 = vpop.permute.xlu0 %2031
          %2035 = vset.pattern.permute.xlu0 0
          %2036 = vperm.xlu0 %2035, %v1974
          %v2037 = vpop.permute.xlu0 %2036
          %2040 = vset.pattern.permute.xlu0 0
          %2041 = vperm.xlu0 %2040, %v1975
          %v2042 = vpop.permute.xlu0 %2041
          %2045 = vset.pattern.permute.xlu0 0
          %2046 = vperm.xlu0 %2045, %v1976
          %v2047 = vpop.permute.xlu0 %2046
          %2050 = vset.pattern.permute.xlu0 0
          %2051 = vperm.xlu0 %2050, %v1977
          %v2052 = vpop.permute.xlu0 %2051
          %2055 = vset.pattern.permute.xlu0 0
          %2056 = vperm.xlu0 %2055, %v1978
          %v2057 = vpop.permute.xlu0 %2056
          %2060 = vset.pattern.permute.xlu0 0
          %2061 = vperm.xlu0 %2060, %v1979
          %v2062 = vpop.permute.xlu0 %2061
          %2065 = vset.pattern.permute.xlu0 0
          %2066 = vperm.xlu0 %2065, %v1980
          %v2067 = vpop.permute.xlu0 %2066
          %2070 = vset.pattern.permute.xlu0 0
          %2071 = vperm.xlu0 %2070, %v1981
          %v2072 = vpop.permute.xlu0 %2071
          %2075 = vset.pattern.permute.xlu0 0
          %2076 = vperm.xlu0 %2075, %v1982
          %v2077 = vpop.permute.xlu0 %2076
          %2080 = vset.pattern.permute.xlu0 0
          %2081 = vperm.xlu0 %2080, %v1983
          %v2082 = vpop.permute.xlu0 %2081
          %2085 = vset.pattern.permute.xlu0 0
          %2086 = vperm.xlu0 %2085, %v1984
          %v2087 = vpop.permute.xlu0 %2086
          %2090 = vset.pattern.permute.xlu0 0
          %2091 = vperm.xlu0 %2090, %v1985
          %v2092 = vpop.permute.xlu0 %2091
          %2095 = vset.pattern.permute.xlu0 0
          %2096 = vperm.xlu0 %2095, %v1986
          %v2097 = vpop.permute.xlu0 %2096
          %2100 = vset.pattern.permute.xlu0 0
          %2101 = vperm.xlu0 %2100, %v1987
          %v2102 = vpop.permute.xlu0 %2101
          %2105 = vset.pattern.permute.xlu0 0
          %2106 = vperm.xlu0 %2105, %v1988
          %v2107 = vpop.permute.xlu0 %2106
          %2110 = vset.pattern.permute.xlu0 0
          %2111 = vperm.xlu0 %2110, %v1989
          %v2112 = vpop.permute.xlu0 %2111
          %2115 = vset.pattern.permute.xlu0 0
          %2116 = vperm.xlu0 %2115, %v1990
          %v2117 = vpop.permute.xlu0 %2116
          %2120 = vset.pattern.permute.xlu0 0
          %2121 = vperm.xlu0 %2120, %v1991
          %v2122 = vpop.permute.xlu0 %2121
          %2125 = vset.pattern.permute.xlu0 0
          %2126 = vperm.xlu0 %2125, %v1992
          %v2127 = vpop.permute.xlu0 %2126
          %2130 = vset.pattern.permute.xlu0 0
          %2131 = vperm.xlu0 %2130, %v1993
          %v2132 = vpop.permute.xlu0 %2131
          %2135 = vset.pattern.permute.xlu0 0
          %2136 = vperm.xlu0 %2135, %v1994
          %v2137 = vpop.permute.xlu0 %2136
          %2140 = vset.pattern.permute.xlu0 0
          %2141 = vperm.xlu0 %2140, %v1995
          %v2142 = vpop.permute.xlu0 %2141
          %2145 = vset.pattern.permute.xlu0 0
          %2146 = vperm.xlu0 %2145, %v1996
          %v2147 = vpop.permute.xlu0 %2146
          %2150 = vset.pattern.permute.xlu0 0
          %2151 = vperm.xlu0 %2150, %v1997
          %v2152 = vpop.permute.xlu0 %2151
          %2155 = vset.pattern.permute.xlu0 0
          %2156 = vperm.xlu0 %2155, %v1998
          %v2157 = vpop.permute.xlu0 %2156
          %v2159 = vmul.f32 %v1935, %v2002
          %v2160 = vmul.f32 %v1936, %v2007
          %v2161 = vmul.f32 %v1937, %v2012
          %v2162 = vmul.f32 %v1938, %v2017
          %v2163 = vmul.f32 %v1939, %v2022
          %v2164 = vmul.f32 %v1940, %v2027
          %v2165 = vmul.f32 %v1941, %v2032
          %v2166 = vmul.f32 %v1942, %v2037
          %v2167 = vmul.f32 %v1943, %v2042
          %v2168 = vmul.f32 %v1944, %v2047
          %v2169 = vmul.f32 %v1945, %v2052
          %v2170 = vmul.f32 %v1946, %v2057
          %v2171 = vmul.f32 %v1947, %v2062
          %v2172 = vmul.f32 %v1948, %v2067
          %v2173 = vmul.f32 %v1949, %v2072
          %v2174 = vmul.f32 %v1950, %v2077
          %v2175 = vmul.f32 %v1951, %v2082
          %v2176 = vmul.f32 %v1952, %v2087
          %v2177 = vmul.f32 %v1953, %v2092
          %v2178 = vmul.f32 %v1954, %v2097
          %v2179 = vmul.f32 %v1955, %v2102
          %v2180 = vmul.f32 %v1956, %v2107
          %v2181 = vmul.f32 %v1957, %v2112
          %v2182 = vmul.f32 %v1958, %v2117
          %v2183 = vmul.f32 %v1959, %v2122
          %v2184 = vmul.f32 %v1960, %v2127
          %v2185 = vmul.f32 %v1961, %v2132
          %v2186 = vmul.f32 %v1962, %v2137
          %v2187 = vmul.f32 %v1963, %v2142
          %v2188 = vmul.f32 %v1964, %v2147
          %v2189 = vmul.f32 %v1965, %v2152
          %v2190 = vmul.f32 %v1966, %v2157
          %v2191 = vpack.c.bf16 %v2160, %v2159
          %v2192 = vpack.c.bf16 %v2162, %v2161
          %v2193 = vpack.c.bf16 %v2164, %v2163
          %v2194 = vpack.c.bf16 %v2166, %v2165
          %v2195 = vpack.c.bf16 %v2168, %v2167
          %v2196 = vpack.c.bf16 %v2170, %v2169
          %v2197 = vpack.c.bf16 %v2172, %v2171
          %v2198 = vpack.c.bf16 %v2174, %v2173
          %v2199 = vpack.c.bf16 %v2176, %v2175
          %v2200 = vpack.c.bf16 %v2178, %v2177
          %v2201 = vpack.c.bf16 %v2180, %v2179
          %v2202 = vpack.c.bf16 %v2182, %v2181
          %v2203 = vpack.c.bf16 %v2184, %v2183
          %v2204 = vpack.c.bf16 %v2186, %v2185
          %v2205 = vpack.c.bf16 %v2188, %v2187
          %v2206 = vpack.c.bf16 %v2190, %v2189
          %v2207 = vld [vmem:[%s4] sm:$0xf]
          %v2208 = vld [vmem:[%s4 + $0x4] sm:$0xf]
          %v2209 = vld [vmem:[%s4 + $0x8] sm:$0xf]
          %v2210 = vld [vmem:[%s4 + $0xc] sm:$0xf]
          %v2211 = vld [vmem:[%s4 + $0x10] sm:$0xf]
          %v2212 = vld [vmem:[%s4 + $0x14] sm:$0xf]
          %v2213 = vld [vmem:[%s4 + $0x18] sm:$0xf]
          %v2214 = vld [vmem:[%s4 + $0x1c] sm:$0xf]
          %v2215 = vld [vmem:[%s4 + $0x20] sm:$0xf]
          %v2216 = vld [vmem:[%s4 + $0x24] sm:$0xf]
          %v2217 = vld [vmem:[%s4 + $0x28] sm:$0xf]
          %v2218 = vld [vmem:[%s4 + $0x2c] sm:$0xf]
          %v2219 = vld [vmem:[%s4 + $0x30] sm:$0xf]
          %v2220 = vld [vmem:[%s4 + $0x34] sm:$0xf]
          %v2221 = vld [vmem:[%s4 + $0x38] sm:$0xf]
          %v2222 = vld [vmem:[%s4 + $0x3c] sm:$0xf]
          %v2223 = vld [vmem:[%s5] sm:$0x1]
          %v2225 = vlaneseq
          %v2226 = vshrl.u32 %v2225, 7
          %v2227 = vsub.s32 0, %v2226
          %v2228 = vrot.slane %v2223, %v2227
          %v2246 = vunpack.c.l.b16 %v2207
          %v2247 = vunpack.c.l.b16 %v2208
          %v2248 = vunpack.c.l.b16 %v2209
          %v2249 = vunpack.c.l.b16 %v2210
          %v2250 = vunpack.c.l.b16 %v2211
          %v2251 = vunpack.c.l.b16 %v2212
          %v2252 = vunpack.c.l.b16 %v2213
          %v2253 = vunpack.c.l.b16 %v2214
          %v2254 = vunpack.c.l.b16 %v2215
          %v2255 = vunpack.c.l.b16 %v2216
          %v2256 = vunpack.c.l.b16 %v2217
          %v2257 = vunpack.c.l.b16 %v2218
          %v2258 = vunpack.c.l.b16 %v2219
          %v2259 = vunpack.c.l.b16 %v2220
          %v2260 = vunpack.c.l.b16 %v2221
          %v2261 = vunpack.c.l.b16 %v2222
          %v2262 = vpack.c.b16 %v2247, %v2246
          %v2263 = vpack.c.b16 %v2249, %v2248
          %v2264 = vpack.c.b16 %v2251, %v2250
          %v2265 = vpack.c.b16 %v2253, %v2252
          %v2266 = vpack.c.b16 %v2255, %v2254
          %v2267 = vpack.c.b16 %v2257, %v2256
          %v2268 = vpack.c.b16 %v2259, %v2258
          %v2269 = vpack.c.b16 %v2261, %v2260
          %2278 = vmatprep.subr.bf16.mxu0 0
          %2279 = vmatpush1.bf16.msra.mxu0 %v2262
          %2280 = vmatprep.subr.bf16.mxu0 0
          %2281 = vmatpush1.bf16.msra.mxu0 %v2263
          %2282 = vmatprep.subr.bf16.mxu0 0
          %2283 = vmatpush1.bf16.msra.mxu0 %v2264
          %2284 = vmatprep.subr.bf16.mxu0 0
          %2285 = vmatpush1.bf16.msra.mxu0 %v2265
          %2286 = vmatprep.subr.bf16.mxu0 0
          %2287 = vmatpush1.bf16.msra.mxu0 %v2266
          %2288 = vmatprep.subr.bf16.mxu0 0
          %2289 = vmatpush1.bf16.msra.mxu0 %v2267
          %2290 = vmatprep.subr.bf16.mxu0 0
          %2291 = vmatpush1.bf16.msra.mxu0 %v2268
          %2292 = vmatprep.subr.bf16.mxu0 0
          %2293 = vmatpush1.bf16.msra.mxu0 %v2269
          %2294 = vmatprep.subr.bf16.mxu0 0
          %2295 = vmatpush1.bf16.msra.mxu0 0
          %2296 = vmatprep.subr.bf16.mxu0 0
          %2297 = vmatpush1.bf16.msra.mxu0 0
          %2298 = vmatprep.subr.bf16.mxu0 0
          %2299 = vmatpush1.bf16.msra.mxu0 0
          %2300 = vmatprep.subr.bf16.mxu0 0
          %2301 = vmatpush1.bf16.msra.mxu0 0
          %2302 = vmatprep.subr.bf16.mxu0 0
          %2303 = vmatpush1.bf16.msra.mxu0 0
          %2304 = vmatprep.subr.bf16.mxu0 0
          %2305 = vmatpush1.bf16.msra.mxu0 0
          %2306 = vmatprep.subr.bf16.mxu0 0
          %2307 = vmatpush1.bf16.msra.mxu0 0
          %2308 = vmatprep.subr.bf16.mxu0 0
          %2309 = vmatpush1.bf16.msra.mxu0 0
          %2310 = vmatprep.mubr.bf16.mxu0 0
          %2311 = vmatmul.mubr.bf16.gmra.mrb[0].mxu0 %v2191
          %v2312 = vpop.f32.mrb[0].mxu0
          %v2313 = vadd.f32 %v2228, %v2312
          %v2314 = vpop.f32.mrb[0].mxu0
          %v2315 = vpop.f32.mrb[0].mxu0
          %v2316 = vadd.f32 %v2228, %v2315
          %v2317 = vpop.f32.mrb[0].mxu0
          %2318 = vmatprep.mubr.bf16.mxu0 0
          %2319 = vmatmul.mubr.bf16.gmra.mrb[0].mxu0 %v2192
          %v2320 = vpop.f32.mrb[0].mxu0
          %v2321 = vadd.f32 %v2228, %v2320
          %v2322 = vpop.f32.mrb[0].mxu0
          %v2323 = vpop.f32.mrb[0].mxu0
          %v2324 = vadd.f32 %v2228, %v2323
          %v2325 = vpop.f32.mrb[0].mxu0
          %2326 = vmatprep.mubr.bf16.mxu0 0
          %2327 = vmatmul.mubr.bf16.gmra.mrb[0].mxu0 %v2193
          %v2328 = vpop.f32.mrb[0].mxu0
          %v2329 = vadd.f32 %v2228, %v2328
          %v2330 = vpop.f32.mrb[0].mxu0
          %v2331 = vpop.f32.mrb[0].mxu0
          %v2332 = vadd.f32 %v2228, %v2331
          %v2333 = vpop.f32.mrb[0].mxu0
          %2334 = vmatprep.mubr.bf16.mxu0 0
          %2335 = vmatmul.mubr.bf16.gmra.mrb[0].mxu0 %v2194
          %v2336 = vpop.f32.mrb[0].mxu0
          %v2337 = vadd.f32 %v2228, %v2336
          %v2338 = vpop.f32.mrb[0].mxu0
          %v2339 = vpop.f32.mrb[0].mxu0
          %v2340 = vadd.f32 %v2228, %v2339
          %v2341 = vpop.f32.mrb[0].mxu0
          %2342 = vmatprep.mubr.bf16.mxu0 0
          %2343 = vmatmul.mubr.bf16.gmra.mrb[0].mxu0 %v2195
          %v2344 = vpop.f32.mrb[0].mxu0
          %v2345 = vadd.f32 %v2228, %v2344
          %v2346 = vpop.f32.mrb[0].mxu0
          %v2347 = vpop.f32.mrb[0].mxu0
          %v2348 = vadd.f32 %v2228, %v2347
          %v2349 = vpop.f32.mrb[0].mxu0
          %2350 = vmatprep.mubr.bf16.mxu0 0
          %2351 = vmatmul.mubr.bf16.gmra.mrb[0].mxu0 %v2196
          %v2352 = vpop.f32.mrb[0].mxu0
          %v2353 = vadd.f32 %v2228, %v2352
          %v2354 = vpop.f32.mrb[0].mxu0
          %v2355 = vpop.f32.mrb[0].mxu0
          %v2356 = vadd.f32 %v2228, %v2355
          %v2357 = vpop.f32.mrb[0].mxu0
          %2358 = vmatprep.mubr.bf16.mxu0 0
          %2359 = vmatmul.mubr.bf16.gmra.mrb[0].mxu0 %v2197
          %v2360 = vpop.f32.mrb[0].mxu0
          %v2361 = vadd.f32 %v2228, %v2360
          %v2362 = vpop.f32.mrb[0].mxu0
          %v2363 = vpop.f32.mrb[0].mxu0
          %v2364 = vadd.f32 %v2228, %v2363
          %v2365 = vpop.f32.mrb[0].mxu0
          %2366 = vmatprep.mubr.bf16.mxu0 0
          %2367 = vmatmul.mubr.bf16.gmra.mrb[0].mxu0 %v2198
          %v2368 = vpop.f32.mrb[0].mxu0
          %v2369 = vadd.f32 %v2228, %v2368
          %v2370 = vpop.f32.mrb[0].mxu0
          %v2371 = vpop.f32.mrb[0].mxu0
          %v2372 = vadd.f32 %v2228, %v2371
          %v2373 = vpop.f32.mrb[0].mxu0
          %2374 = vmatprep.mubr.bf16.mxu0 0
          %2375 = vmatmul.mubr.bf16.gmra.mrb[0].mxu0 %v2199
          %v2376 = vpop.f32.mrb[0].mxu0
          %v2377 = vadd.f32 %v2228, %v2376
          %v2378 = vpop.f32.mrb[0].mxu0
          %v2379 = vpop.f32.mrb[0].mxu0
          %v2380 = vadd.f32 %v2228, %v2379
          %v2381 = vpop.f32.mrb[0].mxu0
          %2382 = vmatprep.mubr.bf16.mxu0 0
          %2383 = vmatmul.mubr.bf16.gmra.mrb[0].mxu0 %v2200
          %v2384 = vpop.f32.mrb[0].mxu0
          %v2385 = vadd.f32 %v2228, %v2384
          %v2386 = vpop.f32.mrb[0].mxu0
          %v2387 = vpop.f32.mrb[0].mxu0
          %v2388 = vadd.f32 %v2228, %v2387
          %v2389 = vpop.f32.mrb[0].mxu0
          %2390 = vmatprep.mubr.bf16.mxu0 0
          %2391 = vmatmul.mubr.bf16.gmra.mrb[0].mxu0 %v2201
          %v2392 = vpop.f32.mrb[0].mxu0
          %v2393 = vadd.f32 %v2228, %v2392
          %v2394 = vpop.f32.mrb[0].mxu0
          %v2395 = vpop.f32.mrb[0].mxu0
          %v2396 = vadd.f32 %v2228, %v2395
          %v2397 = vpop.f32.mrb[0].mxu0
          %2398 = vmatprep.mubr.bf16.mxu0 0
          %2399 = vmatmul.mubr.bf16.gmra.mrb[0].mxu0 %v2202
          %v2400 = vpop.f32.mrb[0].mxu0
          %v2401 = vadd.f32 %v2228, %v2400
          %v2402 = vpop.f32.mrb[0].mxu0
          %v2403 = vpop.f32.mrb[0].mxu0
          %v2404 = vadd.f32 %v2228, %v2403
          %v2405 = vpop.f32.mrb[0].mxu0
          %2406 = vmatprep.mubr.bf16.mxu0 0
          %2407 = vmatmul.mubr.bf16.gmra.mrb[0].mxu0 %v2203
          %v2408 = vpop.f32.mrb[0].mxu0
          %v2409 = vadd.f32 %v2228, %v2408
          %v2410 = vpop.f32.mrb[0].mxu0
          %v2411 = vpop.f32.mrb[0].mxu0
          %v2412 = vadd.f32 %v2228, %v2411
          %v2413 = vpop.f32.mrb[0].mxu0
          %2414 = vmatprep.mubr.bf16.mxu0 0
          %2415 = vmatmul.mubr.bf16.gmra.mrb[0].mxu0 %v2204
          %v2416 = vpop.f32.mrb[0].mxu0
          %v2417 = vadd.f32 %v2228, %v2416
          %v2418 = vpop.f32.mrb[0].mxu0
          %v2419 = vpop.f32.mrb[0].mxu0
          %v2420 = vadd.f32 %v2228, %v2419
          %v2421 = vpop.f32.mrb[0].mxu0
          %2422 = vmatprep.mubr.bf16.mxu0 0
          %2423 = vmatmul.mubr.bf16.gmra.mrb[0].mxu0 %v2205
          %v2424 = vpop.f32.mrb[0].mxu0
          %v2425 = vadd.f32 %v2228, %v2424
          %v2426 = vpop.f32.mrb[0].mxu0
          %v2427 = vpop.f32.mrb[0].mxu0
          %v2428 = vadd.f32 %v2228, %v2427
          %v2429 = vpop.f32.mrb[0].mxu0
          %2430 = vmatprep.mubr.bf16.mxu0 0
          %2431 = vmatmul.mubr.bf16.gmra.mrb[0].mxu0 %v2206
          %v2432 = vpop.f32.mrb[0].mxu0
          %v2433 = vadd.f32 %v2228, %v2432
          %v2434 = vpop.f32.mrb[0].mxu0
          %v2435 = vpop.f32.mrb[0].mxu0
          %v2436 = vadd.f32 %v2228, %v2435
          %v2437 = vpop.f32.mrb[0].mxu0
          %2438 = vdwg.mxu0
          %v2439 = vmax.f32 %v2313, 0.0
          %v2440 = vmax.f32 %v2316, 0.0
          %v2441 = vmax.f32 %v2321, 0.0
          %v2442 = vmax.f32 %v2324, 0.0
          %v2443 = vmax.f32 %v2329, 0.0
          %v2444 = vmax.f32 %v2332, 0.0
          %v2445 = vmax.f32 %v2337, 0.0
          %v2446 = vmax.f32 %v2340, 0.0
          %v2447 = vmax.f32 %v2345, 0.0
          %v2448 = vmax.f32 %v2348, 0.0
          %v2449 = vmax.f32 %v2353, 0.0
          %v2450 = vmax.f32 %v2356, 0.0
          %v2451 = vmax.f32 %v2361, 0.0
          %v2452 = vmax.f32 %v2364, 0.0
          %v2453 = vmax.f32 %v2369, 0.0
          %v2454 = vmax.f32 %v2372, 0.0
          %v2455 = vmax.f32 %v2377, 0.0
          %v2456 = vmax.f32 %v2380, 0.0
          %v2457 = vmax.f32 %v2385, 0.0
          %v2458 = vmax.f32 %v2388, 0.0
          %v2459 = vmax.f32 %v2393, 0.0
          %v2460 = vmax.f32 %v2396, 0.0
          %v2461 = vmax.f32 %v2401, 0.0
          %v2462 = vmax.f32 %v2404, 0.0
          %v2463 = vmax.f32 %v2409, 0.0
          %v2464 = vmax.f32 %v2412, 0.0
          %v2465 = vmax.f32 %v2417, 0.0
          %v2466 = vmax.f32 %v2420, 0.0
          %v2467 = vmax.f32 %v2425, 0.0
          %v2468 = vmax.f32 %v2428, 0.0
          %v2469 = vmax.f32 %v2433, 0.0
          %v2470 = vmax.f32 %v2436, 0.0
          %v2471 = vpack.c.bf16 %v2440, %v2439
          %v2472 = vpack.c.bf16 %v2442, %v2441
          %v2473 = vpack.c.bf16 %v2444, %v2443
          %v2474 = vpack.c.bf16 %v2446, %v2445
          %v2475 = vpack.c.bf16 %v2448, %v2447
          %v2476 = vpack.c.bf16 %v2450, %v2449
          %v2477 = vpack.c.bf16 %v2452, %v2451
          %v2478 = vpack.c.bf16 %v2454, %v2453
          %v2479 = vpack.c.bf16 %v2456, %v2455
          %v2480 = vpack.c.bf16 %v2458, %v2457
          %v2481 = vpack.c.bf16 %v2460, %v2459
          %v2482 = vpack.c.bf16 %v2462, %v2461
          %v2483 = vpack.c.bf16 %v2464, %v2463
          %v2484 = vpack.c.bf16 %v2466, %v2465
          %v2485 = vpack.c.bf16 %v2468, %v2467
          %v2486 = vpack.c.bf16 %v2470, %v2469
          %v2503 = vunpack.c.l.b16 %v2471
          %v2504 = vunpack.c.h.b16 %v2471
          %v2505 = vunpack.c.l.b16 %v2472
          %v2506 = vunpack.c.h.b16 %v2472
          %v2507 = vunpack.c.l.b16 %v2473
          %v2508 = vunpack.c.h.b16 %v2473
          %v2509 = vunpack.c.l.b16 %v2474
          %v2510 = vunpack.c.h.b16 %v2474
          %v2511 = vunpack.c.l.b16 %v2475
          %v2512 = vunpack.c.h.b16 %v2475
          %v2513 = vunpack.c.l.b16 %v2476
          %v2514 = vunpack.c.h.b16 %v2476
          %v2515 = vunpack.c.l.b16 %v2477
          %v2516 = vunpack.c.h.b16 %v2477
          %v2517 = vunpack.c.l.b16 %v2478
          %v2518 = vunpack.c.h.b16 %v2478
          %v2519 = vunpack.c.l.b16 %v2479
          %v2520 = vunpack.c.h.b16 %v2479
          %v2521 = vunpack.c.l.b16 %v2480
          %v2522 = vunpack.c.h.b16 %v2480
          %v2523 = vunpack.c.l.b16 %v2481
          %v2524 = vunpack.c.h.b16 %v2481
          %v2525 = vunpack.c.l.b16 %v2482
          %v2526 = vunpack.c.h.b16 %v2482
          %v2527 = vunpack.c.l.b16 %v2483
          %v2528 = vunpack.c.h.b16 %v2483
          %v2529 = vunpack.c.l.b16 %v2484
          %v2530 = vunpack.c.h.b16 %v2484
          %v2531 = vunpack.c.l.b16 %v2485
          %v2532 = vunpack.c.h.b16 %v2485
          %v2533 = vunpack.c.l.b16 %v2486
          %v2534 = vunpack.c.h.b16 %v2486
          %v2535 = vpack.c.b16 %v2503, %v2503
          %v2536 = vpack.c.b16 %v2504, %v2504
          %v2537 = vpack.c.b16 %v2505, %v2505
          %v2538 = vpack.c.b16 %v2506, %v2506
          %v2539 = vpack.c.b16 %v2507, %v2507
          %v2540 = vpack.c.b16 %v2508, %v2508
          %v2541 = vpack.c.b16 %v2509, %v2509
          %v2542 = vpack.c.b16 %v2510, %v2510
          %v2543 = vpack.c.b16 %v2511, %v2511
          %v2544 = vpack.c.b16 %v2512, %v2512
          %v2545 = vpack.c.b16 %v2513, %v2513
          %v2546 = vpack.c.b16 %v2514, %v2514
          %v2547 = vpack.c.b16 %v2515, %v2515
          %v2548 = vpack.c.b16 %v2516, %v2516
          %v2549 = vpack.c.b16 %v2517, %v2517
          %v2550 = vpack.c.b16 %v2518, %v2518
          %v2551 = vpack.c.b16 %v2519, %v2519
          %v2552 = vpack.c.b16 %v2520, %v2520
          %v2553 = vpack.c.b16 %v2521, %v2521
          %v2554 = vpack.c.b16 %v2522, %v2522
          %v2555 = vpack.c.b16 %v2523, %v2523
          %v2556 = vpack.c.b16 %v2524, %v2524
          %v2557 = vpack.c.b16 %v2525, %v2525
          %v2558 = vpack.c.b16 %v2526, %v2526
          %v2559 = vpack.c.b16 %v2527, %v2527
          %v2560 = vpack.c.b16 %v2528, %v2528
          %v2561 = vpack.c.b16 %v2529, %v2529
          %v2562 = vpack.c.b16 %v2530, %v2530
          %v2563 = vpack.c.b16 %v2531, %v2531
          %v2564 = vpack.c.b16 %v2532, %v2532
          %v2565 = vpack.c.b16 %v2533, %v2533
          %v2566 = vpack.c.b16 %v2534, %v2534
          %2599 = vst [vmem:[%s482] sm:$0xf] %v2535
          %2600 = vst [vmem:[%s482 + $0x4] sm:$0xf] %v2536
          %2601 = vst [vmem:[%s482 + $0x8] sm:$0xf] %v2537
          %2602 = vst [vmem:[%s482 + $0xc] sm:$0xf] %v2538
          %2603 = vst [vmem:[%s482 + $0x10] sm:$0xf] %v2539
          %2604 = vst [vmem:[%s482 + $0x14] sm:$0xf] %v2540
          %2605 = vst [vmem:[%s482 + $0x18] sm:$0xf] %v2541
          %2606 = vst [vmem:[%s482 + $0x1c] sm:$0xf] %v2542
          %2607 = vst [vmem:[%s482 + $0x20] sm:$0xf] %v2543
          %2608 = vst [vmem:[%s482 + $0x24] sm:$0xf] %v2544
          %2609 = vst [vmem:[%s482 + $0x28] sm:$0xf] %v2545
          %2610 = vst [vmem:[%s482 + $0x2c] sm:$0xf] %v2546
          %2611 = vst [vmem:[%s482 + $0x30] sm:$0xf] %v2547
          %2612 = vst [vmem:[%s482 + $0x34] sm:$0xf] %v2548
          %2613 = vst [vmem:[%s482 + $0x38] sm:$0xf] %v2549
          %2614 = vst [vmem:[%s482 + $0x3c] sm:$0xf] %v2550
          %2615 = vst [vmem:[%s482 + $0x40] sm:$0xf] %v2551
          %2616 = vst [vmem:[%s482 + $0x44] sm:$0xf] %v2552
          %2617 = vst [vmem:[%s482 + $0x48] sm:$0xf] %v2553
          %2618 = vst [vmem:[%s482 + $0x4c] sm:$0xf] %v2554
          %2619 = vst [vmem:[%s482 + $0x50] sm:$0xf] %v2555
          %2620 = vst [vmem:[%s482 + $0x54] sm:$0xf] %v2556
          %2621 = vst [vmem:[%s482 + $0x58] sm:$0xf] %v2557
          %2622 = vst [vmem:[%s482 + $0x5c] sm:$0xf] %v2558
          %2623 = vst [vmem:[%s482 + $0x60] sm:$0xf] %v2559
          %2624 = vst [vmem:[%s482 + $0x64] sm:$0xf] %v2560
          %2625 = vst [vmem:[%s482 + $0x68] sm:$0xf] %v2561
          %2626 = vst [vmem:[%s482 + $0x6c] sm:$0xf] %v2562
          %2627 = vst [vmem:[%s482 + $0x70] sm:$0xf] %v2563
          %2628 = vst [vmem:[%s482 + $0x74] sm:$0xf] %v2564
          %2629 = vst [vmem:[%s482 + $0x78] sm:$0xf] %v2565
          %2630 = vst [vmem:[%s482 + $0x7c] sm:$0xf] %v2566
        $region75: #{gcn_forward.2} parent=62 // pred_fallthru
          _
        %s2631 = smul.u32 32, %s21
        %p2632 = scmp.lt.s32.totalorder %s2631, 63
        %s2633 = scalar_select %p2632, %s2631, 63
        %s2634 = smul.addr %s2633, 4
        %s2635 = scalar_lea.vmem %s6, %s2634
        // Predicated region
        $region76: #{gcn_forward.2} parent=62 // pred_check
          %p2636 = pneg %p195
        $region77: #{gcn_forward.2} parent=62 // pred_check_branch
          %2638 = sbr.rel (%p2636) target = $region79
        $region78: #{gcn_forward.2} parent=62 // pred_region
          %s2639 = smul.u32 32, %s21
        $region79: #{gcn_forward.2} parent=62 // pred_fallthru
          _
      $region63: #{gcn_forward.2} parent=5 // pred_fallthru
        _
      %p2640 = scmp.le.s32.totalorder 2, %s12
      // Predicated region
      $region80: #{gcn_forward.2} parent=5 // pred_check
        %p2641 = pneg %p2640
      $region81: #{gcn_forward.2} parent=5 // pred_check_branch
        %2643 = sbr.rel (%p2641) target = $region83
      $region82: #{gcn_forward.2} parent=5 // pred_region
        %s2644 = ssub.s32 %s12, 2
        // Predicated region
        $region84: #{gcn_forward.2} parent=82 // pred_check
          %p2645 = pneg %p201
        $region85: #{gcn_forward.2} parent=82 // pred_check_branch
          %2647 = sbr.rel (%p2645) target = $region87
        $region86: #{gcn_forward.2} parent=82 // pred_region
          %s2648 = smul.u32 32, %s23
          %p2649 = scmp.lt.s32.totalorder %s2648, 63
          %s2650 = scalar_select %p2649, %s2648, 63
          %s2651 = smul.addr %s2650, 4
          %s2652 = scalar_lea.vmem %s6, %s2651
        $region87: #{gcn_forward.2} parent=82 // pred_fallthru
          _
      $region83: #{gcn_forward.2} parent=5 // pred_fallthru
        _
    $region6: #{gcn_forward.2} parent=1 // loop_footer
      %s16 = sadd.s32 1, %s12
    $region7: #{gcn_forward.2} parent=1 // loop_footer_branch
      %11 = sbr.rel target = $region3
    $region8: #{gcn_forward.2} parent=1 // loop_exit
      _

</llo_original>
